<compile_context>
chip_gen: v7x
topology: tpu7x:2x2x1
jax: 0.10.0
libtpu: 0.0.40
codegen_flags: <defaults>
</compile_context>

<pallas_src>
import functools

import jax
import jax.numpy as jnp
from jax.experimental import pallas as pl
from jax.experimental.pallas import tpu as pltpu

# MLP dims from the PyTorch module: 784 -> 520 -> 320 -> 240 -> 120 -> 10
DIMS = (784, 520, 320, 240, 120, 10)


def _round_up(x, m):
    return ((x + m - 1) // m) * m


# Lane-padded feature dims. The 784 K-dim of x is deliberately left unpadded:
# the MXU eats K in 128-chunks anyway and padding it would only add an HBM copy.
PAD_DIMS = (DIMS[0],) + tuple(_round_up(d, 128) for d in DIMS[1:])


def _mlp_kernel(x_ref,
                w1_ref, b1_ref,
                w2_ref, b2_ref,
                w3_ref, b3_ref,
                w4_ref, b4_ref,
                w5_ref, b5_ref,
                o_ref):
    """Fused forward: 4x (matmul + bf16 bias + ReLU) then matmul + f32 bias."""
    # f32 x is DMA'd straight from HBM; cast to bf16 on-chip for the MXU feed.
    h = x_ref[...].astype(jnp.bfloat16)

    # Hidden layers: MXU matmul (bf16 in, f32 acc) -> bf16 bias-add + ReLU (VPU).
    for w_ref, b_ref in ((w1_ref, b1_ref), (w2_ref, b2_ref),
                         (w3_ref, b3_ref), (w4_ref, b4_ref)):
        acc = jnp.dot(h, w_ref[...], preferred_element_type=jnp.float32)
        h = jnp.maximum(acc.astype(jnp.bfloat16) + b_ref[...], 0)

    # Output layer: logits kept in f32.
    logits = jnp.dot(h, w5_ref[...], preferred_element_type=jnp.float32) + b5_ref[...]
    o_ref[...] = logits.astype(o_ref.dtype)


def prepare_params(params):
    """One-time lane-padding + dtype cast of the Linear parameters.

    Returns a flat tuple (w1, b1, ..., w5, b5) with:
      * weights:       (in_pad, out_pad) bf16, zero-padded
      * hidden biases: (1, out_pad)      bf16, zero-padded
      * final bias:    (1, out_pad)      f32,  zero-padded
    Call once and reuse across forwards so the per-call path stays free of
    padding / casting HBM passes.
    """
    out = []
    for layer in range(1, 6):
        w = jnp.asarray(params[f"w{layer}"])
        b = jnp.asarray(params[f"b{layer}"]).reshape(1, -1)
        rin, rout = PAD_DIMS[layer - 1], PAD_DIMS[layer]
        wp = jnp.zeros((rin, rout), jnp.bfloat16)
        wp = wp.at[: w.shape[0], : w.shape[1]].set(w.astype(jnp.bfloat16))
        b_dtype = jnp.bfloat16 if layer < 5 else jnp.float32
        bp = jnp.zeros((1, rout), b_dtype)
        bp = bp.at[:, : b.shape[1]].set(b.astype(b_dtype))
        out.extend((wp, bp))
    return tuple(out)


def _choose_block(rows, block_b):
    """Batch tile: 16-row aligned, capped at block_b, and split two ways when the
    whole batch would otherwise fit in a single tile (v7x megacore sharding)."""
    two_way = _round_up((rows + 1) // 2, 16)
    return max(16, min(block_b, two_way))


@functools.partial(jax.jit, static_argnames=("block_b",))
def net_forward(x, padded_params, block_b=512):
    """Forward pass of `Net`.

    x: any shape whose trailing elements flatten to 784 per example
       (e.g. (B, 1, 28, 28) or (B, 784)); fed to the kernel in its native dtype.
    padded_params: output of `prepare_params` (pre-padded, pre-cast, reused).
    Returns logits of shape (B, 10), float32.
    """
    x2d = x.reshape(-1, DIMS[0])                      # x.view(-1, 784)
    rows = x2d.shape[0]

    eff_block = _choose_block(rows, block_b)
    grid = (pl.cdiv(rows, eff_block),)                # partial edge block is fine:
                                                      # rows are independent and only
                                                      # valid rows are written back.

    x_spec = pl.BlockSpec((eff_block, DIMS[0]), lambda i: (i, 0))
    out_spec = pl.BlockSpec((eff_block, PAD_DIMS[-1]), lambda i: (i, 0))

    def resident_spec(shape):
        # Grid-invariant operand: whole array resident, single-buffered.
        return pl.BlockSpec(shape, lambda i: (0,) * len(shape),
                            pipeline_mode=pl.Buffered(1))

    in_specs = [x_spec] + [resident_spec(p.shape) for p in padded_params]

    flops = 2 * rows * sum(PAD_DIMS[i] * PAD_DIMS[i + 1] for i in range(5))
    bytes_accessed = (
        rows * DIMS[0] * x2d.dtype.itemsize
        + sum(int(p.size) * p.dtype.itemsize for p in padded_params)
        + rows * PAD_DIMS[-1] * 4)

    out = pl.pallas_call(
        _mlp_kernel,
        out_shape=jax.ShapeDtypeStruct((rows, PAD_DIMS[-1]), jnp.float32),
        grid_spec=pltpu.PrefetchScalarGridSpec(
            num_scalar_prefetch=0,
            grid=grid,
            in_specs=in_specs,
            out_specs=out_spec,
        ),
        compiler_params=pltpu.CompilerParams(
            dimension_semantics=("parallel",),
        ),
        cost_estimate=pl.CostEstimate(flops=flops, transcendentals=0,
                                      bytes_accessed=bytes_accessed),
    )(x2d, *padded_params)

    # Drop the zero-padded logit columns.
    return out[:, : DIMS[-1]]


def init_params(key):
    """Deterministic parameter init (uniform, PyTorch-Linear-style fan_in bound)."""
    params = {}
    for layer in range(1, 6):
        fan_in, fan_out = DIMS[layer - 1], DIMS[layer]
        key, kw, kb = jax.random.split(key, 3)
        bound = 1.0 / jnp.sqrt(jnp.float32(fan_in))
        # Stored as (in, out), i.e. the transpose of PyTorch's (out, in) weight.
        params[f"w{layer}"] = jax.random.uniform(
            kw, (fan_in, fan_out), jnp.float32, -bound, bound)
        params[f"b{layer}"] = jax.random.uniform(
            kb, (1, fan_out), jnp.float32, -bound, bound)
    return params


def reference_forward(x, params):
    """Pure-JAX reference matching the kernel numerics (bf16 ops, f32 accumulate,
    bf16 hidden bias/ReLU, f32 final bias)."""
    h = x.reshape(-1, DIMS[0]).astype(jnp.bfloat16)
    for layer in range(1, 5):
        w = params[f"w{layer}"].astype(jnp.bfloat16)
        acc = jnp.dot(h, w, preferred_element_type=jnp.float32)
        h = jnp.maximum(acc.astype(jnp.bfloat16)
                        + params[f"b{layer}"].astype(jnp.bfloat16), 0)
    w5 = params["w5"].astype(jnp.bfloat16)
    return jnp.dot(h, w5, preferred_element_type=jnp.float32) + params["b5"]


if __name__ == "__main__":
    key = jax.random.PRNGKey(0)
    key, kx1, kx2 = jax.random.split(key, 3)

    params = init_params(key)
    padded_params = prepare_params(params)   # one-time padding / casting

    # Small MNIST-like batch: (B, 1, 28, 28) NCHW.
    x = jax.random.normal(kx1, (8, 1, 28, 28), jnp.float32)
    out = jax.block_until_ready(net_forward(x, padded_params))
    ref = reference_forward(x, params)
    assert out.shape == (8, 10), out.shape
    assert jnp.allclose(out, ref, atol=1e-2, rtol=1e-2), "mismatch (batch 8)"

    # Ragged batch exercising a multi-step grid with a partial edge block.
    x2 = jax.random.normal(kx2, (136, 784), jnp.float32)
    out2 = jax.block_until_ready(net_forward(x2, padded_params))
    ref2 = reference_forward(x2, params)
    assert out2.shape == (136, 10), out2.shape
    assert jnp.allclose(out2, ref2, atol=1e-2, rtol=1e-2), "mismatch (batch 136)"

    print("KERNEL_OK")
</pallas_src>

<mosaic_0001>
module attributes {stable_mosaic.version = 11 : i64} {
  func.func @_mlp_kernel(%arg0: i32, %arg1: memref<16x784xf32, #tpu.memory_space<vmem>>, %arg2: memref<784x640xbf16, #tpu.memory_space<vmem>>, %arg3: memref<1x640xbf16, #tpu.memory_space<vmem>>, %arg4: memref<640x384xbf16, #tpu.memory_space<vmem>>, %arg5: memref<1x384xbf16, #tpu.memory_space<vmem>>, %arg6: memref<384x256xbf16, #tpu.memory_space<vmem>>, %arg7: memref<1x256xbf16, #tpu.memory_space<vmem>>, %arg8: memref<256x128xbf16, #tpu.memory_space<vmem>>, %arg9: memref<1x128xbf16, #tpu.memory_space<vmem>>, %arg10: memref<128x128xbf16, #tpu.memory_space<vmem>>, %arg11: memref<1x128xf32, #tpu.memory_space<vmem>>, %arg12: memref<16x128xf32, #tpu.memory_space<vmem>>) attributes {dimension_semantics = [#tpu.dimension_semantics<parallel>], iteration_bounds = array<i64: 1>, scalar_prefetch = 0 : i64, scratch_operands = 0 : i64, tpu.core_type = #tpu.core_type<tc>, window_params = [{transform_indices = @transform_0, window_bounds = array<i64: 16, 784>}, {pipeline_mode = #tpu.pipeline_mode<synchronous>, transform_indices = @transform_1, window_bounds = array<i64: 784, 640>}, {pipeline_mode = #tpu.pipeline_mode<synchronous>, transform_indices = @transform_2, window_bounds = array<i64: 1, 640>}, {pipeline_mode = #tpu.pipeline_mode<synchronous>, transform_indices = @transform_3, window_bounds = array<i64: 640, 384>}, {pipeline_mode = #tpu.pipeline_mode<synchronous>, transform_indices = @transform_4, window_bounds = array<i64: 1, 384>}, {pipeline_mode = #tpu.pipeline_mode<synchronous>, transform_indices = @transform_5, window_bounds = array<i64: 384, 256>}, {pipeline_mode = #tpu.pipeline_mode<synchronous>, transform_indices = @transform_6, window_bounds = array<i64: 1, 256>}, {pipeline_mode = #tpu.pipeline_mode<synchronous>, transform_indices = @transform_7, window_bounds = array<i64: 256, 128>}, {pipeline_mode = #tpu.pipeline_mode<synchronous>, transform_indices = @transform_8, window_bounds = array<i64: 1, 128>}, {pipeline_mode = #tpu.pipeline_mode<synchronous>, transform_indices = @transform_9, window_bounds = array<i64: 128, 128>}, {pipeline_mode = #tpu.pipeline_mode<synchronous>, transform_indices = @transform_10, window_bounds = array<i64: 1, 128>}, {transform_indices = @transform_11, window_bounds = array<i64: 16, 128>}]} {
    %c0 = arith.constant 0 : index
    %c0_0 = arith.constant 0 : index
    %0 = vector.load %arg1[%c0, %c0_0] : memref<16x784xf32, #tpu.memory_space<vmem>>, vector<16x784xf32>
    %1 = arith.truncf %0 : vector<16x784xf32> to vector<16x784xbf16>
    %c0_1 = arith.constant 0 : index
    %c0_2 = arith.constant 0 : index
    %2 = vector.load %arg2[%c0_1, %c0_2] : memref<784x640xbf16, #tpu.memory_space<vmem>>, vector<784x640xbf16>
    %cst = arith.constant dense<0.000000e+00> : vector<16x640xf32>
    %3 = tpu.matmul %1, %2, %cst {dimension_numbers = #tpu.dot_dimension_numbers<[1], [0], [0], [1], [0, 0, 1, 1], [], []>} : vector<16x784xbf16>, vector<784x640xbf16>, vector<16x640xf32> -> vector<16x640xf32>
    %4 = arith.truncf %3 : vector<16x640xf32> to vector<16x640xbf16>
    %c0_3 = arith.constant 0 : index
    %c0_4 = arith.constant 0 : index
    %5 = vector.load %arg3[%c0_3, %c0_4] : memref<1x640xbf16, #tpu.memory_space<vmem>>, vector<1x640xbf16>
    %6 = vector.broadcast %5 : vector<1x640xbf16> to vector<16x640xbf16>
    %7 = arith.addf %4, %6 : vector<16x640xbf16>
    %cst_5 = arith.constant 0.000000e+00 : bf16
    %8 = vector.broadcast %cst_5 : bf16 to vector<16x640xbf16>
    %9 = arith.maximumf %7, %8 : vector<16x640xbf16>
    %c0_6 = arith.constant 0 : index
    %c0_7 = arith.constant 0 : index
    %10 = vector.load %arg4[%c0_6, %c0_7] : memref<640x384xbf16, #tpu.memory_space<vmem>>, vector<640x384xbf16>
    %cst_8 = arith.constant dense<0.000000e+00> : vector<16x384xf32>
    %11 = tpu.matmul %9, %10, %cst_8 {dimension_numbers = #tpu.dot_dimension_numbers<[1], [0], [0], [1], [0, 0, 1, 1], [], []>} : vector<16x640xbf16>, vector<640x384xbf16>, vector<16x384xf32> -> vector<16x384xf32>
    %12 = arith.truncf %11 : vector<16x384xf32> to vector<16x384xbf16>
    %c0_9 = arith.constant 0 : index
    %c0_10 = arith.constant 0 : index
    %13 = vector.load %arg5[%c0_9, %c0_10] : memref<1x384xbf16, #tpu.memory_space<vmem>>, vector<1x384xbf16>
    %14 = vector.broadcast %13 : vector<1x384xbf16> to vector<16x384xbf16>
    %15 = arith.addf %12, %14 : vector<16x384xbf16>
    %cst_11 = arith.constant 0.000000e+00 : bf16
    %16 = vector.broadcast %cst_11 : bf16 to vector<16x384xbf16>
    %17 = arith.maximumf %15, %16 : vector<16x384xbf16>
    %c0_12 = arith.constant 0 : index
    %c0_13 = arith.constant 0 : index
    %18 = vector.load %arg6[%c0_12, %c0_13] : memref<384x256xbf16, #tpu.memory_space<vmem>>, vector<384x256xbf16>
    %cst_14 = arith.constant dense<0.000000e+00> : vector<16x256xf32>
    %19 = tpu.matmul %17, %18, %cst_14 {dimension_numbers = #tpu.dot_dimension_numbers<[1], [0], [0], [1], [0, 0, 1, 1], [], []>} : vector<16x384xbf16>, vector<384x256xbf16>, vector<16x256xf32> -> vector<16x256xf32>
    %20 = arith.truncf %19 : vector<16x256xf32> to vector<16x256xbf16>
    %c0_15 = arith.constant 0 : index
    %c0_16 = arith.constant 0 : index
    %21 = vector.load %arg7[%c0_15, %c0_16] : memref<1x256xbf16, #tpu.memory_space<vmem>>, vector<1x256xbf16>
    %22 = vector.broadcast %21 : vector<1x256xbf16> to vector<16x256xbf16>
    %23 = arith.addf %20, %22 : vector<16x256xbf16>
    %cst_17 = arith.constant 0.000000e+00 : bf16
    %24 = vector.broadcast %cst_17 : bf16 to vector<16x256xbf16>
    %25 = arith.maximumf %23, %24 : vector<16x256xbf16>
    %c0_18 = arith.constant 0 : index
    %c0_19 = arith.constant 0 : index
    %26 = vector.load %arg8[%c0_18, %c0_19] : memref<256x128xbf16, #tpu.memory_space<vmem>>, vector<256x128xbf16>
    %cst_20 = arith.constant dense<0.000000e+00> : vector<16x128xf32>
    %27 = tpu.matmul %25, %26, %cst_20 {dimension_numbers = #tpu.dot_dimension_numbers<[1], [0], [0], [1], [0, 0, 1, 1], [], []>} : vector<16x256xbf16>, vector<256x128xbf16>, vector<16x128xf32> -> vector<16x128xf32>
    %28 = arith.truncf %27 : vector<16x128xf32> to vector<16x128xbf16>
    %c0_21 = arith.constant 0 : index
    %c0_22 = arith.constant 0 : index
    %29 = vector.load %arg9[%c0_21, %c0_22] : memref<1x128xbf16, #tpu.memory_space<vmem>>, vector<1x128xbf16>
    %30 = vector.broadcast %29 : vector<1x128xbf16> to vector<16x128xbf16>
    %31 = arith.addf %28, %30 : vector<16x128xbf16>
    %cst_23 = arith.constant 0.000000e+00 : bf16
    %32 = vector.broadcast %cst_23 : bf16 to vector<16x128xbf16>
    %33 = arith.maximumf %31, %32 : vector<16x128xbf16>
    %c0_24 = arith.constant 0 : index
    %c0_25 = arith.constant 0 : index
    %34 = vector.load %arg10[%c0_24, %c0_25] : memref<128x128xbf16, #tpu.memory_space<vmem>>, vector<128x128xbf16>
    %cst_26 = arith.constant dense<0.000000e+00> : vector<16x128xf32>
    %35 = tpu.matmul %33, %34, %cst_26 {dimension_numbers = #tpu.dot_dimension_numbers<[1], [0], [0], [1], [0, 0, 1, 1], [], []>} : vector<16x128xbf16>, vector<128x128xbf16>, vector<16x128xf32> -> vector<16x128xf32>
    %c0_27 = arith.constant 0 : index
    %c0_28 = arith.constant 0 : index
    %36 = vector.load %arg11[%c0_27, %c0_28] : memref<1x128xf32, #tpu.memory_space<vmem>>, vector<1x128xf32>
    %37 = vector.broadcast %36 : vector<1x128xf32> to vector<16x128xf32>
    %38 = arith.addf %35, %37 : vector<16x128xf32>
    %c0_29 = arith.constant 0 : index
    %c0_30 = arith.constant 0 : index
    %39 = vector.load %arg12[%c0_29, %c0_30] : memref<16x128xf32, #tpu.memory_space<vmem>>, vector<16x128xf32>
    tpu.vector_store %arg12[%c0_29, %c0_30], %38 {strides = array<i32>} : memref<16x128xf32, #tpu.memory_space<vmem>>, vector<16x128xf32>,
    return
  }
  func.func @transform_0(%arg0: i32) -> (i32, i32) {
    %c0_i32 = arith.constant 0 : i32
    %c0_i32_0 = arith.constant 0 : i32
    return %arg0, %c0_i32 : i32, i32
  }
  func.func @transform_1(%arg0: i32) -> (i32, i32) {
    %c0_i32 = arith.constant 0 : i32
    %c0_i32_0 = arith.constant 0 : i32
    %c0_i32_1 = arith.constant 0 : i32
    return %c0_i32, %c0_i32_0 : i32, i32
  }
  func.func @transform_2(%arg0: i32) -> (i32, i32) {
    %c0_i32 = arith.constant 0 : i32
    %c0_i32_0 = arith.constant 0 : i32
    %c0_i32_1 = arith.constant 0 : i32
    return %c0_i32, %c0_i32_0 : i32, i32
  }
  func.func @transform_3(%arg0: i32) -> (i32, i32) {
    %c0_i32 = arith.constant 0 : i32
    %c0_i32_0 = arith.constant 0 : i32
    %c0_i32_1 = arith.constant 0 : i32
    return %c0_i32, %c0_i32_0 : i32, i32
  }
  func.func @transform_4(%arg0: i32) -> (i32, i32) {
    %c0_i32 = arith.constant 0 : i32
    %c0_i32_0 = arith.constant 0 : i32
    %c0_i32_1 = arith.constant 0 : i32
    return %c0_i32, %c0_i32_0 : i32, i32
  }
  func.func @transform_5(%arg0: i32) -> (i32, i32) {
    %c0_i32 = arith.constant 0 : i32
    %c0_i32_0 = arith.constant 0 : i32
    %c0_i32_1 = arith.constant 0 : i32
    return %c0_i32, %c0_i32_0 : i32, i32
  }
  func.func @transform_6(%arg0: i32) -> (i32, i32) {
    %c0_i32 = arith.constant 0 : i32
    %c0_i32_0 = arith.constant 0 : i32
    %c0_i32_1 = arith.constant 0 : i32
    return %c0_i32, %c0_i32_0 : i32, i32
  }
  func.func @transform_7(%arg0: i32) -> (i32, i32) {
    %c0_i32 = arith.constant 0 : i32
    %c0_i32_0 = arith.constant 0 : i32
    %c0_i32_1 = arith.constant 0 : i32
    return %c0_i32, %c0_i32_0 : i32, i32
  }
  func.func @transform_8(%arg0: i32) -> (i32, i32) {
    %c0_i32 = arith.constant 0 : i32
    %c0_i32_0 = arith.constant 0 : i32
    %c0_i32_1 = arith.constant 0 : i32
    return %c0_i32, %c0_i32_0 : i32, i32
  }
  func.func @transform_9(%arg0: i32) -> (i32, i32) {
    %c0_i32 = arith.constant 0 : i32
    %c0_i32_0 = arith.constant 0 : i32
    %c0_i32_1 = arith.constant 0 : i32
    return %c0_i32, %c0_i32_0 : i32, i32
  }
  func.func @transform_10(%arg0: i32) -> (i32, i32) {
    %c0_i32 = arith.constant 0 : i32
    %c0_i32_0 = arith.constant 0 : i32
    %c0_i32_1 = arith.constant 0 : i32
    return %c0_i32, %c0_i32_0 : i32, i32
  }
  func.func @transform_11(%arg0: i32) -> (i32, i32) {
    %c0_i32 = arith.constant 0 : i32
    %c0_i32_0 = arith.constant 0 : i32
    return %arg0, %c0_i32 : i32, i32
  }
}

</mosaic_0001>

<llo_original>
// kernel: net_forward.1
$region0: #{net_forward.1}
  #allocation0 [shape = 'u32[]', space=smem, size = 0x4, offset = 0x4, fixed_abs, tag = 'smem constant byte address 0x4 - core index']
  #allocation1 [shape = 'u32[144,128]{1,0:T(1,128)}', space=vmem, size = 0x12000, scoped, tag = 'internal scratch']
  %s0 = inlined_call_operand.vmem [shape: f32[8,784], index: 0, kind: input, shape index: {}]
  %s1 = inlined_call_operand.hbm [shape: bf16[784,640], index: 1, kind: input, shape index: {}]
  %s2 = inlined_call_operand.vmem [shape: bf16[1,640], index: 2, kind: input, shape index: {}]
  %s3 = inlined_call_operand.hbm [shape: bf16[640,384], index: 3, kind: input, shape index: {}]
  %s4 = inlined_call_operand.vmem [shape: bf16[1,384], index: 4, kind: input, shape index: {}]
  %s5 = inlined_call_operand.vmem [shape: bf16[384,256], index: 5, kind: input, shape index: {}]
  %s6 = inlined_call_operand.vmem [shape: bf16[1,256], index: 6, kind: input, shape index: {}]
  %s7 = inlined_call_operand.vmem [shape: bf16[256,128], index: 7, kind: input, shape index: {}]
  %s8 = inlined_call_operand.vmem [shape: bf16[1,128], index: 8, kind: input, shape index: {}]
  %s9 = inlined_call_operand.vmem [shape: bf16[128,128], index: 9, kind: input, shape index: {}]
  %s10 = inlined_call_operand.vmem [shape: f32[1,128], index: 10, kind: input, shape index: {}]
  %s11 = inlined_call_operand.hbm [shape: f32[8,128], index: 11, kind: output, shape index: {}]
  %s12 = sld [smem:[#allocation0]]
  $region62: #{net_forward.1} parent=0
    _
  %s14 = ssub.s32 1, %s12
  %s15 = scalar_select 0, %s14, %s12
  $region1: #{net_forward.1} parent=0
    #allocation2 [shape = 'u8[1003520]{0}', space=vmem, size = 0xf5000, scoped, tag = 'input window, operand 1, single buffered']
    #allocation3 [shape = 's32[1]{0}', space=sflag, size = 0x4, scoped, tag = 'scoped memory for net_forward.1']
    #allocation4 [shape = 's32[1]{0}', space=sflag, size = 0x4, scoped, tag = 'scoped memory for net_forward.1']
    #allocation5 [shape = 'u8[491520]{0}', space=vmem, size = 0x78000, scoped, tag = 'input window, operand 3, single buffered']
    #allocation6 [shape = 's32[1]{0}', space=sflag, size = 0x4, scoped, tag = 'scoped memory for net_forward.1']
    #allocation7 [shape = 'u8[8192]{0}', space=vmem, size = 0x2000, scoped, tag = 'output window, operand 0, single buffered']
    %16 = vsyncpa [#allocation3], 0
    %17 = vsyncpa [#allocation6], 0
    %18 = vsyncpa [#allocation4], 0
    // Predicated region
    $region2: #{net_forward.1} parent=1 // pred_check
      _
    $region3: #{net_forward.1} parent=1 // pred_check_branch
      %20 = sbr.rel (0) target = $region5
    $region4: #{net_forward.1} parent=1 // pred_region
      _
    $region5: #{net_forward.1} parent=1 // pred_fallthru
      _
    // Predicated region
    $region6: #{net_forward.1} parent=1 // pred_check
      _
    $region7: #{net_forward.1} parent=1 // pred_check_branch
      %22 = sbr.rel (0) target = $region9
    $region8: #{net_forward.1} parent=1 // pred_region
      %s24 = ssub.s32 31360, 31360
      %25 = vsyncadd [#allocation3], %s24
      %s26 = sshll.u32 [#allocation2], 4
      %s27 = int_to_ptr.vmem [resolvable:$true] %s26
      %32 = dma.hbm_to_vmem [thread:$0]  %s1, 31360, %s27, [#allocation3], 320, 320, 20
    $region9: #{net_forward.1} parent=1 // pred_fallthru
      _
    // Predicated region
    $region10: #{net_forward.1} parent=1 // pred_check
      _
    $region11: #{net_forward.1} parent=1 // pred_check_branch
      %34 = sbr.rel (0) target = $region13
    $region12: #{net_forward.1} parent=1 // pred_region
      _
    $region13: #{net_forward.1} parent=1 // pred_fallthru
      _
    // Predicated region
    $region14: #{net_forward.1} parent=1 // pred_check
      _
    $region15: #{net_forward.1} parent=1 // pred_check_branch
      %36 = sbr.rel (0) target = $region17
    $region16: #{net_forward.1} parent=1 // pred_region
      %s38 = ssub.s32 15360, 15360
      %39 = vsyncadd [#allocation6], %s38
      %s40 = sshll.u32 [#allocation5], 4
      %s41 = int_to_ptr.vmem [resolvable:$true] %s40
      %46 = dma.hbm_to_vmem [thread:$0]  %s3, 15360, %s41, [#allocation6], 192, 192, 12
    $region17: #{net_forward.1} parent=1 // pred_fallthru
      _
    // Predicated region
    $region18: #{net_forward.1} parent=1 // pred_check
      _
    $region19: #{net_forward.1} parent=1 // pred_check_branch
      %48 = sbr.rel (0) target = $region21
    $region20: #{net_forward.1} parent=1 // pred_region
      _
    $region21: #{net_forward.1} parent=1 // pred_fallthru
      _
    // Predicated region
    $region22: #{net_forward.1} parent=1 // pred_check
      _
    $region23: #{net_forward.1} parent=1 // pred_check_branch
      %50 = sbr.rel (0) target = $region25
    $region24: #{net_forward.1} parent=1 // pred_region
      _
    $region25: #{net_forward.1} parent=1 // pred_fallthru
      _
    // Predicated region
    $region26: #{net_forward.1} parent=1 // pred_check
      _
    $region27: #{net_forward.1} parent=1 // pred_check_branch
      %52 = sbr.rel (0) target = $region29
    $region28: #{net_forward.1} parent=1 // pred_region
      _
    $region29: #{net_forward.1} parent=1 // pred_fallthru
      _
    // Predicated region
    $region30: #{net_forward.1} parent=1 // pred_check
      _
    $region31: #{net_forward.1} parent=1 // pred_check_branch
      %54 = sbr.rel (0) target = $region33
    $region32: #{net_forward.1} parent=1 // pred_region
      _
    $region33: #{net_forward.1} parent=1 // pred_fallthru
      _
    // Predicated region
    $region34: #{net_forward.1} parent=1 // pred_check
      _
    $region35: #{net_forward.1} parent=1 // pred_check_branch
      %56 = sbr.rel (0) target = $region37
    $region36: #{net_forward.1} parent=1 // pred_region
      _
    $region37: #{net_forward.1} parent=1 // pred_fallthru
      _
    // Predicated region
    $region38: #{net_forward.1} parent=1 // pred_check
      _
    $region39: #{net_forward.1} parent=1 // pred_check_branch
      %58 = sbr.rel (0) target = $region41
    $region40: #{net_forward.1} parent=1 // pred_region
      _
    $region41: #{net_forward.1} parent=1 // pred_fallthru
      _
    // Predicated region
    $region42: #{net_forward.1} parent=1 // pred_check
      _
    $region43: #{net_forward.1} parent=1 // pred_check_branch
      %60 = sbr.rel (0) target = $region45
    $region44: #{net_forward.1} parent=1 // pred_region
      _
    $region45: #{net_forward.1} parent=1 // pred_fallthru
      _
    // Predicated region
    $region46: #{net_forward.1} parent=1 // pred_check
      _
    $region47: #{net_forward.1} parent=1 // pred_check_branch
      %62 = sbr.rel (0) target = $region49
    $region48: #{net_forward.1} parent=1 // pred_region
      %63 = dma.done [#allocation3], 31360
    $region49: #{net_forward.1} parent=1 // pred_fallthru
      _
    // Predicated region
    $region50: #{net_forward.1} parent=1 // pred_check
      _
    $region51: #{net_forward.1} parent=1 // pred_check_branch
      %65 = sbr.rel (0) target = $region53
    $region52: #{net_forward.1} parent=1 // pred_region
      %66 = dma.done [#allocation6], 15360
    $region53: #{net_forward.1} parent=1 // pred_fallthru
      _
    %v68 = vld [vmem:[%s0] sm:$0xff]
    %v69 = vld [vmem:[%s0 + $0x8] sm:$0xff]
    %v70 = vld [vmem:[%s0 + $0x10] sm:$0xff]
    %v71 = vld [vmem:[%s0 + $0x18] sm:$0xff]
    %v72 = vld [vmem:[%s0 + $0x20] sm:$0xff]
    %v73 = vld [vmem:[%s0 + $0x28] sm:$0xff]
    %v74 = vld [vmem:[%s0 + $0x30] sm:$0xff]
    %v75 = vld [vmem:[%s0 + $0x38] sm:$0xff]
    %v76 = vld [vmem:[%s0 + $0x40] sm:$0xff]
    %v77 = vld [vmem:[%s0 + $0x48] sm:$0xff]
    %v78 = vld [vmem:[%s0 + $0x50] sm:$0xff]
    %v79 = vld [vmem:[%s0 + $0x58] sm:$0xff]
    %v80 = vld [vmem:[%s0 + $0x60] sm:$0xff]
    %v81 = vld [vmem:[%s0 + $0x68] sm:$0xff]
    %v82 = vpack.c.bf16 %v75, %v68
    %v83 = vpack.c.bf16 %v76, %v69
    %v84 = vpack.c.bf16 %v77, %v70
    %v85 = vpack.c.bf16 %v78, %v71
    %v86 = vpack.c.bf16 %v79, %v72
    %v87 = vpack.c.bf16 %v80, %v73
    %v88 = vpack.c.bf16 %v81, %v74
    %v89 = vld [vmem:[#allocation2] sm:$0xff]
    %v90 = vld [vmem:[#allocation2 + $0x8] sm:$0xff]
    %v91 = vld [vmem:[#allocation2 + $0x10] sm:$0xf]
    %v92 = vld [vmem:[#allocation2 + $0x14] sm:$0xff]
    %v93 = vld [vmem:[#allocation2 + $0x1c] sm:$0xff]
    %v94 = vld [vmem:[#allocation2 + $0x24] sm:$0xf]
    %v95 = vld [vmem:[#allocation2 + $0x28] sm:$0xff]
    %v96 = vld [vmem:[#allocation2 + $0x30] sm:$0xff]
    %v97 = vld [vmem:[#allocation2 + $0x38] sm:$0xf]
    %v98 = vld [vmem:[#allocation2 + $0x3c] sm:$0xff]
    %v99 = vld [vmem:[#allocation2 + $0x44] sm:$0xff]
    %v100 = vld [vmem:[#allocation2 + $0x4c] sm:$0xf]
    %v101 = vld [vmem:[#allocation2 + $0x50] sm:$0xff]
    %v102 = vld [vmem:[#allocation2 + $0x58] sm:$0xff]
    %v103 = vld [vmem:[#allocation2 + $0x60] sm:$0xf]
    %v104 = vld [vmem:[#allocation2 + $0x64] sm:$0xff]
    %v105 = vld [vmem:[#allocation2 + $0x6c] sm:$0xff]
    %v106 = vld [vmem:[#allocation2 + $0x74] sm:$0xf]
    %v107 = vld [vmem:[#allocation2 + $0x78] sm:$0xff]
    %v108 = vld [vmem:[#allocation2 + $0x80] sm:$0xff]
    %v109 = vld [vmem:[#allocation2 + $0x88] sm:$0xf]
    %v110 = vld [vmem:[#allocation2 + $0x8c] sm:$0xff]
    %v111 = vld [vmem:[#allocation2 + $0x94] sm:$0xff]
    %v112 = vld [vmem:[#allocation2 + $0x9c] sm:$0xf]
    %v113 = vld [vmem:[#allocation2 + $0xa0] sm:$0xff]
    %v114 = vld [vmem:[#allocation2 + $0xa8] sm:$0xff]
    %v115 = vld [vmem:[#allocation2 + $0xb0] sm:$0xf]
    %v116 = vld [vmem:[#allocation2 + $0xb4] sm:$0xff]
    %v117 = vld [vmem:[#allocation2 + $0xbc] sm:$0xff]
    %v118 = vld [vmem:[#allocation2 + $0xc4] sm:$0xf]
    %v119 = vld [vmem:[#allocation2 + $0xc8] sm:$0xff]
    %v120 = vld [vmem:[#allocation2 + $0xd0] sm:$0xff]
    %v121 = vld [vmem:[#allocation2 + $0xd8] sm:$0xf]
    %v122 = vld [vmem:[#allocation2 + $0xdc] sm:$0xff]
    %v123 = vld [vmem:[#allocation2 + $0xe4] sm:$0xff]
    %v124 = vld [vmem:[#allocation2 + $0xec] sm:$0xf]
    %v125 = vld [vmem:[#allocation2 + $0xf0] sm:$0xff]
    %v126 = vld [vmem:[#allocation2 + $0xf8] sm:$0xff]
    %v127 = vld [vmem:[#allocation2 + $0x100] sm:$0xf]
    %v128 = vld [vmem:[#allocation2 + $0x104] sm:$0xff]
    %v129 = vld [vmem:[#allocation2 + $0x10c] sm:$0xff]
    %v130 = vld [vmem:[#allocation2 + $0x114] sm:$0xf]
    %v131 = vld [vmem:[#allocation2 + $0x118] sm:$0xff]
    %v132 = vld [vmem:[#allocation2 + $0x120] sm:$0xff]
    %v133 = vld [vmem:[#allocation2 + $0x128] sm:$0xf]
    %v134 = vld [vmem:[#allocation2 + $0x12c] sm:$0xff]
    %v135 = vld [vmem:[#allocation2 + $0x134] sm:$0xff]
    %v136 = vld [vmem:[#allocation2 + $0x13c] sm:$0xf]
    %v137 = vld [vmem:[#allocation2 + $0x140] sm:$0xff]
    %v138 = vld [vmem:[#allocation2 + $0x148] sm:$0xff]
    %v139 = vld [vmem:[#allocation2 + $0x150] sm:$0xf]
    %v140 = vld [vmem:[#allocation2 + $0x154] sm:$0xff]
    %v141 = vld [vmem:[#allocation2 + $0x15c] sm:$0xff]
    %v142 = vld [vmem:[#allocation2 + $0x164] sm:$0xf]
    %v143 = vld [vmem:[#allocation2 + $0x168] sm:$0xff]
    %v144 = vld [vmem:[#allocation2 + $0x170] sm:$0xff]
    %v145 = vld [vmem:[#allocation2 + $0x178] sm:$0xf]
    %v146 = vld [vmem:[#allocation2 + $0x17c] sm:$0xff]
    %v147 = vld [vmem:[#allocation2 + $0x184] sm:$0xff]
    %v148 = vld [vmem:[#allocation2 + $0x18c] sm:$0xf]
    %v149 = vld [vmem:[#allocation2 + $0x190] sm:$0xff]
    %v150 = vld [vmem:[#allocation2 + $0x198] sm:$0xff]
    %v151 = vld [vmem:[#allocation2 + $0x1a0] sm:$0xf]
    %v152 = vld [vmem:[#allocation2 + $0x1a4] sm:$0xff]
    %v153 = vld [vmem:[#allocation2 + $0x1ac] sm:$0xff]
    %v154 = vld [vmem:[#allocation2 + $0x1b4] sm:$0xf]
    %v155 = vld [vmem:[#allocation2 + $0x1b8] sm:$0xff]
    %v156 = vld [vmem:[#allocation2 + $0x1c0] sm:$0xff]
    %v157 = vld [vmem:[#allocation2 + $0x1c8] sm:$0xf]
    %v158 = vld [vmem:[#allocation2 + $0x1cc] sm:$0xff]
    %v159 = vld [vmem:[#allocation2 + $0x1d4] sm:$0xff]
    %v160 = vld [vmem:[#allocation2 + $0x1dc] sm:$0xf]
    %v161 = vld [vmem:[#allocation2 + $0x1e0] sm:$0xff]
    %v162 = vld [vmem:[#allocation2 + $0x1e8] sm:$0xff]
    %v163 = vld [vmem:[#allocation2 + $0x1f0] sm:$0xf]
    %v164 = vld [vmem:[#allocation2 + $0x1f4] sm:$0xff]
    %v165 = vld [vmem:[#allocation2 + $0x1fc] sm:$0xff]
    %v166 = vld [vmem:[#allocation2 + $0x204] sm:$0xf]
    %v167 = vld [vmem:[#allocation2 + $0x208] sm:$0xff]
    %v168 = vld [vmem:[#allocation2 + $0x210] sm:$0xff]
    %v169 = vld [vmem:[#allocation2 + $0x218] sm:$0xf]
    %v170 = vld [vmem:[#allocation2 + $0x21c] sm:$0xff]
    %v171 = vld [vmem:[#allocation2 + $0x224] sm:$0xff]
    %v172 = vld [vmem:[#allocation2 + $0x22c] sm:$0xf]
    %v173 = vld [vmem:[#allocation2 + $0x230] sm:$0xff]
    %v174 = vld [vmem:[#allocation2 + $0x238] sm:$0xff]
    %v175 = vld [vmem:[#allocation2 + $0x240] sm:$0xf]
    %v176 = vld [vmem:[#allocation2 + $0x244] sm:$0xff]
    %v177 = vld [vmem:[#allocation2 + $0x24c] sm:$0xff]
    %v178 = vld [vmem:[#allocation2 + $0x254] sm:$0xf]
    %v179 = vld [vmem:[#allocation2 + $0x258] sm:$0xff]
    %v180 = vld [vmem:[#allocation2 + $0x260] sm:$0xff]
    %v181 = vld [vmem:[#allocation2 + $0x268] sm:$0xf]
    %v182 = vld [vmem:[#allocation2 + $0x26c] sm:$0xff]
    %v183 = vld [vmem:[#allocation2 + $0x274] sm:$0xff]
    %v184 = vld [vmem:[#allocation2 + $0x27c] sm:$0xf]
    %v185 = vld [vmem:[#allocation2 + $0x280] sm:$0xff]
    %v186 = vld [vmem:[#allocation2 + $0x288] sm:$0xff]
    %v187 = vld [vmem:[#allocation2 + $0x290] sm:$0xf]
    %v188 = vld [vmem:[#allocation2 + $0x294] sm:$0xff]
    %v189 = vld [vmem:[#allocation2 + $0x29c] sm:$0xff]
    %v190 = vld [vmem:[#allocation2 + $0x2a4] sm:$0xf]
    %v191 = vld [vmem:[#allocation2 + $0x2a8] sm:$0xff]
    %v192 = vld [vmem:[#allocation2 + $0x2b0] sm:$0xff]
    %v193 = vld [vmem:[#allocation2 + $0x2b8] sm:$0xf]
    %v194 = vld [vmem:[#allocation2 + $0x2bc] sm:$0xff]
    %v195 = vld [vmem:[#allocation2 + $0x2c4] sm:$0xff]
    %v196 = vld [vmem:[#allocation2 + $0x2cc] sm:$0xf]
    %v197 = vld [vmem:[#allocation2 + $0x2d0] sm:$0xff]
    %v198 = vld [vmem:[#allocation2 + $0x2d8] sm:$0xff]
    %v199 = vld [vmem:[#allocation2 + $0x2e0] sm:$0xf]
    %v200 = vld [vmem:[#allocation2 + $0x2e4] sm:$0xff]
    %v201 = vld [vmem:[#allocation2 + $0x2ec] sm:$0xff]
    %v202 = vld [vmem:[#allocation2 + $0x2f4] sm:$0xf]
    %v203 = vld [vmem:[#allocation2 + $0x2f8] sm:$0xff]
    %v204 = vld [vmem:[#allocation2 + $0x300] sm:$0xff]
    %v205 = vld [vmem:[#allocation2 + $0x308] sm:$0xf]
    %v206 = vld [vmem:[#allocation2 + $0x30c] sm:$0xff]
    %v207 = vld [vmem:[#allocation2 + $0x314] sm:$0xff]
    %v208 = vld [vmem:[#allocation2 + $0x31c] sm:$0xf]
    %v209 = vld [vmem:[#allocation2 + $0x320] sm:$0xff]
    %v210 = vld [vmem:[#allocation2 + $0x328] sm:$0xff]
    %v211 = vld [vmem:[#allocation2 + $0x330] sm:$0xf]
    %v212 = vld [vmem:[#allocation2 + $0x334] sm:$0xff]
    %v213 = vld [vmem:[#allocation2 + $0x33c] sm:$0xff]
    %v214 = vld [vmem:[#allocation2 + $0x344] sm:$0xf]
    %v215 = vld [vmem:[#allocation2 + $0x348] sm:$0xff]
    %v216 = vld [vmem:[#allocation2 + $0x350] sm:$0xff]
    %v217 = vld [vmem:[#allocation2 + $0x358] sm:$0xf]
    %v218 = vld [vmem:[#allocation2 + $0x35c] sm:$0xff]
    %v219 = vld [vmem:[#allocation2 + $0x364] sm:$0xff]
    %v220 = vld [vmem:[#allocation2 + $0x36c] sm:$0xf]
    %v221 = vld [vmem:[#allocation2 + $0x370] sm:$0xff]
    %v222 = vld [vmem:[#allocation2 + $0x378] sm:$0xff]
    %v223 = vld [vmem:[#allocation2 + $0x380] sm:$0xf]
    %v224 = vld [vmem:[#allocation2 + $0x384] sm:$0xff]
    %v225 = vld [vmem:[#allocation2 + $0x38c] sm:$0xff]
    %v226 = vld [vmem:[#allocation2 + $0x394] sm:$0xf]
    %v227 = vld [vmem:[#allocation2 + $0x398] sm:$0xff]
    %v228 = vld [vmem:[#allocation2 + $0x3a0] sm:$0xff]
    %v229 = vld [vmem:[#allocation2 + $0x3a8] sm:$0xf]
    %v230 = vld [vmem:[#allocation2 + $0x3ac] sm:$0xff]
    %v231 = vld [vmem:[#allocation2 + $0x3b4] sm:$0xff]
    %v232 = vld [vmem:[#allocation2 + $0x3bc] sm:$0xf]
    %v233 = vld [vmem:[#allocation2 + $0x3c0] sm:$0xff]
    %v234 = vld [vmem:[#allocation2 + $0x3c8] sm:$0xff]
    %v235 = vld [vmem:[#allocation2 + $0x3d0] sm:$0xf]
    %v236 = vld [vmem:[#allocation2 + $0x3d4] sm:$0xff]
    %v237 = vld [vmem:[#allocation2 + $0x3dc] sm:$0xff]
    %v238 = vld [vmem:[#allocation2 + $0x3e4] sm:$0xf]
    %v239 = vld [vmem:[#allocation2 + $0x3e8] sm:$0xff]
    %v240 = vld [vmem:[#allocation2 + $0x3f0] sm:$0xff]
    %v241 = vld [vmem:[#allocation2 + $0x3f8] sm:$0xf]
    %v242 = vld [vmem:[#allocation2 + $0x3fc] sm:$0xff]
    %v243 = vld [vmem:[#allocation2 + $0x404] sm:$0xff]
    %v244 = vld [vmem:[#allocation2 + $0x40c] sm:$0xf]
    %v245 = vld [vmem:[#allocation2 + $0x410] sm:$0xff]
    %v246 = vld [vmem:[#allocation2 + $0x418] sm:$0xff]
    %v247 = vld [vmem:[#allocation2 + $0x420] sm:$0xf]
    %v248 = vld [vmem:[#allocation2 + $0x424] sm:$0xff]
    %v249 = vld [vmem:[#allocation2 + $0x42c] sm:$0xff]
    %v250 = vld [vmem:[#allocation2 + $0x434] sm:$0xf]
    %v251 = vld [vmem:[#allocation2 + $0x438] sm:$0xff]
    %v252 = vld [vmem:[#allocation2 + $0x440] sm:$0xff]
    %v253 = vld [vmem:[#allocation2 + $0x448] sm:$0xf]
    %v254 = vld [vmem:[#allocation2 + $0x44c] sm:$0xff]
    %v255 = vld [vmem:[#allocation2 + $0x454] sm:$0xff]
    %v256 = vld [vmem:[#allocation2 + $0x45c] sm:$0xf]
    %v257 = vld [vmem:[#allocation2 + $0x460] sm:$0xff]
    %v258 = vld [vmem:[#allocation2 + $0x468] sm:$0xff]
    %v259 = vld [vmem:[#allocation2 + $0x470] sm:$0xf]
    %v260 = vld [vmem:[#allocation2 + $0x474] sm:$0xff]
    %v261 = vld [vmem:[#allocation2 + $0x47c] sm:$0xff]
    %v262 = vld [vmem:[#allocation2 + $0x484] sm:$0xf]
    %v263 = vld [vmem:[#allocation2 + $0x488] sm:$0xff]
    %v264 = vld [vmem:[#allocation2 + $0x490] sm:$0xff]
    %v265 = vld [vmem:[#allocation2 + $0x498] sm:$0xf]
    %v266 = vld [vmem:[#allocation2 + $0x49c] sm:$0xff]
    %v267 = vld [vmem:[#allocation2 + $0x4a4] sm:$0xff]
    %v268 = vld [vmem:[#allocation2 + $0x4ac] sm:$0xf]
    %v269 = vld [vmem:[#allocation2 + $0x4b0] sm:$0xff]
    %v270 = vld [vmem:[#allocation2 + $0x4b8] sm:$0xff]
    %v271 = vld [vmem:[#allocation2 + $0x4c0] sm:$0xf]
    %v272 = vld [vmem:[#allocation2 + $0x4c4] sm:$0xff]
    %v273 = vld [vmem:[#allocation2 + $0x4cc] sm:$0xff]
    %v274 = vld [vmem:[#allocation2 + $0x4d4] sm:$0xf]
    %v275 = vld [vmem:[#allocation2 + $0x4d8] sm:$0xff]
    %v276 = vld [vmem:[#allocation2 + $0x4e0] sm:$0xff]
    %v277 = vld [vmem:[#allocation2 + $0x4e8] sm:$0xf]
    %v278 = vld [vmem:[#allocation2 + $0x4ec] sm:$0xff]
    %v279 = vld [vmem:[#allocation2 + $0x4f4] sm:$0xff]
    %v280 = vld [vmem:[#allocation2 + $0x4fc] sm:$0xf]
    %v281 = vld [vmem:[#allocation2 + $0x500] sm:$0xff]
    %v282 = vld [vmem:[#allocation2 + $0x508] sm:$0xff]
    %v283 = vld [vmem:[#allocation2 + $0x510] sm:$0xf]
    %v284 = vld [vmem:[#allocation2 + $0x514] sm:$0xff]
    %v285 = vld [vmem:[#allocation2 + $0x51c] sm:$0xff]
    %v286 = vld [vmem:[#allocation2 + $0x524] sm:$0xf]
    %v287 = vld [vmem:[#allocation2 + $0x528] sm:$0xff]
    %v288 = vld [vmem:[#allocation2 + $0x530] sm:$0xff]
    %v289 = vld [vmem:[#allocation2 + $0x538] sm:$0xf]
    %v290 = vld [vmem:[#allocation2 + $0x53c] sm:$0xff]
    %v291 = vld [vmem:[#allocation2 + $0x544] sm:$0xff]
    %v292 = vld [vmem:[#allocation2 + $0x54c] sm:$0xf]
    %v293 = vld [vmem:[#allocation2 + $0x550] sm:$0xff]
    %v294 = vld [vmem:[#allocation2 + $0x558] sm:$0xff]
    %v295 = vld [vmem:[#allocation2 + $0x560] sm:$0xf]
    %v296 = vld [vmem:[#allocation2 + $0x564] sm:$0xff]
    %v297 = vld [vmem:[#allocation2 + $0x56c] sm:$0xff]
    %v298 = vld [vmem:[#allocation2 + $0x574] sm:$0xf]
    %v299 = vld [vmem:[#allocation2 + $0x578] sm:$0xff]
    %v300 = vld [vmem:[#allocation2 + $0x580] sm:$0xff]
    %v301 = vld [vmem:[#allocation2 + $0x588] sm:$0xf]
    %v302 = vld [vmem:[#allocation2 + $0x58c] sm:$0xff]
    %v303 = vld [vmem:[#allocation2 + $0x594] sm:$0xff]
    %v304 = vld [vmem:[#allocation2 + $0x59c] sm:$0xf]
    %v305 = vld [vmem:[#allocation2 + $0x5a0] sm:$0xff]
    %v306 = vld [vmem:[#allocation2 + $0x5a8] sm:$0xff]
    %v307 = vld [vmem:[#allocation2 + $0x5b0] sm:$0xf]
    %v308 = vld [vmem:[#allocation2 + $0x5b4] sm:$0xff]
    %v309 = vld [vmem:[#allocation2 + $0x5bc] sm:$0xff]
    %v310 = vld [vmem:[#allocation2 + $0x5c4] sm:$0xf]
    %v311 = vld [vmem:[#allocation2 + $0x5c8] sm:$0xff]
    %v312 = vld [vmem:[#allocation2 + $0x5d0] sm:$0xff]
    %v313 = vld [vmem:[#allocation2 + $0x5d8] sm:$0xf]
    %v314 = vld [vmem:[#allocation2 + $0x5dc] sm:$0xff]
    %v315 = vld [vmem:[#allocation2 + $0x5e4] sm:$0xff]
    %v316 = vld [vmem:[#allocation2 + $0x5ec] sm:$0xf]
    %v317 = vld [vmem:[#allocation2 + $0x5f0] sm:$0xff]
    %v318 = vld [vmem:[#allocation2 + $0x5f8] sm:$0xff]
    %v319 = vld [vmem:[#allocation2 + $0x600] sm:$0xf]
    %v320 = vld [vmem:[#allocation2 + $0x604] sm:$0xff]
    %v321 = vld [vmem:[#allocation2 + $0x60c] sm:$0xff]
    %v322 = vld [vmem:[#allocation2 + $0x614] sm:$0xf]
    %v323 = vld [vmem:[#allocation2 + $0x618] sm:$0xff]
    %v324 = vld [vmem:[#allocation2 + $0x620] sm:$0xff]
    %v325 = vld [vmem:[#allocation2 + $0x628] sm:$0xf]
    %v326 = vld [vmem:[#allocation2 + $0x62c] sm:$0xff]
    %v327 = vld [vmem:[#allocation2 + $0x634] sm:$0xff]
    %v328 = vld [vmem:[#allocation2 + $0x63c] sm:$0xf]
    %v329 = vld [vmem:[#allocation2 + $0x640] sm:$0xff]
    %v330 = vld [vmem:[#allocation2 + $0x648] sm:$0xff]
    %v331 = vld [vmem:[#allocation2 + $0x650] sm:$0xf]
    %v332 = vld [vmem:[#allocation2 + $0x654] sm:$0xff]
    %v333 = vld [vmem:[#allocation2 + $0x65c] sm:$0xff]
    %v334 = vld [vmem:[#allocation2 + $0x664] sm:$0xf]
    %v335 = vld [vmem:[#allocation2 + $0x668] sm:$0xff]
    %v336 = vld [vmem:[#allocation2 + $0x670] sm:$0xff]
    %v337 = vld [vmem:[#allocation2 + $0x678] sm:$0xf]
    %v338 = vld [vmem:[#allocation2 + $0x67c] sm:$0xff]
    %v339 = vld [vmem:[#allocation2 + $0x684] sm:$0xff]
    %v340 = vld [vmem:[#allocation2 + $0x68c] sm:$0xf]
    %v341 = vld [vmem:[#allocation2 + $0x690] sm:$0xff]
    %v342 = vld [vmem:[#allocation2 + $0x698] sm:$0xff]
    %v343 = vld [vmem:[#allocation2 + $0x6a0] sm:$0xf]
    %v344 = vld [vmem:[#allocation2 + $0x6a4] sm:$0xff]
    %v345 = vld [vmem:[#allocation2 + $0x6ac] sm:$0xff]
    %v346 = vld [vmem:[#allocation2 + $0x6b4] sm:$0xf]
    %v347 = vld [vmem:[#allocation2 + $0x6b8] sm:$0xff]
    %v348 = vld [vmem:[#allocation2 + $0x6c0] sm:$0xff]
    %v349 = vld [vmem:[#allocation2 + $0x6c8] sm:$0xf]
    %v350 = vld [vmem:[#allocation2 + $0x6cc] sm:$0xff]
    %v351 = vld [vmem:[#allocation2 + $0x6d4] sm:$0xff]
    %v352 = vld [vmem:[#allocation2 + $0x6dc] sm:$0xf]
    %v353 = vld [vmem:[#allocation2 + $0x6e0] sm:$0xff]
    %v354 = vld [vmem:[#allocation2 + $0x6e8] sm:$0xff]
    %v355 = vld [vmem:[#allocation2 + $0x6f0] sm:$0xf]
    %v356 = vld [vmem:[#allocation2 + $0x6f4] sm:$0xff]
    %v357 = vld [vmem:[#allocation2 + $0x6fc] sm:$0xff]
    %v358 = vld [vmem:[#allocation2 + $0x704] sm:$0xf]
    %v359 = vld [vmem:[#allocation2 + $0x708] sm:$0xff]
    %v360 = vld [vmem:[#allocation2 + $0x710] sm:$0xff]
    %v361 = vld [vmem:[#allocation2 + $0x718] sm:$0xf]
    %v362 = vld [vmem:[#allocation2 + $0x71c] sm:$0xff]
    %v363 = vld [vmem:[#allocation2 + $0x724] sm:$0xff]
    %v364 = vld [vmem:[#allocation2 + $0x72c] sm:$0xf]
    %v365 = vld [vmem:[#allocation2 + $0x730] sm:$0xff]
    %v366 = vld [vmem:[#allocation2 + $0x738] sm:$0xff]
    %v367 = vld [vmem:[#allocation2 + $0x740] sm:$0xf]
    %v368 = vld [vmem:[#allocation2 + $0x744] sm:$0xff]
    %v369 = vld [vmem:[#allocation2 + $0x74c] sm:$0xff]
    %v370 = vld [vmem:[#allocation2 + $0x754] sm:$0xf]
    %v371 = vld [vmem:[#allocation2 + $0x758] sm:$0xff]
    %v372 = vld [vmem:[#allocation2 + $0x760] sm:$0xff]
    %v373 = vld [vmem:[#allocation2 + $0x768] sm:$0xf]
    %v374 = vld [vmem:[#allocation2 + $0x76c] sm:$0xff]
    %v375 = vld [vmem:[#allocation2 + $0x774] sm:$0xff]
    %v376 = vld [vmem:[#allocation2 + $0x77c] sm:$0xf]
    %v377 = vld [vmem:[#allocation2 + $0x780] sm:$0xff]
    %v378 = vld [vmem:[#allocation2 + $0x788] sm:$0xff]
    %v379 = vld [vmem:[#allocation2 + $0x790] sm:$0xf]
    %v380 = vld [vmem:[#allocation2 + $0x794] sm:$0xff]
    %v381 = vld [vmem:[#allocation2 + $0x79c] sm:$0xff]
    %v382 = vld [vmem:[#allocation2 + $0x7a4] sm:$0xf]
    %v677 = vunpack.c.l.b16 %v89
    %v678 = vunpack.c.h.b16 %v89
    %v679 = vunpack.c.l.b16 %v90
    %v680 = vunpack.c.h.b16 %v90
    %v681 = vunpack.c.l.b16 %v91
    %v682 = vunpack.c.l.b16 %v92
    %v683 = vunpack.c.h.b16 %v92
    %v684 = vunpack.c.l.b16 %v93
    %v685 = vunpack.c.h.b16 %v93
    %v686 = vunpack.c.l.b16 %v94
    %v687 = vunpack.c.l.b16 %v95
    %v688 = vunpack.c.h.b16 %v95
    %v689 = vunpack.c.l.b16 %v96
    %v690 = vunpack.c.h.b16 %v96
    %v691 = vunpack.c.l.b16 %v97
    %v692 = vunpack.c.l.b16 %v98
    %v693 = vunpack.c.h.b16 %v98
    %v694 = vunpack.c.l.b16 %v99
    %v695 = vunpack.c.h.b16 %v99
    %v696 = vunpack.c.l.b16 %v100
    %v697 = vunpack.c.l.b16 %v101
    %v698 = vunpack.c.h.b16 %v101
    %v699 = vunpack.c.l.b16 %v102
    %v700 = vunpack.c.h.b16 %v102
    %v701 = vunpack.c.l.b16 %v103
    %v702 = vunpack.c.l.b16 %v104
    %v703 = vunpack.c.h.b16 %v104
    %v704 = vunpack.c.l.b16 %v105
    %v705 = vunpack.c.h.b16 %v105
    %v706 = vunpack.c.l.b16 %v106
    %v707 = vunpack.c.l.b16 %v107
    %v708 = vunpack.c.h.b16 %v107
    %v709 = vunpack.c.l.b16 %v108
    %v710 = vunpack.c.h.b16 %v108
    %v711 = vunpack.c.l.b16 %v109
    %v712 = vunpack.c.l.b16 %v110
    %v713 = vunpack.c.h.b16 %v110
    %v714 = vunpack.c.l.b16 %v111
    %v715 = vunpack.c.h.b16 %v111
    %v716 = vunpack.c.l.b16 %v112
    %v717 = vunpack.c.l.b16 %v113
    %v718 = vunpack.c.h.b16 %v113
    %v719 = vunpack.c.l.b16 %v114
    %v720 = vunpack.c.h.b16 %v114
    %v721 = vunpack.c.l.b16 %v115
    %v722 = vunpack.c.l.b16 %v116
    %v723 = vunpack.c.h.b16 %v116
    %v724 = vunpack.c.l.b16 %v117
    %v725 = vunpack.c.h.b16 %v117
    %v726 = vunpack.c.l.b16 %v118
    %v727 = vunpack.c.l.b16 %v119
    %v728 = vunpack.c.h.b16 %v119
    %v729 = vunpack.c.l.b16 %v120
    %v730 = vunpack.c.h.b16 %v120
    %v731 = vunpack.c.l.b16 %v121
    %v732 = vunpack.c.l.b16 %v122
    %v733 = vunpack.c.h.b16 %v122
    %v734 = vunpack.c.l.b16 %v123
    %v735 = vunpack.c.h.b16 %v123
    %v736 = vunpack.c.l.b16 %v124
    %v737 = vunpack.c.l.b16 %v125
    %v738 = vunpack.c.h.b16 %v125
    %v739 = vunpack.c.l.b16 %v126
    %v740 = vunpack.c.h.b16 %v126
    %v741 = vunpack.c.l.b16 %v127
    %v742 = vunpack.c.l.b16 %v128
    %v743 = vunpack.c.h.b16 %v128
    %v744 = vunpack.c.l.b16 %v129
    %v745 = vunpack.c.h.b16 %v129
    %v746 = vunpack.c.l.b16 %v130
    %v747 = vunpack.c.l.b16 %v131
    %v748 = vunpack.c.h.b16 %v131
    %v749 = vunpack.c.l.b16 %v132
    %v750 = vunpack.c.h.b16 %v132
    %v751 = vunpack.c.l.b16 %v133
    %v752 = vunpack.c.l.b16 %v134
    %v753 = vunpack.c.h.b16 %v134
    %v754 = vunpack.c.l.b16 %v135
    %v755 = vunpack.c.h.b16 %v135
    %v756 = vunpack.c.l.b16 %v136
    %v757 = vunpack.c.l.b16 %v137
    %v758 = vunpack.c.h.b16 %v137
    %v759 = vunpack.c.l.b16 %v138
    %v760 = vunpack.c.h.b16 %v138
    %v761 = vunpack.c.l.b16 %v139
    %v762 = vunpack.c.l.b16 %v140
    %v763 = vunpack.c.h.b16 %v140
    %v764 = vunpack.c.l.b16 %v141
    %v765 = vunpack.c.h.b16 %v141
    %v766 = vunpack.c.l.b16 %v142
    %v767 = vunpack.c.l.b16 %v143
    %v768 = vunpack.c.h.b16 %v143
    %v769 = vunpack.c.l.b16 %v144
    %v770 = vunpack.c.h.b16 %v144
    %v771 = vunpack.c.l.b16 %v145
    %v772 = vunpack.c.l.b16 %v146
    %v773 = vunpack.c.h.b16 %v146
    %v774 = vunpack.c.l.b16 %v147
    %v775 = vunpack.c.h.b16 %v147
    %v776 = vunpack.c.l.b16 %v148
    %v777 = vunpack.c.l.b16 %v149
    %v778 = vunpack.c.h.b16 %v149
    %v779 = vunpack.c.l.b16 %v150
    %v780 = vunpack.c.h.b16 %v150
    %v781 = vunpack.c.l.b16 %v151
    %v782 = vunpack.c.l.b16 %v152
    %v783 = vunpack.c.h.b16 %v152
    %v784 = vunpack.c.l.b16 %v153
    %v785 = vunpack.c.h.b16 %v153
    %v786 = vunpack.c.l.b16 %v154
    %v787 = vunpack.c.l.b16 %v155
    %v788 = vunpack.c.h.b16 %v155
    %v789 = vunpack.c.l.b16 %v156
    %v790 = vunpack.c.h.b16 %v156
    %v791 = vunpack.c.l.b16 %v157
    %v792 = vunpack.c.l.b16 %v158
    %v793 = vunpack.c.h.b16 %v158
    %v794 = vunpack.c.l.b16 %v159
    %v795 = vunpack.c.h.b16 %v159
    %v796 = vunpack.c.l.b16 %v160
    %v797 = vunpack.c.l.b16 %v161
    %v798 = vunpack.c.h.b16 %v161
    %v799 = vunpack.c.l.b16 %v162
    %v800 = vunpack.c.h.b16 %v162
    %v801 = vunpack.c.l.b16 %v163
    %v802 = vunpack.c.l.b16 %v164
    %v803 = vunpack.c.h.b16 %v164
    %v804 = vunpack.c.l.b16 %v165
    %v805 = vunpack.c.h.b16 %v165
    %v806 = vunpack.c.l.b16 %v166
    %v807 = vunpack.c.l.b16 %v167
    %v808 = vunpack.c.h.b16 %v167
    %v809 = vunpack.c.l.b16 %v168
    %v810 = vunpack.c.h.b16 %v168
    %v811 = vunpack.c.l.b16 %v169
    %v812 = vunpack.c.l.b16 %v170
    %v813 = vunpack.c.h.b16 %v170
    %v814 = vunpack.c.l.b16 %v171
    %v815 = vunpack.c.h.b16 %v171
    %v816 = vunpack.c.l.b16 %v172
    %v817 = vunpack.c.l.b16 %v173
    %v818 = vunpack.c.h.b16 %v173
    %v819 = vunpack.c.l.b16 %v174
    %v820 = vunpack.c.h.b16 %v174
    %v821 = vunpack.c.l.b16 %v175
    %v822 = vunpack.c.l.b16 %v176
    %v823 = vunpack.c.h.b16 %v176
    %v824 = vunpack.c.l.b16 %v177
    %v825 = vunpack.c.h.b16 %v177
    %v826 = vunpack.c.l.b16 %v178
    %v827 = vunpack.c.l.b16 %v179
    %v828 = vunpack.c.h.b16 %v179
    %v829 = vunpack.c.l.b16 %v180
    %v830 = vunpack.c.h.b16 %v180
    %v831 = vunpack.c.l.b16 %v181
    %v832 = vunpack.c.l.b16 %v182
    %v833 = vunpack.c.h.b16 %v182
    %v834 = vunpack.c.l.b16 %v183
    %v835 = vunpack.c.h.b16 %v183
    %v836 = vunpack.c.l.b16 %v184
    %v837 = vunpack.c.l.b16 %v185
    %v838 = vunpack.c.h.b16 %v185
    %v839 = vunpack.c.l.b16 %v186
    %v840 = vunpack.c.h.b16 %v186
    %v841 = vunpack.c.l.b16 %v187
    %v842 = vunpack.c.l.b16 %v188
    %v843 = vunpack.c.h.b16 %v188
    %v844 = vunpack.c.l.b16 %v189
    %v845 = vunpack.c.h.b16 %v189
    %v846 = vunpack.c.l.b16 %v190
    %v847 = vunpack.c.l.b16 %v191
    %v848 = vunpack.c.h.b16 %v191
    %v849 = vunpack.c.l.b16 %v192
    %v850 = vunpack.c.h.b16 %v192
    %v851 = vunpack.c.l.b16 %v193
    %v852 = vunpack.c.l.b16 %v194
    %v853 = vunpack.c.h.b16 %v194
    %v854 = vunpack.c.l.b16 %v195
    %v855 = vunpack.c.h.b16 %v195
    %v856 = vunpack.c.l.b16 %v196
    %v857 = vunpack.c.l.b16 %v197
    %v858 = vunpack.c.h.b16 %v197
    %v859 = vunpack.c.l.b16 %v198
    %v860 = vunpack.c.h.b16 %v198
    %v861 = vunpack.c.l.b16 %v199
    %v862 = vunpack.c.l.b16 %v200
    %v863 = vunpack.c.h.b16 %v200
    %v864 = vunpack.c.l.b16 %v201
    %v865 = vunpack.c.h.b16 %v201
    %v866 = vunpack.c.l.b16 %v202
    %v867 = vunpack.c.l.b16 %v203
    %v868 = vunpack.c.h.b16 %v203
    %v869 = vunpack.c.l.b16 %v204
    %v870 = vunpack.c.h.b16 %v204
    %v871 = vunpack.c.l.b16 %v205
    %v872 = vunpack.c.l.b16 %v206
    %v873 = vunpack.c.h.b16 %v206
    %v874 = vunpack.c.l.b16 %v207
    %v875 = vunpack.c.h.b16 %v207
    %v876 = vunpack.c.l.b16 %v208
    %v877 = vunpack.c.l.b16 %v209
    %v878 = vunpack.c.h.b16 %v209
    %v879 = vunpack.c.l.b16 %v210
    %v880 = vunpack.c.h.b16 %v210
    %v881 = vunpack.c.l.b16 %v211
    %v882 = vunpack.c.l.b16 %v212
    %v883 = vunpack.c.h.b16 %v212
    %v884 = vunpack.c.l.b16 %v213
    %v885 = vunpack.c.h.b16 %v213
    %v886 = vunpack.c.l.b16 %v214
    %v887 = vunpack.c.l.b16 %v215
    %v888 = vunpack.c.h.b16 %v215
    %v889 = vunpack.c.l.b16 %v216
    %v890 = vunpack.c.h.b16 %v216
    %v891 = vunpack.c.l.b16 %v217
    %v892 = vunpack.c.l.b16 %v218
    %v893 = vunpack.c.h.b16 %v218
    %v894 = vunpack.c.l.b16 %v219
    %v895 = vunpack.c.h.b16 %v219
    %v896 = vunpack.c.l.b16 %v220
    %v897 = vunpack.c.l.b16 %v221
    %v898 = vunpack.c.h.b16 %v221
    %v899 = vunpack.c.l.b16 %v222
    %v900 = vunpack.c.h.b16 %v222
    %v901 = vunpack.c.l.b16 %v223
    %v902 = vunpack.c.l.b16 %v224
    %v903 = vunpack.c.h.b16 %v224
    %v904 = vunpack.c.l.b16 %v225
    %v905 = vunpack.c.h.b16 %v225
    %v906 = vunpack.c.l.b16 %v226
    %v907 = vunpack.c.l.b16 %v227
    %v908 = vunpack.c.h.b16 %v227
    %v909 = vunpack.c.l.b16 %v228
    %v910 = vunpack.c.h.b16 %v228
    %v911 = vunpack.c.l.b16 %v229
    %v912 = vunpack.c.l.b16 %v230
    %v913 = vunpack.c.h.b16 %v230
    %v914 = vunpack.c.l.b16 %v231
    %v915 = vunpack.c.h.b16 %v231
    %v916 = vunpack.c.l.b16 %v232
    %v917 = vunpack.c.l.b16 %v233
    %v918 = vunpack.c.h.b16 %v233
    %v919 = vunpack.c.l.b16 %v234
    %v920 = vunpack.c.h.b16 %v234
    %v921 = vunpack.c.l.b16 %v235
    %v922 = vunpack.c.l.b16 %v236
    %v923 = vunpack.c.h.b16 %v236
    %v924 = vunpack.c.l.b16 %v237
    %v925 = vunpack.c.h.b16 %v237
    %v926 = vunpack.c.l.b16 %v238
    %v927 = vunpack.c.l.b16 %v239
    %v928 = vunpack.c.h.b16 %v239
    %v929 = vunpack.c.l.b16 %v240
    %v930 = vunpack.c.h.b16 %v240
    %v931 = vunpack.c.l.b16 %v241
    %v932 = vunpack.c.l.b16 %v242
    %v933 = vunpack.c.h.b16 %v242
    %v934 = vunpack.c.l.b16 %v243
    %v935 = vunpack.c.h.b16 %v243
    %v936 = vunpack.c.l.b16 %v244
    %v937 = vunpack.c.l.b16 %v245
    %v938 = vunpack.c.h.b16 %v245
    %v939 = vunpack.c.l.b16 %v246
    %v940 = vunpack.c.h.b16 %v246
    %v941 = vunpack.c.l.b16 %v247
    %v942 = vunpack.c.l.b16 %v248
    %v943 = vunpack.c.h.b16 %v248
    %v944 = vunpack.c.l.b16 %v249
    %v945 = vunpack.c.h.b16 %v249
    %v946 = vunpack.c.l.b16 %v250
    %v947 = vunpack.c.l.b16 %v251
    %v948 = vunpack.c.h.b16 %v251
    %v949 = vunpack.c.l.b16 %v252
    %v950 = vunpack.c.h.b16 %v252
    %v951 = vunpack.c.l.b16 %v253
    %v952 = vunpack.c.l.b16 %v254
    %v953 = vunpack.c.h.b16 %v254
    %v954 = vunpack.c.l.b16 %v255
    %v955 = vunpack.c.h.b16 %v255
    %v956 = vunpack.c.l.b16 %v256
    %v957 = vunpack.c.l.b16 %v257
    %v958 = vunpack.c.h.b16 %v257
    %v959 = vunpack.c.l.b16 %v258
    %v960 = vunpack.c.h.b16 %v258
    %v961 = vunpack.c.l.b16 %v259
    %v962 = vunpack.c.l.b16 %v260
    %v963 = vunpack.c.h.b16 %v260
    %v964 = vunpack.c.l.b16 %v261
    %v965 = vunpack.c.h.b16 %v261
    %v966 = vunpack.c.l.b16 %v262
    %v967 = vunpack.c.l.b16 %v263
    %v968 = vunpack.c.h.b16 %v263
    %v969 = vunpack.c.l.b16 %v264
    %v970 = vunpack.c.h.b16 %v264
    %v971 = vunpack.c.l.b16 %v265
    %v972 = vunpack.c.l.b16 %v266
    %v973 = vunpack.c.h.b16 %v266
    %v974 = vunpack.c.l.b16 %v267
    %v975 = vunpack.c.h.b16 %v267
    %v976 = vunpack.c.l.b16 %v268
    %v977 = vunpack.c.l.b16 %v269
    %v978 = vunpack.c.h.b16 %v269
    %v979 = vunpack.c.l.b16 %v270
    %v980 = vunpack.c.h.b16 %v270
    %v981 = vunpack.c.l.b16 %v271
    %v982 = vunpack.c.l.b16 %v272
    %v983 = vunpack.c.h.b16 %v272
    %v984 = vunpack.c.l.b16 %v273
    %v985 = vunpack.c.h.b16 %v273
    %v986 = vunpack.c.l.b16 %v274
    %v987 = vunpack.c.l.b16 %v275
    %v988 = vunpack.c.h.b16 %v275
    %v989 = vunpack.c.l.b16 %v276
    %v990 = vunpack.c.h.b16 %v276
    %v991 = vunpack.c.l.b16 %v277
    %v992 = vunpack.c.l.b16 %v278
    %v993 = vunpack.c.h.b16 %v278
    %v994 = vunpack.c.l.b16 %v279
    %v995 = vunpack.c.h.b16 %v279
    %v996 = vunpack.c.l.b16 %v280
    %v997 = vunpack.c.l.b16 %v281
    %v998 = vunpack.c.h.b16 %v281
    %v999 = vunpack.c.l.b16 %v282
    %v1000 = vunpack.c.h.b16 %v282
    %v1001 = vunpack.c.l.b16 %v283
    %v1002 = vunpack.c.l.b16 %v284
    %v1003 = vunpack.c.h.b16 %v284
    %v1004 = vunpack.c.l.b16 %v285
    %v1005 = vunpack.c.h.b16 %v285
    %v1006 = vunpack.c.l.b16 %v286
    %v1007 = vunpack.c.l.b16 %v287
    %v1008 = vunpack.c.h.b16 %v287
    %v1009 = vunpack.c.l.b16 %v288
    %v1010 = vunpack.c.h.b16 %v288
    %v1011 = vunpack.c.l.b16 %v289
    %v1012 = vunpack.c.l.b16 %v290
    %v1013 = vunpack.c.h.b16 %v290
    %v1014 = vunpack.c.l.b16 %v291
    %v1015 = vunpack.c.h.b16 %v291
    %v1016 = vunpack.c.l.b16 %v292
    %v1017 = vunpack.c.l.b16 %v293
    %v1018 = vunpack.c.h.b16 %v293
    %v1019 = vunpack.c.l.b16 %v294
    %v1020 = vunpack.c.h.b16 %v294
    %v1021 = vunpack.c.l.b16 %v295
    %v1022 = vunpack.c.l.b16 %v296
    %v1023 = vunpack.c.h.b16 %v296
    %v1024 = vunpack.c.l.b16 %v297
    %v1025 = vunpack.c.h.b16 %v297
    %v1026 = vunpack.c.l.b16 %v298
    %v1027 = vunpack.c.l.b16 %v299
    %v1028 = vunpack.c.h.b16 %v299
    %v1029 = vunpack.c.l.b16 %v300
    %v1030 = vunpack.c.h.b16 %v300
    %v1031 = vunpack.c.l.b16 %v301
    %v1032 = vunpack.c.l.b16 %v302
    %v1033 = vunpack.c.h.b16 %v302
    %v1034 = vunpack.c.l.b16 %v303
    %v1035 = vunpack.c.h.b16 %v303
    %v1036 = vunpack.c.l.b16 %v304
    %v1037 = vunpack.c.l.b16 %v305
    %v1038 = vunpack.c.h.b16 %v305
    %v1039 = vunpack.c.l.b16 %v306
    %v1040 = vunpack.c.h.b16 %v306
    %v1041 = vunpack.c.l.b16 %v307
    %v1042 = vunpack.c.l.b16 %v308
    %v1043 = vunpack.c.h.b16 %v308
    %v1044 = vunpack.c.l.b16 %v309
    %v1045 = vunpack.c.h.b16 %v309
    %v1046 = vunpack.c.l.b16 %v310
    %v1047 = vunpack.c.l.b16 %v311
    %v1048 = vunpack.c.h.b16 %v311
    %v1049 = vunpack.c.l.b16 %v312
    %v1050 = vunpack.c.h.b16 %v312
    %v1051 = vunpack.c.l.b16 %v313
    %v1052 = vunpack.c.l.b16 %v314
    %v1053 = vunpack.c.h.b16 %v314
    %v1054 = vunpack.c.l.b16 %v315
    %v1055 = vunpack.c.h.b16 %v315
    %v1056 = vunpack.c.l.b16 %v316
    %v1057 = vunpack.c.l.b16 %v317
    %v1058 = vunpack.c.h.b16 %v317
    %v1059 = vunpack.c.l.b16 %v318
    %v1060 = vunpack.c.h.b16 %v318
    %v1061 = vunpack.c.l.b16 %v319
    %v1062 = vunpack.c.l.b16 %v320
    %v1063 = vunpack.c.h.b16 %v320
    %v1064 = vunpack.c.l.b16 %v321
    %v1065 = vunpack.c.h.b16 %v321
    %v1066 = vunpack.c.l.b16 %v322
    %v1067 = vunpack.c.l.b16 %v323
    %v1068 = vunpack.c.h.b16 %v323
    %v1069 = vunpack.c.l.b16 %v324
    %v1070 = vunpack.c.h.b16 %v324
    %v1071 = vunpack.c.l.b16 %v325
    %v1072 = vunpack.c.l.b16 %v326
    %v1073 = vunpack.c.h.b16 %v326
    %v1074 = vunpack.c.l.b16 %v327
    %v1075 = vunpack.c.h.b16 %v327
    %v1076 = vunpack.c.l.b16 %v328
    %v1077 = vunpack.c.l.b16 %v329
    %v1078 = vunpack.c.h.b16 %v329
    %v1079 = vunpack.c.l.b16 %v330
    %v1080 = vunpack.c.h.b16 %v330
    %v1081 = vunpack.c.l.b16 %v331
    %v1082 = vunpack.c.l.b16 %v332
    %v1083 = vunpack.c.h.b16 %v332
    %v1084 = vunpack.c.l.b16 %v333
    %v1085 = vunpack.c.h.b16 %v333
    %v1086 = vunpack.c.l.b16 %v334
    %v1087 = vunpack.c.l.b16 %v335
    %v1088 = vunpack.c.h.b16 %v335
    %v1089 = vunpack.c.l.b16 %v336
    %v1090 = vunpack.c.h.b16 %v336
    %v1091 = vunpack.c.l.b16 %v337
    %v1092 = vunpack.c.l.b16 %v338
    %v1093 = vunpack.c.h.b16 %v338
    %v1094 = vunpack.c.l.b16 %v339
    %v1095 = vunpack.c.h.b16 %v339
    %v1096 = vunpack.c.l.b16 %v340
    %v1097 = vunpack.c.l.b16 %v341
    %v1098 = vunpack.c.h.b16 %v341
    %v1099 = vunpack.c.l.b16 %v342
    %v1100 = vunpack.c.h.b16 %v342
    %v1101 = vunpack.c.l.b16 %v343
    %v1102 = vunpack.c.l.b16 %v344
    %v1103 = vunpack.c.h.b16 %v344
    %v1104 = vunpack.c.l.b16 %v345
    %v1105 = vunpack.c.h.b16 %v345
    %v1106 = vunpack.c.l.b16 %v346
    %v1107 = vunpack.c.l.b16 %v347
    %v1108 = vunpack.c.h.b16 %v347
    %v1109 = vunpack.c.l.b16 %v348
    %v1110 = vunpack.c.h.b16 %v348
    %v1111 = vunpack.c.l.b16 %v349
    %v1112 = vunpack.c.l.b16 %v350
    %v1113 = vunpack.c.h.b16 %v350
    %v1114 = vunpack.c.l.b16 %v351
    %v1115 = vunpack.c.h.b16 %v351
    %v1116 = vunpack.c.l.b16 %v352
    %v1117 = vunpack.c.l.b16 %v353
    %v1118 = vunpack.c.h.b16 %v353
    %v1119 = vunpack.c.l.b16 %v354
    %v1120 = vunpack.c.h.b16 %v354
    %v1121 = vunpack.c.l.b16 %v355
    %v1122 = vunpack.c.l.b16 %v356
    %v1123 = vunpack.c.h.b16 %v356
    %v1124 = vunpack.c.l.b16 %v357
    %v1125 = vunpack.c.h.b16 %v357
    %v1126 = vunpack.c.l.b16 %v358
    %v1127 = vunpack.c.l.b16 %v359
    %v1128 = vunpack.c.h.b16 %v359
    %v1129 = vunpack.c.l.b16 %v360
    %v1130 = vunpack.c.h.b16 %v360
    %v1131 = vunpack.c.l.b16 %v361
    %v1132 = vunpack.c.l.b16 %v362
    %v1133 = vunpack.c.h.b16 %v362
    %v1134 = vunpack.c.l.b16 %v363
    %v1135 = vunpack.c.h.b16 %v363
    %v1136 = vunpack.c.l.b16 %v364
    %v1137 = vunpack.c.l.b16 %v365
    %v1138 = vunpack.c.h.b16 %v365
    %v1139 = vunpack.c.l.b16 %v366
    %v1140 = vunpack.c.h.b16 %v366
    %v1141 = vunpack.c.l.b16 %v367
    %v1142 = vunpack.c.l.b16 %v368
    %v1143 = vunpack.c.h.b16 %v368
    %v1144 = vunpack.c.l.b16 %v369
    %v1145 = vunpack.c.h.b16 %v369
    %v1146 = vunpack.c.l.b16 %v370
    %v1147 = vunpack.c.l.b16 %v371
    %v1148 = vunpack.c.h.b16 %v371
    %v1149 = vunpack.c.l.b16 %v372
    %v1150 = vunpack.c.h.b16 %v372
    %v1151 = vunpack.c.l.b16 %v373
    %v1152 = vunpack.c.l.b16 %v374
    %v1153 = vunpack.c.h.b16 %v374
    %v1154 = vunpack.c.l.b16 %v375
    %v1155 = vunpack.c.h.b16 %v375
    %v1156 = vunpack.c.l.b16 %v376
    %v1157 = vunpack.c.l.b16 %v377
    %v1158 = vunpack.c.h.b16 %v377
    %v1159 = vunpack.c.l.b16 %v378
    %v1160 = vunpack.c.h.b16 %v378
    %v1161 = vunpack.c.l.b16 %v379
    %v1162 = vunpack.c.l.b16 %v380
    %v1163 = vunpack.c.h.b16 %v380
    %v1164 = vunpack.c.l.b16 %v381
    %v1165 = vunpack.c.h.b16 %v381
    %v1166 = vunpack.c.l.b16 %v382
    %v1167 = vpack.c.b16 %v682, %v677
    %v1168 = vpack.c.b16 %v683, %v678
    %v1169 = vpack.c.b16 %v684, %v679
    %v1170 = vpack.c.b16 %v685, %v680
    %v1171 = vpack.c.b16 %v686, %v681
    %v1172 = vpack.c.b16 %v692, %v687
    %v1173 = vpack.c.b16 %v693, %v688
    %v1174 = vpack.c.b16 %v694, %v689
    %v1175 = vpack.c.b16 %v695, %v690
    %v1176 = vpack.c.b16 %v696, %v691
    %v1177 = vpack.c.b16 %v702, %v697
    %v1178 = vpack.c.b16 %v703, %v698
    %v1179 = vpack.c.b16 %v704, %v699
    %v1180 = vpack.c.b16 %v705, %v700
    %v1181 = vpack.c.b16 %v706, %v701
    %v1182 = vpack.c.b16 %v712, %v707
    %v1183 = vpack.c.b16 %v713, %v708
    %v1184 = vpack.c.b16 %v714, %v709
    %v1185 = vpack.c.b16 %v715, %v710
    %v1186 = vpack.c.b16 %v716, %v711
    %v1187 = vpack.c.b16 %v722, %v717
    %v1188 = vpack.c.b16 %v723, %v718
    %v1189 = vpack.c.b16 %v724, %v719
    %v1190 = vpack.c.b16 %v725, %v720
    %v1191 = vpack.c.b16 %v726, %v721
    %v1192 = vpack.c.b16 %v732, %v727
    %v1193 = vpack.c.b16 %v733, %v728
    %v1194 = vpack.c.b16 %v734, %v729
    %v1195 = vpack.c.b16 %v735, %v730
    %v1196 = vpack.c.b16 %v736, %v731
    %v1197 = vpack.c.b16 %v742, %v737
    %v1198 = vpack.c.b16 %v743, %v738
    %v1199 = vpack.c.b16 %v744, %v739
    %v1200 = vpack.c.b16 %v745, %v740
    %v1201 = vpack.c.b16 %v746, %v741
    %v1202 = vpack.c.b16 %v752, %v747
    %v1203 = vpack.c.b16 %v753, %v748
    %v1204 = vpack.c.b16 %v754, %v749
    %v1205 = vpack.c.b16 %v755, %v750
    %v1206 = vpack.c.b16 %v756, %v751
    %v1207 = vpack.c.b16 %v762, %v757
    %v1208 = vpack.c.b16 %v763, %v758
    %v1209 = vpack.c.b16 %v764, %v759
    %v1210 = vpack.c.b16 %v765, %v760
    %v1211 = vpack.c.b16 %v766, %v761
    %v1212 = vpack.c.b16 %v772, %v767
    %v1213 = vpack.c.b16 %v773, %v768
    %v1214 = vpack.c.b16 %v774, %v769
    %v1215 = vpack.c.b16 %v775, %v770
    %v1216 = vpack.c.b16 %v776, %v771
    %v1217 = vpack.c.b16 %v782, %v777
    %v1218 = vpack.c.b16 %v783, %v778
    %v1219 = vpack.c.b16 %v784, %v779
    %v1220 = vpack.c.b16 %v785, %v780
    %v1221 = vpack.c.b16 %v786, %v781
    %v1222 = vpack.c.b16 %v792, %v787
    %v1223 = vpack.c.b16 %v793, %v788
    %v1224 = vpack.c.b16 %v794, %v789
    %v1225 = vpack.c.b16 %v795, %v790
    %v1226 = vpack.c.b16 %v796, %v791
    %v1227 = vpack.c.b16 %v802, %v797
    %v1228 = vpack.c.b16 %v803, %v798
    %v1229 = vpack.c.b16 %v804, %v799
    %v1230 = vpack.c.b16 %v805, %v800
    %v1231 = vpack.c.b16 %v806, %v801
    %v1232 = vpack.c.b16 %v812, %v807
    %v1233 = vpack.c.b16 %v813, %v808
    %v1234 = vpack.c.b16 %v814, %v809
    %v1235 = vpack.c.b16 %v815, %v810
    %v1236 = vpack.c.b16 %v816, %v811
    %v1237 = vpack.c.b16 %v822, %v817
    %v1238 = vpack.c.b16 %v823, %v818
    %v1239 = vpack.c.b16 %v824, %v819
    %v1240 = vpack.c.b16 %v825, %v820
    %v1241 = vpack.c.b16 %v826, %v821
    %v1242 = vpack.c.b16 %v832, %v827
    %v1243 = vpack.c.b16 %v833, %v828
    %v1244 = vpack.c.b16 %v834, %v829
    %v1245 = vpack.c.b16 %v835, %v830
    %v1246 = vpack.c.b16 %v836, %v831
    %v1247 = vpack.c.b16 %v842, %v837
    %v1248 = vpack.c.b16 %v843, %v838
    %v1249 = vpack.c.b16 %v844, %v839
    %v1250 = vpack.c.b16 %v845, %v840
    %v1251 = vpack.c.b16 %v846, %v841
    %v1252 = vpack.c.b16 %v852, %v847
    %v1253 = vpack.c.b16 %v853, %v848
    %v1254 = vpack.c.b16 %v854, %v849
    %v1255 = vpack.c.b16 %v855, %v850
    %v1256 = vpack.c.b16 %v856, %v851
    %v1257 = vpack.c.b16 %v862, %v857
    %v1258 = vpack.c.b16 %v863, %v858
    %v1259 = vpack.c.b16 %v864, %v859
    %v1260 = vpack.c.b16 %v865, %v860
    %v1261 = vpack.c.b16 %v866, %v861
    %v1262 = vpack.c.b16 %v872, %v867
    %v1263 = vpack.c.b16 %v873, %v868
    %v1264 = vpack.c.b16 %v874, %v869
    %v1265 = vpack.c.b16 %v875, %v870
    %v1266 = vpack.c.b16 %v876, %v871
    %v1267 = vpack.c.b16 %v882, %v877
    %v1268 = vpack.c.b16 %v883, %v878
    %v1269 = vpack.c.b16 %v884, %v879
    %v1270 = vpack.c.b16 %v885, %v880
    %v1271 = vpack.c.b16 %v886, %v881
    %v1272 = vpack.c.b16 %v892, %v887
    %v1273 = vpack.c.b16 %v893, %v888
    %v1274 = vpack.c.b16 %v894, %v889
    %v1275 = vpack.c.b16 %v895, %v890
    %v1276 = vpack.c.b16 %v896, %v891
    %v1277 = vpack.c.b16 %v902, %v897
    %v1278 = vpack.c.b16 %v903, %v898
    %v1279 = vpack.c.b16 %v904, %v899
    %v1280 = vpack.c.b16 %v905, %v900
    %v1281 = vpack.c.b16 %v906, %v901
    %v1282 = vpack.c.b16 %v912, %v907
    %v1283 = vpack.c.b16 %v913, %v908
    %v1284 = vpack.c.b16 %v914, %v909
    %v1285 = vpack.c.b16 %v915, %v910
    %v1286 = vpack.c.b16 %v916, %v911
    %v1287 = vpack.c.b16 %v922, %v917
    %v1288 = vpack.c.b16 %v923, %v918
    %v1289 = vpack.c.b16 %v924, %v919
    %v1290 = vpack.c.b16 %v925, %v920
    %v1291 = vpack.c.b16 %v926, %v921
    %v1292 = vpack.c.b16 %v932, %v927
    %v1293 = vpack.c.b16 %v933, %v928
    %v1294 = vpack.c.b16 %v934, %v929
    %v1295 = vpack.c.b16 %v935, %v930
    %v1296 = vpack.c.b16 %v936, %v931
    %v1297 = vpack.c.b16 %v942, %v937
    %v1298 = vpack.c.b16 %v943, %v938
    %v1299 = vpack.c.b16 %v944, %v939
    %v1300 = vpack.c.b16 %v945, %v940
    %v1301 = vpack.c.b16 %v946, %v941
    %v1302 = vpack.c.b16 %v952, %v947
    %v1303 = vpack.c.b16 %v953, %v948
    %v1304 = vpack.c.b16 %v954, %v949
    %v1305 = vpack.c.b16 %v955, %v950
    %v1306 = vpack.c.b16 %v956, %v951
    %v1307 = vpack.c.b16 %v962, %v957
    %v1308 = vpack.c.b16 %v963, %v958
    %v1309 = vpack.c.b16 %v964, %v959
    %v1310 = vpack.c.b16 %v965, %v960
    %v1311 = vpack.c.b16 %v966, %v961
    %v1312 = vpack.c.b16 %v972, %v967
    %v1313 = vpack.c.b16 %v973, %v968
    %v1314 = vpack.c.b16 %v974, %v969
    %v1315 = vpack.c.b16 %v975, %v970
    %v1316 = vpack.c.b16 %v976, %v971
    %v1317 = vpack.c.b16 %v982, %v977
    %v1318 = vpack.c.b16 %v983, %v978
    %v1319 = vpack.c.b16 %v984, %v979
    %v1320 = vpack.c.b16 %v985, %v980
    %v1321 = vpack.c.b16 %v986, %v981
    %v1322 = vpack.c.b16 %v992, %v987
    %v1323 = vpack.c.b16 %v993, %v988
    %v1324 = vpack.c.b16 %v994, %v989
    %v1325 = vpack.c.b16 %v995, %v990
    %v1326 = vpack.c.b16 %v996, %v991
    %v1327 = vpack.c.b16 %v1002, %v997
    %v1328 = vpack.c.b16 %v1003, %v998
    %v1329 = vpack.c.b16 %v1004, %v999
    %v1330 = vpack.c.b16 %v1005, %v1000
    %v1331 = vpack.c.b16 %v1006, %v1001
    %v1332 = vpack.c.b16 %v1012, %v1007
    %v1333 = vpack.c.b16 %v1013, %v1008
    %v1334 = vpack.c.b16 %v1014, %v1009
    %v1335 = vpack.c.b16 %v1015, %v1010
    %v1336 = vpack.c.b16 %v1016, %v1011
    %v1337 = vpack.c.b16 %v1022, %v1017
    %v1338 = vpack.c.b16 %v1023, %v1018
    %v1339 = vpack.c.b16 %v1024, %v1019
    %v1340 = vpack.c.b16 %v1025, %v1020
    %v1341 = vpack.c.b16 %v1026, %v1021
    %v1342 = vpack.c.b16 %v1032, %v1027
    %v1343 = vpack.c.b16 %v1033, %v1028
    %v1344 = vpack.c.b16 %v1034, %v1029
    %v1345 = vpack.c.b16 %v1035, %v1030
    %v1346 = vpack.c.b16 %v1036, %v1031
    %v1347 = vpack.c.b16 %v1042, %v1037
    %v1348 = vpack.c.b16 %v1043, %v1038
    %v1349 = vpack.c.b16 %v1044, %v1039
    %v1350 = vpack.c.b16 %v1045, %v1040
    %v1351 = vpack.c.b16 %v1046, %v1041
    %v1352 = vpack.c.b16 %v1052, %v1047
    %v1353 = vpack.c.b16 %v1053, %v1048
    %v1354 = vpack.c.b16 %v1054, %v1049
    %v1355 = vpack.c.b16 %v1055, %v1050
    %v1356 = vpack.c.b16 %v1056, %v1051
    %v1357 = vpack.c.b16 %v1062, %v1057
    %v1358 = vpack.c.b16 %v1063, %v1058
    %v1359 = vpack.c.b16 %v1064, %v1059
    %v1360 = vpack.c.b16 %v1065, %v1060
    %v1361 = vpack.c.b16 %v1066, %v1061
    %v1362 = vpack.c.b16 %v1072, %v1067
    %v1363 = vpack.c.b16 %v1073, %v1068
    %v1364 = vpack.c.b16 %v1074, %v1069
    %v1365 = vpack.c.b16 %v1075, %v1070
    %v1366 = vpack.c.b16 %v1076, %v1071
    %v1367 = vpack.c.b16 %v1082, %v1077
    %v1368 = vpack.c.b16 %v1083, %v1078
    %v1369 = vpack.c.b16 %v1084, %v1079
    %v1370 = vpack.c.b16 %v1085, %v1080
    %v1371 = vpack.c.b16 %v1086, %v1081
    %v1372 = vpack.c.b16 %v1092, %v1087
    %v1373 = vpack.c.b16 %v1093, %v1088
    %v1374 = vpack.c.b16 %v1094, %v1089
    %v1375 = vpack.c.b16 %v1095, %v1090
    %v1376 = vpack.c.b16 %v1096, %v1091
    %v1377 = vpack.c.b16 %v1102, %v1097
    %v1378 = vpack.c.b16 %v1103, %v1098
    %v1379 = vpack.c.b16 %v1104, %v1099
    %v1380 = vpack.c.b16 %v1105, %v1100
    %v1381 = vpack.c.b16 %v1106, %v1101
    %v1382 = vpack.c.b16 %v1112, %v1107
    %v1383 = vpack.c.b16 %v1113, %v1108
    %v1384 = vpack.c.b16 %v1114, %v1109
    %v1385 = vpack.c.b16 %v1115, %v1110
    %v1386 = vpack.c.b16 %v1116, %v1111
    %v1387 = vpack.c.b16 %v1122, %v1117
    %v1388 = vpack.c.b16 %v1123, %v1118
    %v1389 = vpack.c.b16 %v1124, %v1119
    %v1390 = vpack.c.b16 %v1125, %v1120
    %v1391 = vpack.c.b16 %v1126, %v1121
    %v1392 = vpack.c.b16 %v1132, %v1127
    %v1393 = vpack.c.b16 %v1133, %v1128
    %v1394 = vpack.c.b16 %v1134, %v1129
    %v1395 = vpack.c.b16 %v1135, %v1130
    %v1396 = vpack.c.b16 %v1136, %v1131
    %v1397 = vpack.c.b16 %v1142, %v1137
    %v1398 = vpack.c.b16 %v1143, %v1138
    %v1399 = vpack.c.b16 %v1144, %v1139
    %v1400 = vpack.c.b16 %v1145, %v1140
    %v1401 = vpack.c.b16 %v1146, %v1141
    %v1402 = vpack.c.b16 %v1152, %v1147
    %v1403 = vpack.c.b16 %v1153, %v1148
    %v1404 = vpack.c.b16 %v1154, %v1149
    %v1405 = vpack.c.b16 %v1155, %v1150
    %v1406 = vpack.c.b16 %v1156, %v1151
    %v1407 = vpack.c.b16 %v1162, %v1157
    %v1408 = vpack.c.b16 %v1163, %v1158
    %v1409 = vpack.c.b16 %v1164, %v1159
    %v1410 = vpack.c.b16 %v1165, %v1160
    %v1411 = vpack.c.b16 %v1166, %v1161
    %vm1657 = vcmask 130048
    %v1659 = vsel %vm1657, %v88, 0
    %1661 = vmatprep.subr.bf16.mxu0 %v1168
    %1662 = vmatpush1.bf16.msra.mxu0 %v1167
    %1663 = vmatprep.subr.bf16.mxu0 %v1173
    %1664 = vmatpush1.bf16.msra.mxu0 %v1172
    %1665 = vmatprep.subr.bf16.mxu0 %v1178
    %1666 = vmatpush1.bf16.msra.mxu0 %v1177
    %1667 = vmatprep.subr.bf16.mxu0 %v1183
    %1668 = vmatpush1.bf16.msra.mxu0 %v1182
    %1669 = vmatprep.subr.bf16.mxu0 %v1188
    %1670 = vmatpush1.bf16.msra.mxu0 %v1187
    %1671 = vmatprep.subr.bf16.mxu0 %v1193
    %1672 = vmatpush1.bf16.msra.mxu0 %v1192
    %1673 = vmatprep.subr.bf16.mxu0 %v1198
    %1674 = vmatpush1.bf16.msra.mxu0 %v1197
    %1675 = vmatprep.subr.bf16.mxu0 %v1203
    %1676 = vmatpush1.bf16.msra.mxu0 %v1202
    %1677 = vmatprep.subr.bf16.mxu0 %v1208
    %1678 = vmatpush1.bf16.msra.mxu0 %v1207
    %1679 = vmatprep.subr.bf16.mxu0 %v1213
    %1680 = vmatpush1.bf16.msra.mxu0 %v1212
    %1681 = vmatprep.subr.bf16.mxu0 %v1218
    %1682 = vmatpush1.bf16.msra.mxu0 %v1217
    %1683 = vmatprep.subr.bf16.mxu0 %v1223
    %1684 = vmatpush1.bf16.msra.mxu0 %v1222
    %1685 = vmatprep.subr.bf16.mxu0 %v1228
    %1686 = vmatpush1.bf16.msra.mxu0 %v1227
    %1687 = vmatprep.subr.bf16.mxu0 %v1233
    %1688 = vmatpush1.bf16.msra.mxu0 %v1232
    %1689 = vmatprep.subr.bf16.mxu0 %v1238
    %1690 = vmatpush1.bf16.msra.mxu0 %v1237
    %1691 = vmatprep.subr.bf16.mxu0 %v1243
    %1692 = vmatpush1.bf16.msra.mxu0 %v1242
    %1693 = vmatprep.mubr.bf16.mxu0 %v83
    %1694 = vmatmul.mubr.bf16.gmra.mrb[0].mxu0 %v82
    %v1695 = vpop.f32.mrb[0].mxu0
    %v1696 = vadd.f32 0.0, %v1695
    %v1697 = vpop.f32.mrb[0].mxu0
    %v1698 = vadd.f32 0.0, %v1697
    %v1699 = vpop.f32.mrb[0].mxu0
    %v1700 = vadd.f32 0.0, %v1699
    %v1701 = vpop.f32.mrb[0].mxu0
    %v1702 = vadd.f32 0.0, %v1701
    %1703 = vdwg.mxu0
    %1704 = vmatprep.subr.bf16.mxu0 %v1248
    %1705 = vmatpush1.bf16.msra.mxu0 %v1247
    %1706 = vmatprep.subr.bf16.mxu0 %v1253
    %1707 = vmatpush1.bf16.msra.mxu0 %v1252
    %1708 = vmatprep.subr.bf16.mxu0 %v1258
    %1709 = vmatpush1.bf16.msra.mxu0 %v1257
    %1710 = vmatprep.subr.bf16.mxu0 %v1263
    %1711 = vmatpush1.bf16.msra.mxu0 %v1262
    %1712 = vmatprep.subr.bf16.mxu0 %v1268
    %1713 = vmatpush1.bf16.msra.mxu0 %v1267
    %1714 = vmatprep.subr.bf16.mxu0 %v1273
    %1715 = vmatpush1.bf16.msra.mxu0 %v1272
    %1716 = vmatprep.subr.bf16.mxu0 %v1278
    %1717 = vmatpush1.bf16.msra.mxu0 %v1277
    %1718 = vmatprep.subr.bf16.mxu0 %v1283
    %1719 = vmatpush1.bf16.msra.mxu0 %v1282
    %1720 = vmatprep.subr.bf16.mxu0 %v1288
    %1721 = vmatpush1.bf16.msra.mxu0 %v1287
    %1722 = vmatprep.subr.bf16.mxu0 %v1293
    %1723 = vmatpush1.bf16.msra.mxu0 %v1292
    %1724 = vmatprep.subr.bf16.mxu0 %v1298
    %1725 = vmatpush1.bf16.msra.mxu0 %v1297
    %1726 = vmatprep.subr.bf16.mxu0 %v1303
    %1727 = vmatpush1.bf16.msra.mxu0 %v1302
    %1728 = vmatprep.subr.bf16.mxu0 %v1308
    %1729 = vmatpush1.bf16.msra.mxu0 %v1307
    %1730 = vmatprep.subr.bf16.mxu0 %v1313
    %1731 = vmatpush1.bf16.msra.mxu0 %v1312
    %1732 = vmatprep.subr.bf16.mxu0 %v1318
    %1733 = vmatpush1.bf16.msra.mxu0 %v1317
    %1734 = vmatprep.subr.bf16.mxu0 %v1323
    %1735 = vmatpush1.bf16.msra.mxu0 %v1322
    %1736 = vmatprep.mubr.bf16.mxu0 %v85
    %1737 = vmatmul.mubr.bf16.gmra.mrb[0].mxu0 %v84
    %v1738 = vpop.f32.mrb[0].mxu0
    %v1739 = vadd.f32 %v1696, %v1738
    %v1740 = vpop.f32.mrb[0].mxu0
    %v1741 = vadd.f32 %v1698, %v1740
    %v1742 = vpop.f32.mrb[0].mxu0
    %v1743 = vadd.f32 %v1700, %v1742
    %v1744 = vpop.f32.mrb[0].mxu0
    %v1745 = vadd.f32 %v1702, %v1744
    %1746 = vdwg.mxu0
    %1747 = vmatprep.subr.bf16.mxu0 %v1328
    %1748 = vmatpush1.bf16.msra.mxu0 %v1327
    %1749 = vmatprep.subr.bf16.mxu0 %v1333
    %1750 = vmatpush1.bf16.msra.mxu0 %v1332
    %1751 = vmatprep.subr.bf16.mxu0 %v1338
    %1752 = vmatpush1.bf16.msra.mxu0 %v1337
    %1753 = vmatprep.subr.bf16.mxu0 %v1343
    %1754 = vmatpush1.bf16.msra.mxu0 %v1342
    %1755 = vmatprep.subr.bf16.mxu0 %v1348
    %1756 = vmatpush1.bf16.msra.mxu0 %v1347
    %1757 = vmatprep.subr.bf16.mxu0 %v1353
    %1758 = vmatpush1.bf16.msra.mxu0 %v1352
    %1759 = vmatprep.subr.bf16.mxu0 %v1358
    %1760 = vmatpush1.bf16.msra.mxu0 %v1357
    %1761 = vmatprep.subr.bf16.mxu0 %v1363
    %1762 = vmatpush1.bf16.msra.mxu0 %v1362
    %1763 = vmatprep.subr.bf16.mxu0 %v1368
    %1764 = vmatpush1.bf16.msra.mxu0 %v1367
    %1765 = vmatprep.subr.bf16.mxu0 %v1373
    %1766 = vmatpush1.bf16.msra.mxu0 %v1372
    %1767 = vmatprep.subr.bf16.mxu0 %v1378
    %1768 = vmatpush1.bf16.msra.mxu0 %v1377
    %1769 = vmatprep.subr.bf16.mxu0 %v1383
    %1770 = vmatpush1.bf16.msra.mxu0 %v1382
    %1771 = vmatprep.subr.bf16.mxu0 %v1388
    %1772 = vmatpush1.bf16.msra.mxu0 %v1387
    %1773 = vmatprep.subr.bf16.mxu0 %v1393
    %1774 = vmatpush1.bf16.msra.mxu0 %v1392
    %1775 = vmatprep.subr.bf16.mxu0 %v1398
    %1776 = vmatpush1.bf16.msra.mxu0 %v1397
    %1777 = vmatprep.subr.bf16.mxu0 %v1403
    %1778 = vmatpush1.bf16.msra.mxu0 %v1402
    %1779 = vmatprep.mubr.bf16.mxu0 %v87
    %1780 = vmatmul.mubr.bf16.gmra.mrb[0].mxu0 %v86
    %v1781 = vpop.f32.mrb[0].mxu0
    %v1782 = vadd.f32 %v1739, %v1781
    %v1783 = vpop.f32.mrb[0].mxu0
    %v1784 = vadd.f32 %v1741, %v1783
    %v1785 = vpop.f32.mrb[0].mxu0
    %v1786 = vadd.f32 %v1743, %v1785
    %v1787 = vpop.f32.mrb[0].mxu0
    %v1788 = vadd.f32 %v1745, %v1787
    %1789 = vdwg.mxu0
    %1790 = vmatprep.subr.bf16.mxu0 %v1408
    %1791 = vmatpush1.bf16.msra.mxu0 %v1407
    %1792 = vmatprep.subr.bf16.mxu0 0
    %1793 = vmatpush1.bf16.msra.mxu0 0
    %1794 = vmatprep.subr.bf16.mxu0 0
    %1795 = vmatpush1.bf16.msra.mxu0 0
    %1796 = vmatprep.subr.bf16.mxu0 0
    %1797 = vmatpush1.bf16.msra.mxu0 0
    %1798 = vmatprep.subr.bf16.mxu0 0
    %1799 = vmatpush1.bf16.msra.mxu0 0
    %1800 = vmatprep.subr.bf16.mxu0 0
    %1801 = vmatpush1.bf16.msra.mxu0 0
    %1802 = vmatprep.subr.bf16.mxu0 0
    %1803 = vmatpush1.bf16.msra.mxu0 0
    %1804 = vmatprep.subr.bf16.mxu0 0
    %1805 = vmatpush1.bf16.msra.mxu0 0
    %1806 = vmatprep.subr.bf16.mxu0 0
    %1807 = vmatpush1.bf16.msra.mxu0 0
    %1808 = vmatprep.subr.bf16.mxu0 0
    %1809 = vmatpush1.bf16.msra.mxu0 0
    %1810 = vmatprep.subr.bf16.mxu0 0
    %1811 = vmatpush1.bf16.msra.mxu0 0
    %1812 = vmatprep.subr.bf16.mxu0 0
    %1813 = vmatpush1.bf16.msra.mxu0 0
    %1814 = vmatprep.subr.bf16.mxu0 0
    %1815 = vmatpush1.bf16.msra.mxu0 0
    %1816 = vmatprep.subr.bf16.mxu0 0
    %1817 = vmatpush1.bf16.msra.mxu0 0
    %1818 = vmatprep.subr.bf16.mxu0 0
    %1819 = vmatpush1.bf16.msra.mxu0 0
    %1820 = vmatprep.subr.bf16.mxu0 0
    %1821 = vmatpush1.bf16.msra.mxu0 0
    %1822 = vmatprep.mubr.bf16.mxu0 0
    %1823 = vmatmul.mubr.bf16.gmra.mrb[0].mxu0 %v1659
    %v1824 = vpop.f32.mrb[0].mxu0
    %v1825 = vadd.f32 %v1782, %v1824
    %v1826 = vpop.f32.mrb[0].mxu0
    %v1827 = vadd.f32 %v1784, %v1826
    %v1828 = vpop.f32.mrb[0].mxu0
    %v1829 = vadd.f32 %v1786, %v1828
    %v1830 = vpop.f32.mrb[0].mxu0
    %v1831 = vadd.f32 %v1788, %v1830
    %1832 = vdwg.mxu0
    %1833 = vmatprep.subr.bf16.mxu0 %v1170
    %1834 = vmatpush1.bf16.msra.mxu0 %v1169
    %1835 = vmatprep.subr.bf16.mxu0 %v1175
    %1836 = vmatpush1.bf16.msra.mxu0 %v1174
    %1837 = vmatprep.subr.bf16.mxu0 %v1180
    %1838 = vmatpush1.bf16.msra.mxu0 %v1179
    %1839 = vmatprep.subr.bf16.mxu0 %v1185
    %1840 = vmatpush1.bf16.msra.mxu0 %v1184
    %1841 = vmatprep.subr.bf16.mxu0 %v1190
    %1842 = vmatpush1.bf16.msra.mxu0 %v1189
    %1843 = vmatprep.subr.bf16.mxu0 %v1195
    %1844 = vmatpush1.bf16.msra.mxu0 %v1194
    %1845 = vmatprep.subr.bf16.mxu0 %v1200
    %1846 = vmatpush1.bf16.msra.mxu0 %v1199
    %1847 = vmatprep.subr.bf16.mxu0 %v1205
    %1848 = vmatpush1.bf16.msra.mxu0 %v1204
    %1849 = vmatprep.subr.bf16.mxu0 %v1210
    %1850 = vmatpush1.bf16.msra.mxu0 %v1209
    %1851 = vmatprep.subr.bf16.mxu0 %v1215
    %1852 = vmatpush1.bf16.msra.mxu0 %v1214
    %1853 = vmatprep.subr.bf16.mxu0 %v1220
    %1854 = vmatpush1.bf16.msra.mxu0 %v1219
    %1855 = vmatprep.subr.bf16.mxu0 %v1225
    %1856 = vmatpush1.bf16.msra.mxu0 %v1224
    %1857 = vmatprep.subr.bf16.mxu0 %v1230
    %1858 = vmatpush1.bf16.msra.mxu0 %v1229
    %1859 = vmatprep.subr.bf16.mxu0 %v1235
    %1860 = vmatpush1.bf16.msra.mxu0 %v1234
    %1861 = vmatprep.subr.bf16.mxu0 %v1240
    %1862 = vmatpush1.bf16.msra.mxu0 %v1239
    %1863 = vmatprep.subr.bf16.mxu0 %v1245
    %1864 = vmatpush1.bf16.msra.mxu0 %v1244
    %1865 = vmatprep.mubr.bf16.mxu0 %v83
    %1866 = vmatmul.mubr.bf16.gmra.mrb[0].mxu0 %v82
    %v1867 = vpop.f32.mrb[0].mxu0
    %v1868 = vadd.f32 0.0, %v1867
    %v1869 = vpop.f32.mrb[0].mxu0
    %v1870 = vadd.f32 0.0, %v1869
    %v1871 = vpop.f32.mrb[0].mxu0
    %v1872 = vadd.f32 0.0, %v1871
    %v1873 = vpop.f32.mrb[0].mxu0
    %v1874 = vadd.f32 0.0, %v1873
    %1875 = vdwg.mxu0
    %1876 = vmatprep.subr.bf16.mxu0 %v1250
    %1877 = vmatpush1.bf16.msra.mxu0 %v1249
    %1878 = vmatprep.subr.bf16.mxu0 %v1255
    %1879 = vmatpush1.bf16.msra.mxu0 %v1254
    %1880 = vmatprep.subr.bf16.mxu0 %v1260
    %1881 = vmatpush1.bf16.msra.mxu0 %v1259
    %1882 = vmatprep.subr.bf16.mxu0 %v1265
    %1883 = vmatpush1.bf16.msra.mxu0 %v1264
    %1884 = vmatprep.subr.bf16.mxu0 %v1270
    %1885 = vmatpush1.bf16.msra.mxu0 %v1269
    %1886 = vmatprep.subr.bf16.mxu0 %v1275
    %1887 = vmatpush1.bf16.msra.mxu0 %v1274
    %1888 = vmatprep.subr.bf16.mxu0 %v1280
    %1889 = vmatpush1.bf16.msra.mxu0 %v1279
    %1890 = vmatprep.subr.bf16.mxu0 %v1285
    %1891 = vmatpush1.bf16.msra.mxu0 %v1284
    %1892 = vmatprep.subr.bf16.mxu0 %v1290
    %1893 = vmatpush1.bf16.msra.mxu0 %v1289
    %1894 = vmatprep.subr.bf16.mxu0 %v1295
    %1895 = vmatpush1.bf16.msra.mxu0 %v1294
    %1896 = vmatprep.subr.bf16.mxu0 %v1300
    %1897 = vmatpush1.bf16.msra.mxu0 %v1299
    %1898 = vmatprep.subr.bf16.mxu0 %v1305
    %1899 = vmatpush1.bf16.msra.mxu0 %v1304
    %1900 = vmatprep.subr.bf16.mxu0 %v1310
    %1901 = vmatpush1.bf16.msra.mxu0 %v1309
    %1902 = vmatprep.subr.bf16.mxu0 %v1315
    %1903 = vmatpush1.bf16.msra.mxu0 %v1314
    %1904 = vmatprep.subr.bf16.mxu0 %v1320
    %1905 = vmatpush1.bf16.msra.mxu0 %v1319
    %1906 = vmatprep.subr.bf16.mxu0 %v1325
    %1907 = vmatpush1.bf16.msra.mxu0 %v1324
    %1908 = vmatprep.mubr.bf16.mxu0 %v85
    %1909 = vmatmul.mubr.bf16.gmra.mrb[0].mxu0 %v84
    %v1910 = vpop.f32.mrb[0].mxu0
    %v1911 = vadd.f32 %v1868, %v1910
    %v1912 = vpop.f32.mrb[0].mxu0
    %v1913 = vadd.f32 %v1870, %v1912
    %v1914 = vpop.f32.mrb[0].mxu0
    %v1915 = vadd.f32 %v1872, %v1914
    %v1916 = vpop.f32.mrb[0].mxu0
    %v1917 = vadd.f32 %v1874, %v1916
    %1918 = vdwg.mxu0
    %1919 = vmatprep.subr.bf16.mxu0 %v1330
    %1920 = vmatpush1.bf16.msra.mxu0 %v1329
    %1921 = vmatprep.subr.bf16.mxu0 %v1335
    %1922 = vmatpush1.bf16.msra.mxu0 %v1334
    %1923 = vmatprep.subr.bf16.mxu0 %v1340
    %1924 = vmatpush1.bf16.msra.mxu0 %v1339
    %1925 = vmatprep.subr.bf16.mxu0 %v1345
    %1926 = vmatpush1.bf16.msra.mxu0 %v1344
    %1927 = vmatprep.subr.bf16.mxu0 %v1350
    %1928 = vmatpush1.bf16.msra.mxu0 %v1349
    %1929 = vmatprep.subr.bf16.mxu0 %v1355
    %1930 = vmatpush1.bf16.msra.mxu0 %v1354
    %1931 = vmatprep.subr.bf16.mxu0 %v1360
    %1932 = vmatpush1.bf16.msra.mxu0 %v1359
    %1933 = vmatprep.subr.bf16.mxu0 %v1365
    %1934 = vmatpush1.bf16.msra.mxu0 %v1364
    %1935 = vmatprep.subr.bf16.mxu0 %v1370
    %1936 = vmatpush1.bf16.msra.mxu0 %v1369
    %1937 = vmatprep.subr.bf16.mxu0 %v1375
    %1938 = vmatpush1.bf16.msra.mxu0 %v1374
    %1939 = vmatprep.subr.bf16.mxu0 %v1380
    %1940 = vmatpush1.bf16.msra.mxu0 %v1379
    %1941 = vmatprep.subr.bf16.mxu0 %v1385
    %1942 = vmatpush1.bf16.msra.mxu0 %v1384
    %1943 = vmatprep.subr.bf16.mxu0 %v1390
    %1944 = vmatpush1.bf16.msra.mxu0 %v1389
    %1945 = vmatprep.subr.bf16.mxu0 %v1395
    %1946 = vmatpush1.bf16.msra.mxu0 %v1394
    %1947 = vmatprep.subr.bf16.mxu0 %v1400
    %1948 = vmatpush1.bf16.msra.mxu0 %v1399
    %1949 = vmatprep.subr.bf16.mxu0 %v1405
    %1950 = vmatpush1.bf16.msra.mxu0 %v1404
    %1951 = vmatprep.mubr.bf16.mxu0 %v87
    %1952 = vmatmul.mubr.bf16.gmra.mrb[0].mxu0 %v86
    %v1953 = vpop.f32.mrb[0].mxu0
    %v1954 = vadd.f32 %v1911, %v1953
    %v1955 = vpop.f32.mrb[0].mxu0
    %v1956 = vadd.f32 %v1913, %v1955
    %v1957 = vpop.f32.mrb[0].mxu0
    %v1958 = vadd.f32 %v1915, %v1957
    %v1959 = vpop.f32.mrb[0].mxu0
    %v1960 = vadd.f32 %v1917, %v1959
    %1961 = vdwg.mxu0
    %1962 = vmatprep.subr.bf16.mxu0 %v1410
    %1963 = vmatpush1.bf16.msra.mxu0 %v1409
    %1964 = vmatprep.subr.bf16.mxu0 0
    %1965 = vmatpush1.bf16.msra.mxu0 0
    %1966 = vmatprep.subr.bf16.mxu0 0
    %1967 = vmatpush1.bf16.msra.mxu0 0
    %1968 = vmatprep.subr.bf16.mxu0 0
    %1969 = vmatpush1.bf16.msra.mxu0 0
    %1970 = vmatprep.subr.bf16.mxu0 0
    %1971 = vmatpush1.bf16.msra.mxu0 0
    %1972 = vmatprep.subr.bf16.mxu0 0
    %1973 = vmatpush1.bf16.msra.mxu0 0
    %1974 = vmatprep.subr.bf16.mxu0 0
    %1975 = vmatpush1.bf16.msra.mxu0 0
    %1976 = vmatprep.subr.bf16.mxu0 0
    %1977 = vmatpush1.bf16.msra.mxu0 0
    %1978 = vmatprep.subr.bf16.mxu0 0
    %1979 = vmatpush1.bf16.msra.mxu0 0
    %1980 = vmatprep.subr.bf16.mxu0 0
    %1981 = vmatpush1.bf16.msra.mxu0 0
    %1982 = vmatprep.subr.bf16.mxu0 0
    %1983 = vmatpush1.bf16.msra.mxu0 0
    %1984 = vmatprep.subr.bf16.mxu0 0
    %1985 = vmatpush1.bf16.msra.mxu0 0
    %1986 = vmatprep.subr.bf16.mxu0 0
    %1987 = vmatpush1.bf16.msra.mxu0 0
    %1988 = vmatprep.subr.bf16.mxu0 0
    %1989 = vmatpush1.bf16.msra.mxu0 0
    %1990 = vmatprep.subr.bf16.mxu0 0
    %1991 = vmatpush1.bf16.msra.mxu0 0
    %1992 = vmatprep.subr.bf16.mxu0 0
    %1993 = vmatpush1.bf16.msra.mxu0 0
    %1994 = vmatprep.mubr.bf16.mxu0 0
    %1995 = vmatmul.mubr.bf16.gmra.mrb[0].mxu0 %v1659
    %v1996 = vpop.f32.mrb[0].mxu0
    %v1997 = vadd.f32 %v1954, %v1996
    %v1998 = vpop.f32.mrb[0].mxu0
    %v1999 = vadd.f32 %v1956, %v1998
    %v2000 = vpop.f32.mrb[0].mxu0
    %v2001 = vadd.f32 %v1958, %v2000
    %v2002 = vpop.f32.mrb[0].mxu0
    %v2003 = vadd.f32 %v1960, %v2002
    %2004 = vdwg.mxu0
    %2005 = vmatprep.subr.bf16.mxu0 0
    %2006 = vmatpush1.bf16.msra.mxu0 %v1171
    %2007 = vmatprep.subr.bf16.mxu0 0
    %2008 = vmatpush1.bf16.msra.mxu0 %v1176
    %2009 = vmatprep.subr.bf16.mxu0 0
    %2010 = vmatpush1.bf16.msra.mxu0 %v1181
    %2011 = vmatprep.subr.bf16.mxu0 0
    %2012 = vmatpush1.bf16.msra.mxu0 %v1186
    %2013 = vmatprep.subr.bf16.mxu0 0
    %2014 = vmatpush1.bf16.msra.mxu0 %v1191
    %2015 = vmatprep.subr.bf16.mxu0 0
    %2016 = vmatpush1.bf16.msra.mxu0 %v1196
    %2017 = vmatprep.subr.bf16.mxu0 0
    %2018 = vmatpush1.bf16.msra.mxu0 %v1201
    %2019 = vmatprep.subr.bf16.mxu0 0
    %2020 = vmatpush1.bf16.msra.mxu0 %v1206
    %2021 = vmatprep.subr.bf16.mxu0 0
    %2022 = vmatpush1.bf16.msra.mxu0 %v1211
    %2023 = vmatprep.subr.bf16.mxu0 0
    %2024 = vmatpush1.bf16.msra.mxu0 %v1216
    %2025 = vmatprep.subr.bf16.mxu0 0
    %2026 = vmatpush1.bf16.msra.mxu0 %v1221
    %2027 = vmatprep.subr.bf16.mxu0 0
    %2028 = vmatpush1.bf16.msra.mxu0 %v1226
    %2029 = vmatprep.subr.bf16.mxu0 0
    %2030 = vmatpush1.bf16.msra.mxu0 %v1231
    %2031 = vmatprep.subr.bf16.mxu0 0
    %2032 = vmatpush1.bf16.msra.mxu0 %v1236
    %2033 = vmatprep.subr.bf16.mxu0 0
    %2034 = vmatpush1.bf16.msra.mxu0 %v1241
    %2035 = vmatprep.subr.bf16.mxu0 0
    %2036 = vmatpush1.bf16.msra.mxu0 %v1246
    %2037 = vmatprep.mubr.bf16.mxu0 %v83
    %2038 = vmatmul.mubr.bf16.gmra.mrb[0].mxu0 %v82
    %v2039 = vpop.f32.mrb[0].mxu0
    %v2040 = vadd.f32 0.0, %v2039
    %v2041 = vpop.f32.mrb[0].mxu0
    %v2042 = vpop.f32.mrb[0].mxu0
    %v2043 = vadd.f32 0.0, %v2042
    %v2044 = vpop.f32.mrb[0].mxu0
    %2045 = vdwg.mxu0
    %2046 = vmatprep.subr.bf16.mxu0 0
    %2047 = vmatpush1.bf16.msra.mxu0 %v1251
    %2048 = vmatprep.subr.bf16.mxu0 0
    %2049 = vmatpush1.bf16.msra.mxu0 %v1256
    %2050 = vmatprep.subr.bf16.mxu0 0
    %2051 = vmatpush1.bf16.msra.mxu0 %v1261
    %2052 = vmatprep.subr.bf16.mxu0 0
    %2053 = vmatpush1.bf16.msra.mxu0 %v1266
    %2054 = vmatprep.subr.bf16.mxu0 0
    %2055 = vmatpush1.bf16.msra.mxu0 %v1271
    %2056 = vmatprep.subr.bf16.mxu0 0
    %2057 = vmatpush1.bf16.msra.mxu0 %v1276
    %2058 = vmatprep.subr.bf16.mxu0 0
    %2059 = vmatpush1.bf16.msra.mxu0 %v1281
    %2060 = vmatprep.subr.bf16.mxu0 0
    %2061 = vmatpush1.bf16.msra.mxu0 %v1286
    %2062 = vmatprep.subr.bf16.mxu0 0
    %2063 = vmatpush1.bf16.msra.mxu0 %v1291
    %2064 = vmatprep.subr.bf16.mxu0 0
    %2065 = vmatpush1.bf16.msra.mxu0 %v1296
    %2066 = vmatprep.subr.bf16.mxu0 0
    %2067 = vmatpush1.bf16.msra.mxu0 %v1301
    %2068 = vmatprep.subr.bf16.mxu0 0
    %2069 = vmatpush1.bf16.msra.mxu0 %v1306
    %2070 = vmatprep.subr.bf16.mxu0 0
    %2071 = vmatpush1.bf16.msra.mxu0 %v1311
    %2072 = vmatprep.subr.bf16.mxu0 0
    %2073 = vmatpush1.bf16.msra.mxu0 %v1316
    %2074 = vmatprep.subr.bf16.mxu0 0
    %2075 = vmatpush1.bf16.msra.mxu0 %v1321
    %2076 = vmatprep.subr.bf16.mxu0 0
    %2077 = vmatpush1.bf16.msra.mxu0 %v1326
    %2078 = vmatprep.mubr.bf16.mxu0 %v85
    %2079 = vmatmul.mubr.bf16.gmra.mrb[0].mxu0 %v84
    %v2080 = vpop.f32.mrb[0].mxu0
    %v2081 = vadd.f32 %v2040, %v2080
    %v2082 = vpop.f32.mrb[0].mxu0
    %v2083 = vpop.f32.mrb[0].mxu0
    %v2084 = vadd.f32 %v2043, %v2083
    %v2085 = vpop.f32.mrb[0].mxu0
    %2086 = vdwg.mxu0
    %2087 = vmatprep.subr.bf16.mxu0 0
    %2088 = vmatpush1.bf16.msra.mxu0 %v1331
    %2089 = vmatprep.subr.bf16.mxu0 0
    %2090 = vmatpush1.bf16.msra.mxu0 %v1336
    %2091 = vmatprep.subr.bf16.mxu0 0
    %2092 = vmatpush1.bf16.msra.mxu0 %v1341
    %2093 = vmatprep.subr.bf16.mxu0 0
    %2094 = vmatpush1.bf16.msra.mxu0 %v1346
    %2095 = vmatprep.subr.bf16.mxu0 0
    %2096 = vmatpush1.bf16.msra.mxu0 %v1351
    %2097 = vmatprep.subr.bf16.mxu0 0
    %2098 = vmatpush1.bf16.msra.mxu0 %v1356
    %2099 = vmatprep.subr.bf16.mxu0 0
    %2100 = vmatpush1.bf16.msra.mxu0 %v1361
    %2101 = vmatprep.subr.bf16.mxu0 0
    %2102 = vmatpush1.bf16.msra.mxu0 %v1366
    %2103 = vmatprep.subr.bf16.mxu0 0
    %2104 = vmatpush1.bf16.msra.mxu0 %v1371
    %2105 = vmatprep.subr.bf16.mxu0 0
    %2106 = vmatpush1.bf16.msra.mxu0 %v1376
    %2107 = vmatprep.subr.bf16.mxu0 0
    %2108 = vmatpush1.bf16.msra.mxu0 %v1381
    %2109 = vmatprep.subr.bf16.mxu0 0
    %2110 = vmatpush1.bf16.msra.mxu0 %v1386
    %2111 = vmatprep.subr.bf16.mxu0 0
    %2112 = vmatpush1.bf16.msra.mxu0 %v1391
    %2113 = vmatprep.subr.bf16.mxu0 0
    %2114 = vmatpush1.bf16.msra.mxu0 %v1396
    %2115 = vmatprep.subr.bf16.mxu0 0
    %2116 = vmatpush1.bf16.msra.mxu0 %v1401
    %2117 = vmatprep.subr.bf16.mxu0 0
    %2118 = vmatpush1.bf16.msra.mxu0 %v1406
    %2119 = vmatprep.mubr.bf16.mxu0 %v87
    %2120 = vmatmul.mubr.bf16.gmra.mrb[0].mxu0 %v86
    %v2121 = vpop.f32.mrb[0].mxu0
    %v2122 = vadd.f32 %v2081, %v2121
    %v2123 = vpop.f32.mrb[0].mxu0
    %v2124 = vpop.f32.mrb[0].mxu0
    %v2125 = vadd.f32 %v2084, %v2124
    %v2126 = vpop.f32.mrb[0].mxu0
    %2127 = vdwg.mxu0
    %2128 = vmatprep.subr.bf16.mxu0 0
    %2129 = vmatpush1.bf16.msra.mxu0 %v1411
    %2130 = vmatprep.subr.bf16.mxu0 0
    %2131 = vmatpush1.bf16.msra.mxu0 0
    %2132 = vmatprep.subr.bf16.mxu0 0
    %2133 = vmatpush1.bf16.msra.mxu0 0
    %2134 = vmatprep.subr.bf16.mxu0 0
    %2135 = vmatpush1.bf16.msra.mxu0 0
    %2136 = vmatprep.subr.bf16.mxu0 0
    %2137 = vmatpush1.bf16.msra.mxu0 0
    %2138 = vmatprep.subr.bf16.mxu0 0
    %2139 = vmatpush1.bf16.msra.mxu0 0
    %2140 = vmatprep.subr.bf16.mxu0 0
    %2141 = vmatpush1.bf16.msra.mxu0 0
    %2142 = vmatprep.subr.bf16.mxu0 0
    %2143 = vmatpush1.bf16.msra.mxu0 0
    %2144 = vmatprep.subr.bf16.mxu0 0
    %2145 = vmatpush1.bf16.msra.mxu0 0
    %2146 = vmatprep.subr.bf16.mxu0 0
    %2147 = vmatpush1.bf16.msra.mxu0 0
    %2148 = vmatprep.subr.bf16.mxu0 0
    %2149 = vmatpush1.bf16.msra.mxu0 0
    %2150 = vmatprep.subr.bf16.mxu0 0
    %2151 = vmatpush1.bf16.msra.mxu0 0
    %2152 = vmatprep.subr.bf16.mxu0 0
    %2153 = vmatpush1.bf16.msra.mxu0 0
    %2154 = vmatprep.subr.bf16.mxu0 0
    %2155 = vmatpush1.bf16.msra.mxu0 0
    %2156 = vmatprep.subr.bf16.mxu0 0
    %2157 = vmatpush1.bf16.msra.mxu0 0
    %2158 = vmatprep.subr.bf16.mxu0 0
    %2159 = vmatpush1.bf16.msra.mxu0 0
    %2160 = vmatprep.mubr.bf16.mxu0 0
    %2161 = vmatmul.mubr.bf16.gmra.mrb[0].mxu0 %v1659
    %v2162 = vpop.f32.mrb[0].mxu0
    %v2163 = vadd.f32 %v2122, %v2162
    %v2164 = vpop.f32.mrb[0].mxu0
    %v2165 = vpop.f32.mrb[0].mxu0
    %v2166 = vadd.f32 %v2125, %v2165
    %v2167 = vpop.f32.mrb[0].mxu0
    %2168 = vdwg.mxu0
    %v2169 = vpack.c.bf16 %v1829, %v1825
    %v2170 = vpack.c.bf16 %v1831, %v1827
    %v2171 = vpack.c.bf16 %v2001, %v1997
    %v2172 = vpack.c.bf16 %v2003, %v1999
    %v2173 = vpack.c.bf16 %v2166, %v2163
    %v2174 = vld [vmem:[%s2] sm:$0x1f]
    %v2176 = vcombine.high %v2174, %v2174
    %v2178 = vunpack.c.l.s4 1966171168
    %v2179 = vunpack.c.0.s8 %v2178
    %v2180 = vlaneseq
    %v2181 = vshrl.u32 %v2180, 7
    %v2182 = vsub.s32 %v2179, %v2181
    %v2183 = vrot.slane %v2174, %v2182
    %v2185 = vunpack.c.l.s4 1966171168
    %v2186 = vunpack.c.0.s8 %v2185
    %v2187 = vlaneseq
    %v2188 = vshrl.u32 %v2187, 7
    %v2189 = vsub.s32 %v2186, %v2188
    %v2190 = vrot.slane %v2176, %v2189
    %v2191 = vcombine.high %v2183, %v2183
    %v2193 = vunpack.c.l.s4 1966171168
    %v2194 = vunpack.c.0.s8 %v2193
    %v2195 = vlaneseq
    %v2196 = vshrl.u32 %v2195, 7
    %v2197 = vsub.s32 %v2194, %v2196
    %v2198 = vrot.slane %v2183, %v2197
    %v2200 = vunpack.c.l.s4 1966171168
    %v2201 = vunpack.c.0.s8 %v2200
    %v2202 = vlaneseq
    %v2203 = vshrl.u32 %v2202, 7
    %v2204 = vsub.s32 %v2201, %v2203
    %v2205 = vrot.slane %v2190, %v2204
    %v2207 = vunpack.c.l.s4 1966171168
    %v2208 = vunpack.c.0.s8 %v2207
    %v2209 = vlaneseq
    %v2210 = vshrl.u32 %v2209, 7
    %v2211 = vsub.s32 %v2208, %v2210
    %v2212 = vrot.slane %v2191, %v2211
    %v2213 = vcombine.high %v2198, %v2198
    %v2214 = vcombine.high %v2212, %v2212
    %v2216 = vpack.i.b16 %v2198, %v2198
    %v2218 = vlaneseq
    %v2219 = vshrl.u32 %v2218, 7
    %v2220 = vsub.s32 0, %v2219
    %v2221 = vrot.slane %v2216, %v2220
    %v2223 = vpack.i.b16 %v2212, %v2212
    %v2225 = vlaneseq
    %v2226 = vshrl.u32 %v2225, 7
    %v2227 = vsub.s32 0, %v2226
    %v2228 = vrot.slane %v2223, %v2227
    %v2230 = vpack.i.b16 %v2213, %v2213
    %v2232 = vlaneseq
    %v2233 = vshrl.u32 %v2232, 7
    %v2234 = vsub.s32 0, %v2233
    %v2235 = vrot.slane %v2230, %v2234
    %v2237 = vpack.i.b16 %v2214, %v2214
    %v2239 = vlaneseq
    %v2240 = vshrl.u32 %v2239, 7
    %v2241 = vsub.s32 0, %v2240
    %v2242 = vrot.slane %v2237, %v2241
    %v2244 = vpack.i.b16 %v2205, %v2205
    %v2246 = vlaneseq
    %v2247 = vshrl.u32 %v2246, 7
    %v2248 = vsub.s32 0, %v2247
    %v2249 = vrot.slane %v2244, %v2248
    %v2250 = vadd.bf16 %v2169, %v2221
    %v2251 = vadd.bf16 %v2170, %v2228
    %v2252 = vadd.bf16 %v2171, %v2235
    %v2253 = vadd.bf16 %v2172, %v2242
    %v2254 = vadd.bf16 %v2173, %v2249
    %v2255 = vmax.bf16 %v2250, 0
    %v2256 = vmax.bf16 %v2251, 0
    %v2257 = vmax.bf16 %v2252, 0
    %v2258 = vmax.bf16 %v2253, 0
    %v2259 = vmax.bf16 %v2254, 0
    %v2260 = vld [vmem:[#allocation5] sm:$0xff]
    %v2261 = vld [vmem:[#allocation5 + $0x8] sm:$0xf]
    %v2262 = vld [vmem:[#allocation5 + $0xc] sm:$0xff]
    %v2263 = vld [vmem:[#allocation5 + $0x14] sm:$0xf]
    %v2264 = vld [vmem:[#allocation5 + $0x18] sm:$0xff]
    %v2265 = vld [vmem:[#allocation5 + $0x20] sm:$0xf]
    %v2266 = vld [vmem:[#allocation5 + $0x24] sm:$0xff]
    %v2267 = vld [vmem:[#allocation5 + $0x2c] sm:$0xf]
    %v2268 = vld [vmem:[#allocation5 + $0x30] sm:$0xff]
    %v2269 = vld [vmem:[#allocation5 + $0x38] sm:$0xf]
    %v2270 = vld [vmem:[#allocation5 + $0x3c] sm:$0xff]
    %v2271 = vld [vmem:[#allocation5 + $0x44] sm:$0xf]
    %v2272 = vld [vmem:[#allocation5 + $0x48] sm:$0xff]
    %v2273 = vld [vmem:[#allocation5 + $0x50] sm:$0xf]
    %v2274 = vld [vmem:[#allocation5 + $0x54] sm:$0xff]
    %v2275 = vld [vmem:[#allocation5 + $0x5c] sm:$0xf]
    %v2276 = vld [vmem:[#allocation5 + $0x60] sm:$0xff]
    %v2277 = vld [vmem:[#allocation5 + $0x68] sm:$0xf]
    %v2278 = vld [vmem:[#allocation5 + $0x6c] sm:$0xff]
    %v2279 = vld [vmem:[#allocation5 + $0x74] sm:$0xf]
    %v2280 = vld [vmem:[#allocation5 + $0x78] sm:$0xff]
    %v2281 = vld [vmem:[#allocation5 + $0x80] sm:$0xf]
    %v2282 = vld [vmem:[#allocation5 + $0x84] sm:$0xff]
    %v2283 = vld [vmem:[#allocation5 + $0x8c] sm:$0xf]
    %v2284 = vld [vmem:[#allocation5 + $0x90] sm:$0xff]
    %v2285 = vld [vmem:[#allocation5 + $0x98] sm:$0xf]
    %v2286 = vld [vmem:[#allocation5 + $0x9c] sm:$0xff]
    %v2287 = vld [vmem:[#allocation5 + $0xa4] sm:$0xf]
    %v2288 = vld [vmem:[#allocation5 + $0xa8] sm:$0xff]
    %v2289 = vld [vmem:[#allocation5 + $0xb0] sm:$0xf]
    %v2290 = vld [vmem:[#allocation5 + $0xb4] sm:$0xff]
    %v2291 = vld [vmem:[#allocation5 + $0xbc] sm:$0xf]
    %v2292 = vld [vmem:[#allocation5 + $0xc0] sm:$0xff]
    %v2293 = vld [vmem:[#allocation5 + $0xc8] sm:$0xf]
    %v2294 = vld [vmem:[#allocation5 + $0xcc] sm:$0xff]
    %v2295 = vld [vmem:[#allocation5 + $0xd4] sm:$0xf]
    %v2296 = vld [vmem:[#allocation5 + $0xd8] sm:$0xff]
    %v2297 = vld [vmem:[#allocation5 + $0xe0] sm:$0xf]
    %v2298 = vld [vmem:[#allocation5 + $0xe4] sm:$0xff]
    %v2299 = vld [vmem:[#allocation5 + $0xec] sm:$0xf]
    %v2300 = vld [vmem:[#allocation5 + $0xf0] sm:$0xff]
    %v2301 = vld [vmem:[#allocation5 + $0xf8] sm:$0xf]
    %v2302 = vld [vmem:[#allocation5 + $0xfc] sm:$0xff]
    %v2303 = vld [vmem:[#allocation5 + $0x104] sm:$0xf]
    %v2304 = vld [vmem:[#allocation5 + $0x108] sm:$0xff]
    %v2305 = vld [vmem:[#allocation5 + $0x110] sm:$0xf]
    %v2306 = vld [vmem:[#allocation5 + $0x114] sm:$0xff]
    %v2307 = vld [vmem:[#allocation5 + $0x11c] sm:$0xf]
    %v2308 = vld [vmem:[#allocation5 + $0x120] sm:$0xff]
    %v2309 = vld [vmem:[#allocation5 + $0x128] sm:$0xf]
    %v2310 = vld [vmem:[#allocation5 + $0x12c] sm:$0xff]
    %v2311 = vld [vmem:[#allocation5 + $0x134] sm:$0xf]
    %v2312 = vld [vmem:[#allocation5 + $0x138] sm:$0xff]
    %v2313 = vld [vmem:[#allocation5 + $0x140] sm:$0xf]
    %v2314 = vld [vmem:[#allocation5 + $0x144] sm:$0xff]
    %v2315 = vld [vmem:[#allocation5 + $0x14c] sm:$0xf]
    %v2316 = vld [vmem:[#allocation5 + $0x150] sm:$0xff]
    %v2317 = vld [vmem:[#allocation5 + $0x158] sm:$0xf]
    %v2318 = vld [vmem:[#allocation5 + $0x15c] sm:$0xff]
    %v2319 = vld [vmem:[#allocation5 + $0x164] sm:$0xf]
    %v2320 = vld [vmem:[#allocation5 + $0x168] sm:$0xff]
    %v2321 = vld [vmem:[#allocation5 + $0x170] sm:$0xf]
    %v2322 = vld [vmem:[#allocation5 + $0x174] sm:$0xff]
    %v2323 = vld [vmem:[#allocation5 + $0x17c] sm:$0xf]
    %v2324 = vld [vmem:[#allocation5 + $0x180] sm:$0xff]
    %v2325 = vld [vmem:[#allocation5 + $0x188] sm:$0xf]
    %v2326 = vld [vmem:[#allocation5 + $0x18c] sm:$0xff]
    %v2327 = vld [vmem:[#allocation5 + $0x194] sm:$0xf]
    %v2328 = vld [vmem:[#allocation5 + $0x198] sm:$0xff]
    %v2329 = vld [vmem:[#allocation5 + $0x1a0] sm:$0xf]
    %v2330 = vld [vmem:[#allocation5 + $0x1a4] sm:$0xff]
    %v2331 = vld [vmem:[#allocation5 + $0x1ac] sm:$0xf]
    %v2332 = vld [vmem:[#allocation5 + $0x1b0] sm:$0xff]
    %v2333 = vld [vmem:[#allocation5 + $0x1b8] sm:$0xf]
    %v2334 = vld [vmem:[#allocation5 + $0x1bc] sm:$0xff]
    %v2335 = vld [vmem:[#allocation5 + $0x1c4] sm:$0xf]
    %v2336 = vld [vmem:[#allocation5 + $0x1c8] sm:$0xff]
    %v2337 = vld [vmem:[#allocation5 + $0x1d0] sm:$0xf]
    %v2338 = vld [vmem:[#allocation5 + $0x1d4] sm:$0xff]
    %v2339 = vld [vmem:[#allocation5 + $0x1dc] sm:$0xf]
    %v2340 = vld [vmem:[#allocation5 + $0x1e0] sm:$0xff]
    %v2341 = vld [vmem:[#allocation5 + $0x1e8] sm:$0xf]
    %v2342 = vld [vmem:[#allocation5 + $0x1ec] sm:$0xff]
    %v2343 = vld [vmem:[#allocation5 + $0x1f4] sm:$0xf]
    %v2344 = vld [vmem:[#allocation5 + $0x1f8] sm:$0xff]
    %v2345 = vld [vmem:[#allocation5 + $0x200] sm:$0xf]
    %v2346 = vld [vmem:[#allocation5 + $0x204] sm:$0xff]
    %v2347 = vld [vmem:[#allocation5 + $0x20c] sm:$0xf]
    %v2348 = vld [vmem:[#allocation5 + $0x210] sm:$0xff]
    %v2349 = vld [vmem:[#allocation5 + $0x218] sm:$0xf]
    %v2350 = vld [vmem:[#allocation5 + $0x21c] sm:$0xff]
    %v2351 = vld [vmem:[#allocation5 + $0x224] sm:$0xf]
    %v2352 = vld [vmem:[#allocation5 + $0x228] sm:$0xff]
    %v2353 = vld [vmem:[#allocation5 + $0x230] sm:$0xf]
    %v2354 = vld [vmem:[#allocation5 + $0x234] sm:$0xff]
    %v2355 = vld [vmem:[#allocation5 + $0x23c] sm:$0xf]
    %v2356 = vld [vmem:[#allocation5 + $0x240] sm:$0xff]
    %v2357 = vld [vmem:[#allocation5 + $0x248] sm:$0xf]
    %v2358 = vld [vmem:[#allocation5 + $0x24c] sm:$0xff]
    %v2359 = vld [vmem:[#allocation5 + $0x254] sm:$0xf]
    %v2360 = vld [vmem:[#allocation5 + $0x258] sm:$0xff]
    %v2361 = vld [vmem:[#allocation5 + $0x260] sm:$0xf]
    %v2362 = vld [vmem:[#allocation5 + $0x264] sm:$0xff]
    %v2363 = vld [vmem:[#allocation5 + $0x26c] sm:$0xf]
    %v2364 = vld [vmem:[#allocation5 + $0x270] sm:$0xff]
    %v2365 = vld [vmem:[#allocation5 + $0x278] sm:$0xf]
    %v2366 = vld [vmem:[#allocation5 + $0x27c] sm:$0xff]
    %v2367 = vld [vmem:[#allocation5 + $0x284] sm:$0xf]
    %v2368 = vld [vmem:[#allocation5 + $0x288] sm:$0xff]
    %v2369 = vld [vmem:[#allocation5 + $0x290] sm:$0xf]
    %v2370 = vld [vmem:[#allocation5 + $0x294] sm:$0xff]
    %v2371 = vld [vmem:[#allocation5 + $0x29c] sm:$0xf]
    %v2372 = vld [vmem:[#allocation5 + $0x2a0] sm:$0xff]
    %v2373 = vld [vmem:[#allocation5 + $0x2a8] sm:$0xf]
    %v2374 = vld [vmem:[#allocation5 + $0x2ac] sm:$0xff]
    %v2375 = vld [vmem:[#allocation5 + $0x2b4] sm:$0xf]
    %v2376 = vld [vmem:[#allocation5 + $0x2b8] sm:$0xff]
    %v2377 = vld [vmem:[#allocation5 + $0x2c0] sm:$0xf]
    %v2378 = vld [vmem:[#allocation5 + $0x2c4] sm:$0xff]
    %v2379 = vld [vmem:[#allocation5 + $0x2cc] sm:$0xf]
    %v2380 = vld [vmem:[#allocation5 + $0x2d0] sm:$0xff]
    %v2381 = vld [vmem:[#allocation5 + $0x2d8] sm:$0xf]
    %v2382 = vld [vmem:[#allocation5 + $0x2dc] sm:$0xff]
    %v2383 = vld [vmem:[#allocation5 + $0x2e4] sm:$0xf]
    %v2384 = vld [vmem:[#allocation5 + $0x2e8] sm:$0xff]
    %v2385 = vld [vmem:[#allocation5 + $0x2f0] sm:$0xf]
    %v2386 = vld [vmem:[#allocation5 + $0x2f4] sm:$0xff]
    %v2387 = vld [vmem:[#allocation5 + $0x2fc] sm:$0xf]
    %v2388 = vld [vmem:[#allocation5 + $0x300] sm:$0xff]
    %v2389 = vld [vmem:[#allocation5 + $0x308] sm:$0xf]
    %v2390 = vld [vmem:[#allocation5 + $0x30c] sm:$0xff]
    %v2391 = vld [vmem:[#allocation5 + $0x314] sm:$0xf]
    %v2392 = vld [vmem:[#allocation5 + $0x318] sm:$0xff]
    %v2393 = vld [vmem:[#allocation5 + $0x320] sm:$0xf]
    %v2394 = vld [vmem:[#allocation5 + $0x324] sm:$0xff]
    %v2395 = vld [vmem:[#allocation5 + $0x32c] sm:$0xf]
    %v2396 = vld [vmem:[#allocation5 + $0x330] sm:$0xff]
    %v2397 = vld [vmem:[#allocation5 + $0x338] sm:$0xf]
    %v2398 = vld [vmem:[#allocation5 + $0x33c] sm:$0xff]
    %v2399 = vld [vmem:[#allocation5 + $0x344] sm:$0xf]
    %v2400 = vld [vmem:[#allocation5 + $0x348] sm:$0xff]
    %v2401 = vld [vmem:[#allocation5 + $0x350] sm:$0xf]
    %v2402 = vld [vmem:[#allocation5 + $0x354] sm:$0xff]
    %v2403 = vld [vmem:[#allocation5 + $0x35c] sm:$0xf]
    %v2404 = vld [vmem:[#allocation5 + $0x360] sm:$0xff]
    %v2405 = vld [vmem:[#allocation5 + $0x368] sm:$0xf]
    %v2406 = vld [vmem:[#allocation5 + $0x36c] sm:$0xff]
    %v2407 = vld [vmem:[#allocation5 + $0x374] sm:$0xf]
    %v2408 = vld [vmem:[#allocation5 + $0x378] sm:$0xff]
    %v2409 = vld [vmem:[#allocation5 + $0x380] sm:$0xf]
    %v2410 = vld [vmem:[#allocation5 + $0x384] sm:$0xff]
    %v2411 = vld [vmem:[#allocation5 + $0x38c] sm:$0xf]
    %v2412 = vld [vmem:[#allocation5 + $0x390] sm:$0xff]
    %v2413 = vld [vmem:[#allocation5 + $0x398] sm:$0xf]
    %v2414 = vld [vmem:[#allocation5 + $0x39c] sm:$0xff]
    %v2415 = vld [vmem:[#allocation5 + $0x3a4] sm:$0xf]
    %v2416 = vld [vmem:[#allocation5 + $0x3a8] sm:$0xff]
    %v2417 = vld [vmem:[#allocation5 + $0x3b0] sm:$0xf]
    %v2418 = vld [vmem:[#allocation5 + $0x3b4] sm:$0xff]
    %v2419 = vld [vmem:[#allocation5 + $0x3bc] sm:$0xf]
    %v2580 = vunpack.c.l.b16 %v2260
    %v2581 = vunpack.c.h.b16 %v2260
    %v2582 = vunpack.c.l.b16 %v2261
    %v2583 = vunpack.c.l.b16 %v2262
    %v2584 = vunpack.c.h.b16 %v2262
    %v2585 = vunpack.c.l.b16 %v2263
    %v2586 = vunpack.c.l.b16 %v2264
    %v2587 = vunpack.c.h.b16 %v2264
    %v2588 = vunpack.c.l.b16 %v2265
    %v2589 = vunpack.c.l.b16 %v2266
    %v2590 = vunpack.c.h.b16 %v2266
    %v2591 = vunpack.c.l.b16 %v2267
    %v2592 = vunpack.c.l.b16 %v2268
    %v2593 = vunpack.c.h.b16 %v2268
    %v2594 = vunpack.c.l.b16 %v2269
    %v2595 = vunpack.c.l.b16 %v2270
    %v2596 = vunpack.c.h.b16 %v2270
    %v2597 = vunpack.c.l.b16 %v2271
    %v2598 = vunpack.c.l.b16 %v2272
    %v2599 = vunpack.c.h.b16 %v2272
    %v2600 = vunpack.c.l.b16 %v2273
    %v2601 = vunpack.c.l.b16 %v2274
    %v2602 = vunpack.c.h.b16 %v2274
    %v2603 = vunpack.c.l.b16 %v2275
    %v2604 = vunpack.c.l.b16 %v2276
    %v2605 = vunpack.c.h.b16 %v2276
    %v2606 = vunpack.c.l.b16 %v2277
    %v2607 = vunpack.c.l.b16 %v2278
    %v2608 = vunpack.c.h.b16 %v2278
    %v2609 = vunpack.c.l.b16 %v2279
    %v2610 = vunpack.c.l.b16 %v2280
    %v2611 = vunpack.c.h.b16 %v2280
    %v2612 = vunpack.c.l.b16 %v2281
    %v2613 = vunpack.c.l.b16 %v2282
    %v2614 = vunpack.c.h.b16 %v2282
    %v2615 = vunpack.c.l.b16 %v2283
    %v2616 = vunpack.c.l.b16 %v2284
    %v2617 = vunpack.c.h.b16 %v2284
    %v2618 = vunpack.c.l.b16 %v2285
    %v2619 = vunpack.c.l.b16 %v2286
    %v2620 = vunpack.c.h.b16 %v2286
    %v2621 = vunpack.c.l.b16 %v2287
    %v2622 = vunpack.c.l.b16 %v2288
    %v2623 = vunpack.c.h.b16 %v2288
    %v2624 = vunpack.c.l.b16 %v2289
    %v2625 = vunpack.c.l.b16 %v2290
    %v2626 = vunpack.c.h.b16 %v2290
    %v2627 = vunpack.c.l.b16 %v2291
    %v2628 = vunpack.c.l.b16 %v2292
    %v2629 = vunpack.c.h.b16 %v2292
    %v2630 = vunpack.c.l.b16 %v2293
    %v2631 = vunpack.c.l.b16 %v2294
    %v2632 = vunpack.c.h.b16 %v2294
    %v2633 = vunpack.c.l.b16 %v2295
    %v2634 = vunpack.c.l.b16 %v2296
    %v2635 = vunpack.c.h.b16 %v2296
    %v2636 = vunpack.c.l.b16 %v2297
    %v2637 = vunpack.c.l.b16 %v2298
    %v2638 = vunpack.c.h.b16 %v2298
    %v2639 = vunpack.c.l.b16 %v2299
    %v2640 = vunpack.c.l.b16 %v2300
    %v2641 = vunpack.c.h.b16 %v2300
    %v2642 = vunpack.c.l.b16 %v2301
    %v2643 = vunpack.c.l.b16 %v2302
    %v2644 = vunpack.c.h.b16 %v2302
    %v2645 = vunpack.c.l.b16 %v2303
    %v2646 = vunpack.c.l.b16 %v2304
    %v2647 = vunpack.c.h.b16 %v2304
    %v2648 = vunpack.c.l.b16 %v2305
    %v2649 = vunpack.c.l.b16 %v2306
    %v2650 = vunpack.c.h.b16 %v2306
    %v2651 = vunpack.c.l.b16 %v2307
    %v2652 = vunpack.c.l.b16 %v2308
    %v2653 = vunpack.c.h.b16 %v2308
    %v2654 = vunpack.c.l.b16 %v2309
    %v2655 = vunpack.c.l.b16 %v2310
    %v2656 = vunpack.c.h.b16 %v2310
    %v2657 = vunpack.c.l.b16 %v2311
    %v2658 = vunpack.c.l.b16 %v2312
    %v2659 = vunpack.c.h.b16 %v2312
    %v2660 = vunpack.c.l.b16 %v2313
    %v2661 = vunpack.c.l.b16 %v2314
    %v2662 = vunpack.c.h.b16 %v2314
    %v2663 = vunpack.c.l.b16 %v2315
    %v2664 = vunpack.c.l.b16 %v2316
    %v2665 = vunpack.c.h.b16 %v2316
    %v2666 = vunpack.c.l.b16 %v2317
    %v2667 = vunpack.c.l.b16 %v2318
    %v2668 = vunpack.c.h.b16 %v2318
    %v2669 = vunpack.c.l.b16 %v2319
    %v2670 = vunpack.c.l.b16 %v2320
    %v2671 = vunpack.c.h.b16 %v2320
    %v2672 = vunpack.c.l.b16 %v2321
    %v2673 = vunpack.c.l.b16 %v2322
    %v2674 = vunpack.c.h.b16 %v2322
    %v2675 = vunpack.c.l.b16 %v2323
    %v2676 = vunpack.c.l.b16 %v2324
    %v2677 = vunpack.c.h.b16 %v2324
    %v2678 = vunpack.c.l.b16 %v2325
    %v2679 = vunpack.c.l.b16 %v2326
    %v2680 = vunpack.c.h.b16 %v2326
    %v2681 = vunpack.c.l.b16 %v2327
    %v2682 = vunpack.c.l.b16 %v2328
    %v2683 = vunpack.c.h.b16 %v2328
    %v2684 = vunpack.c.l.b16 %v2329
    %v2685 = vunpack.c.l.b16 %v2330
    %v2686 = vunpack.c.h.b16 %v2330
    %v2687 = vunpack.c.l.b16 %v2331
    %v2688 = vunpack.c.l.b16 %v2332
    %v2689 = vunpack.c.h.b16 %v2332
    %v2690 = vunpack.c.l.b16 %v2333
    %v2691 = vunpack.c.l.b16 %v2334
    %v2692 = vunpack.c.h.b16 %v2334
    %v2693 = vunpack.c.l.b16 %v2335
    %v2694 = vunpack.c.l.b16 %v2336
    %v2695 = vunpack.c.h.b16 %v2336
    %v2696 = vunpack.c.l.b16 %v2337
    %v2697 = vunpack.c.l.b16 %v2338
    %v2698 = vunpack.c.h.b16 %v2338
    %v2699 = vunpack.c.l.b16 %v2339
    %v2700 = vunpack.c.l.b16 %v2340
    %v2701 = vunpack.c.h.b16 %v2340
    %v2702 = vunpack.c.l.b16 %v2341
    %v2703 = vunpack.c.l.b16 %v2342
    %v2704 = vunpack.c.h.b16 %v2342
    %v2705 = vunpack.c.l.b16 %v2343
    %v2706 = vunpack.c.l.b16 %v2344
    %v2707 = vunpack.c.h.b16 %v2344
    %v2708 = vunpack.c.l.b16 %v2345
    %v2709 = vunpack.c.l.b16 %v2346
    %v2710 = vunpack.c.h.b16 %v2346
    %v2711 = vunpack.c.l.b16 %v2347
    %v2712 = vunpack.c.l.b16 %v2348
    %v2713 = vunpack.c.h.b16 %v2348
    %v2714 = vunpack.c.l.b16 %v2349
    %v2715 = vunpack.c.l.b16 %v2350
    %v2716 = vunpack.c.h.b16 %v2350
    %v2717 = vunpack.c.l.b16 %v2351
    %v2718 = vunpack.c.l.b16 %v2352
    %v2719 = vunpack.c.h.b16 %v2352
    %v2720 = vunpack.c.l.b16 %v2353
    %v2721 = vunpack.c.l.b16 %v2354
    %v2722 = vunpack.c.h.b16 %v2354
    %v2723 = vunpack.c.l.b16 %v2355
    %v2724 = vunpack.c.l.b16 %v2356
    %v2725 = vunpack.c.h.b16 %v2356
    %v2726 = vunpack.c.l.b16 %v2357
    %v2727 = vunpack.c.l.b16 %v2358
    %v2728 = vunpack.c.h.b16 %v2358
    %v2729 = vunpack.c.l.b16 %v2359
    %v2730 = vunpack.c.l.b16 %v2360
    %v2731 = vunpack.c.h.b16 %v2360
    %v2732 = vunpack.c.l.b16 %v2361
    %v2733 = vunpack.c.l.b16 %v2362
    %v2734 = vunpack.c.h.b16 %v2362
    %v2735 = vunpack.c.l.b16 %v2363
    %v2736 = vunpack.c.l.b16 %v2364
    %v2737 = vunpack.c.h.b16 %v2364
    %v2738 = vunpack.c.l.b16 %v2365
    %v2739 = vunpack.c.l.b16 %v2366
    %v2740 = vunpack.c.h.b16 %v2366
    %v2741 = vunpack.c.l.b16 %v2367
    %v2742 = vunpack.c.l.b16 %v2368
    %v2743 = vunpack.c.h.b16 %v2368
    %v2744 = vunpack.c.l.b16 %v2369
    %v2745 = vunpack.c.l.b16 %v2370
    %v2746 = vunpack.c.h.b16 %v2370
    %v2747 = vunpack.c.l.b16 %v2371
    %v2748 = vunpack.c.l.b16 %v2372
    %v2749 = vunpack.c.h.b16 %v2372
    %v2750 = vunpack.c.l.b16 %v2373
    %v2751 = vunpack.c.l.b16 %v2374
    %v2752 = vunpack.c.h.b16 %v2374
    %v2753 = vunpack.c.l.b16 %v2375
    %v2754 = vunpack.c.l.b16 %v2376
    %v2755 = vunpack.c.h.b16 %v2376
    %v2756 = vunpack.c.l.b16 %v2377
    %v2757 = vunpack.c.l.b16 %v2378
    %v2758 = vunpack.c.h.b16 %v2378
    %v2759 = vunpack.c.l.b16 %v2379
    %v2760 = vunpack.c.l.b16 %v2380
    %v2761 = vunpack.c.h.b16 %v2380
    %v2762 = vunpack.c.l.b16 %v2381
    %v2763 = vunpack.c.l.b16 %v2382
    %v2764 = vunpack.c.h.b16 %v2382
    %v2765 = vunpack.c.l.b16 %v2383
    %v2766 = vunpack.c.l.b16 %v2384
    %v2767 = vunpack.c.h.b16 %v2384
    %v2768 = vunpack.c.l.b16 %v2385
    %v2769 = vunpack.c.l.b16 %v2386
    %v2770 = vunpack.c.h.b16 %v2386
    %v2771 = vunpack.c.l.b16 %v2387
    %v2772 = vunpack.c.l.b16 %v2388
    %v2773 = vunpack.c.h.b16 %v2388
    %v2774 = vunpack.c.l.b16 %v2389
    %v2775 = vunpack.c.l.b16 %v2390
    %v2776 = vunpack.c.h.b16 %v2390
    %v2777 = vunpack.c.l.b16 %v2391
    %v2778 = vunpack.c.l.b16 %v2392
    %v2779 = vunpack.c.h.b16 %v2392
    %v2780 = vunpack.c.l.b16 %v2393
    %v2781 = vunpack.c.l.b16 %v2394
    %v2782 = vunpack.c.h.b16 %v2394
    %v2783 = vunpack.c.l.b16 %v2395
    %v2784 = vunpack.c.l.b16 %v2396
    %v2785 = vunpack.c.h.b16 %v2396
    %v2786 = vunpack.c.l.b16 %v2397
    %v2787 = vunpack.c.l.b16 %v2398
    %v2788 = vunpack.c.h.b16 %v2398
    %v2789 = vunpack.c.l.b16 %v2399
    %v2790 = vunpack.c.l.b16 %v2400
    %v2791 = vunpack.c.h.b16 %v2400
    %v2792 = vunpack.c.l.b16 %v2401
    %v2793 = vunpack.c.l.b16 %v2402
    %v2794 = vunpack.c.h.b16 %v2402
    %v2795 = vunpack.c.l.b16 %v2403
    %v2796 = vunpack.c.l.b16 %v2404
    %v2797 = vunpack.c.h.b16 %v2404
    %v2798 = vunpack.c.l.b16 %v2405
    %v2799 = vunpack.c.l.b16 %v2406
    %v2800 = vunpack.c.h.b16 %v2406
    %v2801 = vunpack.c.l.b16 %v2407
    %v2802 = vunpack.c.l.b16 %v2408
    %v2803 = vunpack.c.h.b16 %v2408
    %v2804 = vunpack.c.l.b16 %v2409
    %v2805 = vunpack.c.l.b16 %v2410
    %v2806 = vunpack.c.h.b16 %v2410
    %v2807 = vunpack.c.l.b16 %v2411
    %v2808 = vunpack.c.l.b16 %v2412
    %v2809 = vunpack.c.h.b16 %v2412
    %v2810 = vunpack.c.l.b16 %v2413
    %v2811 = vunpack.c.l.b16 %v2414
    %v2812 = vunpack.c.h.b16 %v2414
    %v2813 = vunpack.c.l.b16 %v2415
    %v2814 = vunpack.c.l.b16 %v2416
    %v2815 = vunpack.c.h.b16 %v2416
    %v2816 = vunpack.c.l.b16 %v2417
    %v2817 = vunpack.c.l.b16 %v2418
    %v2818 = vunpack.c.h.b16 %v2418
    %v2819 = vunpack.c.l.b16 %v2419
    %v2820 = vpack.c.b16 %v2583, %v2580
    %v2821 = vpack.c.b16 %v2584, %v2581
    %v2822 = vpack.c.b16 %v2585, %v2582
    %v2823 = vpack.c.b16 %v2589, %v2586
    %v2824 = vpack.c.b16 %v2590, %v2587
    %v2825 = vpack.c.b16 %v2591, %v2588
    %v2826 = vpack.c.b16 %v2595, %v2592
    %v2827 = vpack.c.b16 %v2596, %v2593
    %v2828 = vpack.c.b16 %v2597, %v2594
    %v2829 = vpack.c.b16 %v2601, %v2598
    %v2830 = vpack.c.b16 %v2602, %v2599
    %v2831 = vpack.c.b16 %v2603, %v2600
    %v2832 = vpack.c.b16 %v2607, %v2604
    %v2833 = vpack.c.b16 %v2608, %v2605
    %v2834 = vpack.c.b16 %v2609, %v2606
    %v2835 = vpack.c.b16 %v2613, %v2610
    %v2836 = vpack.c.b16 %v2614, %v2611
    %v2837 = vpack.c.b16 %v2615, %v2612
    %v2838 = vpack.c.b16 %v2619, %v2616
    %v2839 = vpack.c.b16 %v2620, %v2617
    %v2840 = vpack.c.b16 %v2621, %v2618
    %v2841 = vpack.c.b16 %v2625, %v2622
    %v2842 = vpack.c.b16 %v2626, %v2623
    %v2843 = vpack.c.b16 %v2627, %v2624
    %v2844 = vpack.c.b16 %v2631, %v2628
    %v2845 = vpack.c.b16 %v2632, %v2629
    %v2846 = vpack.c.b16 %v2633, %v2630
    %v2847 = vpack.c.b16 %v2637, %v2634
    %v2848 = vpack.c.b16 %v2638, %v2635
    %v2849 = vpack.c.b16 %v2639, %v2636
    %v2850 = vpack.c.b16 %v2643, %v2640
    %v2851 = vpack.c.b16 %v2644, %v2641
    %v2852 = vpack.c.b16 %v2645, %v2642
    %v2853 = vpack.c.b16 %v2649, %v2646
    %v2854 = vpack.c.b16 %v2650, %v2647
    %v2855 = vpack.c.b16 %v2651, %v2648
    %v2856 = vpack.c.b16 %v2655, %v2652
    %v2857 = vpack.c.b16 %v2656, %v2653
    %v2858 = vpack.c.b16 %v2657, %v2654
    %v2859 = vpack.c.b16 %v2661, %v2658
    %v2860 = vpack.c.b16 %v2662, %v2659
    %v2861 = vpack.c.b16 %v2663, %v2660
    %v2862 = vpack.c.b16 %v2667, %v2664
    %v2863 = vpack.c.b16 %v2668, %v2665
    %v2864 = vpack.c.b16 %v2669, %v2666
    %v2865 = vpack.c.b16 %v2673, %v2670
    %v2866 = vpack.c.b16 %v2674, %v2671
    %v2867 = vpack.c.b16 %v2675, %v2672
    %v2868 = vpack.c.b16 %v2679, %v2676
    %v2869 = vpack.c.b16 %v2680, %v2677
    %v2870 = vpack.c.b16 %v2681, %v2678
    %v2871 = vpack.c.b16 %v2685, %v2682
    %v2872 = vpack.c.b16 %v2686, %v2683
    %v2873 = vpack.c.b16 %v2687, %v2684
    %v2874 = vpack.c.b16 %v2691, %v2688
    %v2875 = vpack.c.b16 %v2692, %v2689
    %v2876 = vpack.c.b16 %v2693, %v2690
    %v2877 = vpack.c.b16 %v2697, %v2694
    %v2878 = vpack.c.b16 %v2698, %v2695
    %v2879 = vpack.c.b16 %v2699, %v2696
    %v2880 = vpack.c.b16 %v2703, %v2700
    %v2881 = vpack.c.b16 %v2704, %v2701
    %v2882 = vpack.c.b16 %v2705, %v2702
    %v2883 = vpack.c.b16 %v2709, %v2706
    %v2884 = vpack.c.b16 %v2710, %v2707
    %v2885 = vpack.c.b16 %v2711, %v2708
    %v2886 = vpack.c.b16 %v2715, %v2712
    %v2887 = vpack.c.b16 %v2716, %v2713
    %v2888 = vpack.c.b16 %v2717, %v2714
    %v2889 = vpack.c.b16 %v2721, %v2718
    %v2890 = vpack.c.b16 %v2722, %v2719
    %v2891 = vpack.c.b16 %v2723, %v2720
    %v2892 = vpack.c.b16 %v2727, %v2724
    %v2893 = vpack.c.b16 %v2728, %v2725
    %v2894 = vpack.c.b16 %v2729, %v2726
    %v2895 = vpack.c.b16 %v2733, %v2730
    %v2896 = vpack.c.b16 %v2734, %v2731
    %v2897 = vpack.c.b16 %v2735, %v2732
    %v2898 = vpack.c.b16 %v2739, %v2736
    %v2899 = vpack.c.b16 %v2740, %v2737
    %v2900 = vpack.c.b16 %v2741, %v2738
    %v2901 = vpack.c.b16 %v2745, %v2742
    %v2902 = vpack.c.b16 %v2746, %v2743
    %v2903 = vpack.c.b16 %v2747, %v2744
    %v2904 = vpack.c.b16 %v2751, %v2748
    %v2905 = vpack.c.b16 %v2752, %v2749
    %v2906 = vpack.c.b16 %v2753, %v2750
    %v2907 = vpack.c.b16 %v2757, %v2754
    %v2908 = vpack.c.b16 %v2758, %v2755
    %v2909 = vpack.c.b16 %v2759, %v2756
    %v2910 = vpack.c.b16 %v2763, %v2760
    %v2911 = vpack.c.b16 %v2764, %v2761
    %v2912 = vpack.c.b16 %v2765, %v2762
    %v2913 = vpack.c.b16 %v2769, %v2766
    %v2914 = vpack.c.b16 %v2770, %v2767
    %v2915 = vpack.c.b16 %v2771, %v2768
    %v2916 = vpack.c.b16 %v2775, %v2772
    %v2917 = vpack.c.b16 %v2776, %v2773
    %v2918 = vpack.c.b16 %v2777, %v2774
    %v2919 = vpack.c.b16 %v2781, %v2778
    %v2920 = vpack.c.b16 %v2782, %v2779
    %v2921 = vpack.c.b16 %v2783, %v2780
    %v2922 = vpack.c.b16 %v2787, %v2784
    %v2923 = vpack.c.b16 %v2788, %v2785
    %v2924 = vpack.c.b16 %v2789, %v2786
    %v2925 = vpack.c.b16 %v2793, %v2790
    %v2926 = vpack.c.b16 %v2794, %v2791
    %v2927 = vpack.c.b16 %v2795, %v2792
    %v2928 = vpack.c.b16 %v2799, %v2796
    %v2929 = vpack.c.b16 %v2800, %v2797
    %v2930 = vpack.c.b16 %v2801, %v2798
    %v2931 = vpack.c.b16 %v2805, %v2802
    %v2932 = vpack.c.b16 %v2806, %v2803
    %v2933 = vpack.c.b16 %v2807, %v2804
    %v2934 = vpack.c.b16 %v2811, %v2808
    %v2935 = vpack.c.b16 %v2812, %v2809
    %v2936 = vpack.c.b16 %v2813, %v2810
    %v2937 = vpack.c.b16 %v2817, %v2814
    %v2938 = vpack.c.b16 %v2818, %v2815
    %v2939 = vpack.c.b16 %v2819, %v2816
    %3060 = vmatprep.subr.bf16.mxu0 %v2821
    %3061 = vmatpush1.bf16.msra.mxu0 %v2820
    %3062 = vmatprep.subr.bf16.mxu0 %v2824
    %3063 = vmatpush1.bf16.msra.mxu0 %v2823
    %3064 = vmatprep.subr.bf16.mxu0 %v2827
    %3065 = vmatpush1.bf16.msra.mxu0 %v2826
    %3066 = vmatprep.subr.bf16.mxu0 %v2830
    %3067 = vmatpush1.bf16.msra.mxu0 %v2829
    %3068 = vmatprep.subr.bf16.mxu0 %v2833
    %3069 = vmatpush1.bf16.msra.mxu0 %v2832
    %3070 = vmatprep.subr.bf16.mxu0 %v2836
    %3071 = vmatpush1.bf16.msra.mxu0 %v2835
    %3072 = vmatprep.subr.bf16.mxu0 %v2839
    %3073 = vmatpush1.bf16.msra.mxu0 %v2838
    %3074 = vmatprep.subr.bf16.mxu0 %v2842
    %3075 = vmatpush1.bf16.msra.mxu0 %v2841
    %3076 = vmatprep.subr.bf16.mxu0 %v2845
    %3077 = vmatpush1.bf16.msra.mxu0 %v2844
    %3078 = vmatprep.subr.bf16.mxu0 %v2848
    %3079 = vmatpush1.bf16.msra.mxu0 %v2847
    %3080 = vmatprep.subr.bf16.mxu0 %v2851
    %3081 = vmatpush1.bf16.msra.mxu0 %v2850
    %3082 = vmatprep.subr.bf16.mxu0 %v2854
    %3083 = vmatpush1.bf16.msra.mxu0 %v2853
    %3084 = vmatprep.subr.bf16.mxu0 %v2857
    %3085 = vmatpush1.bf16.msra.mxu0 %v2856
    %3086 = vmatprep.subr.bf16.mxu0 %v2860
    %3087 = vmatpush1.bf16.msra.mxu0 %v2859
    %3088 = vmatprep.subr.bf16.mxu0 %v2863
    %3089 = vmatpush1.bf16.msra.mxu0 %v2862
    %3090 = vmatprep.subr.bf16.mxu0 %v2866
    %3091 = vmatpush1.bf16.msra.mxu0 %v2865
    %3092 = vmatprep.mubr.bf16.mxu0 %v2256
    %3093 = vmatmul.mubr.bf16.gmra.mrb[0].mxu0 %v2255
    %v3094 = vpop.f32.mrb[0].mxu0
    %v3095 = vadd.f32 0.0, %v3094
    %v3096 = vpop.f32.mrb[0].mxu0
    %v3097 = vadd.f32 0.0, %v3096
    %v3098 = vpop.f32.mrb[0].mxu0
    %v3099 = vadd.f32 0.0, %v3098
    %v3100 = vpop.f32.mrb[0].mxu0
    %v3101 = vadd.f32 0.0, %v3100
    %3102 = vdwg.mxu0
    %3103 = vmatprep.subr.bf16.mxu0 %v2869
    %3104 = vmatpush1.bf16.msra.mxu0 %v2868
    %3105 = vmatprep.subr.bf16.mxu0 %v2872
    %3106 = vmatpush1.bf16.msra.mxu0 %v2871
    %3107 = vmatprep.subr.bf16.mxu0 %v2875
    %3108 = vmatpush1.bf16.msra.mxu0 %v2874
    %3109 = vmatprep.subr.bf16.mxu0 %v2878
    %3110 = vmatpush1.bf16.msra.mxu0 %v2877
    %3111 = vmatprep.subr.bf16.mxu0 %v2881
    %3112 = vmatpush1.bf16.msra.mxu0 %v2880
    %3113 = vmatprep.subr.bf16.mxu0 %v2884
    %3114 = vmatpush1.bf16.msra.mxu0 %v2883
    %3115 = vmatprep.subr.bf16.mxu0 %v2887
    %3116 = vmatpush1.bf16.msra.mxu0 %v2886
    %3117 = vmatprep.subr.bf16.mxu0 %v2890
    %3118 = vmatpush1.bf16.msra.mxu0 %v2889
    %3119 = vmatprep.subr.bf16.mxu0 %v2893
    %3120 = vmatpush1.bf16.msra.mxu0 %v2892
    %3121 = vmatprep.subr.bf16.mxu0 %v2896
    %3122 = vmatpush1.bf16.msra.mxu0 %v2895
    %3123 = vmatprep.subr.bf16.mxu0 %v2899
    %3124 = vmatpush1.bf16.msra.mxu0 %v2898
    %3125 = vmatprep.subr.bf16.mxu0 %v2902
    %3126 = vmatpush1.bf16.msra.mxu0 %v2901
    %3127 = vmatprep.subr.bf16.mxu0 %v2905
    %3128 = vmatpush1.bf16.msra.mxu0 %v2904
    %3129 = vmatprep.subr.bf16.mxu0 %v2908
    %3130 = vmatpush1.bf16.msra.mxu0 %v2907
    %3131 = vmatprep.subr.bf16.mxu0 %v2911
    %3132 = vmatpush1.bf16.msra.mxu0 %v2910
    %3133 = vmatprep.subr.bf16.mxu0 %v2914
    %3134 = vmatpush1.bf16.msra.mxu0 %v2913
    %3135 = vmatprep.mubr.bf16.mxu0 %v2258
    %3136 = vmatmul.mubr.bf16.gmra.mrb[0].mxu0 %v2257
    %v3137 = vpop.f32.mrb[0].mxu0
    %v3138 = vadd.f32 %v3095, %v3137
    %v3139 = vpop.f32.mrb[0].mxu0
    %v3140 = vadd.f32 %v3097, %v3139
    %v3141 = vpop.f32.mrb[0].mxu0
    %v3142 = vadd.f32 %v3099, %v3141
    %v3143 = vpop.f32.mrb[0].mxu0
    %v3144 = vadd.f32 %v3101, %v3143
    %3145 = vdwg.mxu0
    %3146 = vmatprep.subr.bf16.mxu0 %v2917
    %3147 = vmatpush1.bf16.msra.mxu0 %v2916
    %3148 = vmatprep.subr.bf16.mxu0 %v2920
    %3149 = vmatpush1.bf16.msra.mxu0 %v2919
    %3150 = vmatprep.subr.bf16.mxu0 %v2923
    %3151 = vmatpush1.bf16.msra.mxu0 %v2922
    %3152 = vmatprep.subr.bf16.mxu0 %v2926
    %3153 = vmatpush1.bf16.msra.mxu0 %v2925
    %3154 = vmatprep.subr.bf16.mxu0 %v2929
    %3155 = vmatpush1.bf16.msra.mxu0 %v2928
    %3156 = vmatprep.subr.bf16.mxu0 %v2932
    %3157 = vmatpush1.bf16.msra.mxu0 %v2931
    %3158 = vmatprep.subr.bf16.mxu0 %v2935
    %3159 = vmatpush1.bf16.msra.mxu0 %v2934
    %3160 = vmatprep.subr.bf16.mxu0 %v2938
    %3161 = vmatpush1.bf16.msra.mxu0 %v2937
    %3162 = vmatprep.subr.bf16.mxu0 0
    %3163 = vmatpush1.bf16.msra.mxu0 0
    %3164 = vmatprep.subr.bf16.mxu0 0
    %3165 = vmatpush1.bf16.msra.mxu0 0
    %3166 = vmatprep.subr.bf16.mxu0 0
    %3167 = vmatpush1.bf16.msra.mxu0 0
    %3168 = vmatprep.subr.bf16.mxu0 0
    %3169 = vmatpush1.bf16.msra.mxu0 0
    %3170 = vmatprep.subr.bf16.mxu0 0
    %3171 = vmatpush1.bf16.msra.mxu0 0
    %3172 = vmatprep.subr.bf16.mxu0 0
    %3173 = vmatpush1.bf16.msra.mxu0 0
    %3174 = vmatprep.subr.bf16.mxu0 0
    %3175 = vmatpush1.bf16.msra.mxu0 0
    %3176 = vmatprep.subr.bf16.mxu0 0
    %3177 = vmatpush1.bf16.msra.mxu0 0
    %3178 = vmatprep.mubr.bf16.mxu0 0
    %3179 = vmatmul.mubr.bf16.gmra.mrb[0].mxu0 %v2259
    %v3180 = vpop.f32.mrb[0].mxu0
    %v3181 = vadd.f32 %v3138, %v3180
    %v3182 = vpop.f32.mrb[0].mxu0
    %v3183 = vadd.f32 %v3140, %v3182
    %v3184 = vpop.f32.mrb[0].mxu0
    %v3185 = vadd.f32 %v3142, %v3184
    %v3186 = vpop.f32.mrb[0].mxu0
    %v3187 = vadd.f32 %v3144, %v3186
    %3188 = vdwg.mxu0
    %3189 = vmatprep.subr.bf16.mxu0 0
    %3190 = vmatpush1.bf16.msra.mxu0 %v2822
    %3191 = vmatprep.subr.bf16.mxu0 0
    %3192 = vmatpush1.bf16.msra.mxu0 %v2825
    %3193 = vmatprep.subr.bf16.mxu0 0
    %3194 = vmatpush1.bf16.msra.mxu0 %v2828
    %3195 = vmatprep.subr.bf16.mxu0 0
    %3196 = vmatpush1.bf16.msra.mxu0 %v2831
    %3197 = vmatprep.subr.bf16.mxu0 0
    %3198 = vmatpush1.bf16.msra.mxu0 %v2834
    %3199 = vmatprep.subr.bf16.mxu0 0
    %3200 = vmatpush1.bf16.msra.mxu0 %v2837
    %3201 = vmatprep.subr.bf16.mxu0 0
    %3202 = vmatpush1.bf16.msra.mxu0 %v2840
    %3203 = vmatprep.subr.bf16.mxu0 0
    %3204 = vmatpush1.bf16.msra.mxu0 %v2843
    %3205 = vmatprep.subr.bf16.mxu0 0
    %3206 = vmatpush1.bf16.msra.mxu0 %v2846
    %3207 = vmatprep.subr.bf16.mxu0 0
    %3208 = vmatpush1.bf16.msra.mxu0 %v2849
    %3209 = vmatprep.subr.bf16.mxu0 0
    %3210 = vmatpush1.bf16.msra.mxu0 %v2852
    %3211 = vmatprep.subr.bf16.mxu0 0
    %3212 = vmatpush1.bf16.msra.mxu0 %v2855
    %3213 = vmatprep.subr.bf16.mxu0 0
    %3214 = vmatpush1.bf16.msra.mxu0 %v2858
    %3215 = vmatprep.subr.bf16.mxu0 0
    %3216 = vmatpush1.bf16.msra.mxu0 %v2861
    %3217 = vmatprep.subr.bf16.mxu0 0
    %3218 = vmatpush1.bf16.msra.mxu0 %v2864
    %3219 = vmatprep.subr.bf16.mxu0 0
    %3220 = vmatpush1.bf16.msra.mxu0 %v2867
    %3221 = vmatprep.mubr.bf16.mxu0 %v2256
    %3222 = vmatmul.mubr.bf16.gmra.mrb[0].mxu0 %v2255
    %v3223 = vpop.f32.mrb[0].mxu0
    %v3224 = vadd.f32 0.0, %v3223
    %v3225 = vpop.f32.mrb[0].mxu0
    %v3226 = vpop.f32.mrb[0].mxu0
    %v3227 = vadd.f32 0.0, %v3226
    %v3228 = vpop.f32.mrb[0].mxu0
    %3229 = vdwg.mxu0
    %3230 = vmatprep.subr.bf16.mxu0 0
    %3231 = vmatpush1.bf16.msra.mxu0 %v2870
    %3232 = vmatprep.subr.bf16.mxu0 0
    %3233 = vmatpush1.bf16.msra.mxu0 %v2873
    %3234 = vmatprep.subr.bf16.mxu0 0
    %3235 = vmatpush1.bf16.msra.mxu0 %v2876
    %3236 = vmatprep.subr.bf16.mxu0 0
    %3237 = vmatpush1.bf16.msra.mxu0 %v2879
    %3238 = vmatprep.subr.bf16.mxu0 0
    %3239 = vmatpush1.bf16.msra.mxu0 %v2882
    %3240 = vmatprep.subr.bf16.mxu0 0
    %3241 = vmatpush1.bf16.msra.mxu0 %v2885
    %3242 = vmatprep.subr.bf16.mxu0 0
    %3243 = vmatpush1.bf16.msra.mxu0 %v2888
    %3244 = vmatprep.subr.bf16.mxu0 0
    %3245 = vmatpush1.bf16.msra.mxu0 %v2891
    %3246 = vmatprep.subr.bf16.mxu0 0
    %3247 = vmatpush1.bf16.msra.mxu0 %v2894
    %3248 = vmatprep.subr.bf16.mxu0 0
    %3249 = vmatpush1.bf16.msra.mxu0 %v2897
    %3250 = vmatprep.subr.bf16.mxu0 0
    %3251 = vmatpush1.bf16.msra.mxu0 %v2900
    %3252 = vmatprep.subr.bf16.mxu0 0
    %3253 = vmatpush1.bf16.msra.mxu0 %v2903
    %3254 = vmatprep.subr.bf16.mxu0 0
    %3255 = vmatpush1.bf16.msra.mxu0 %v2906
    %3256 = vmatprep.subr.bf16.mxu0 0
    %3257 = vmatpush1.bf16.msra.mxu0 %v2909
    %3258 = vmatprep.subr.bf16.mxu0 0
    %3259 = vmatpush1.bf16.msra.mxu0 %v2912
    %3260 = vmatprep.subr.bf16.mxu0 0
    %3261 = vmatpush1.bf16.msra.mxu0 %v2915
    %3262 = vmatprep.mubr.bf16.mxu0 %v2258
    %3263 = vmatmul.mubr.bf16.gmra.mrb[0].mxu0 %v2257
    %v3264 = vpop.f32.mrb[0].mxu0
    %v3265 = vadd.f32 %v3224, %v3264
    %v3266 = vpop.f32.mrb[0].mxu0
    %v3267 = vpop.f32.mrb[0].mxu0
    %v3268 = vadd.f32 %v3227, %v3267
    %v3269 = vpop.f32.mrb[0].mxu0
    %3270 = vdwg.mxu0
    %3271 = vmatprep.subr.bf16.mxu0 0
    %3272 = vmatpush1.bf16.msra.mxu0 %v2918
    %3273 = vmatprep.subr.bf16.mxu0 0
    %3274 = vmatpush1.bf16.msra.mxu0 %v2921
    %3275 = vmatprep.subr.bf16.mxu0 0
    %3276 = vmatpush1.bf16.msra.mxu0 %v2924
    %3277 = vmatprep.subr.bf16.mxu0 0
    %3278 = vmatpush1.bf16.msra.mxu0 %v2927
    %3279 = vmatprep.subr.bf16.mxu0 0
    %3280 = vmatpush1.bf16.msra.mxu0 %v2930
    %3281 = vmatprep.subr.bf16.mxu0 0
    %3282 = vmatpush1.bf16.msra.mxu0 %v2933
    %3283 = vmatprep.subr.bf16.mxu0 0
    %3284 = vmatpush1.bf16.msra.mxu0 %v2936
    %3285 = vmatprep.subr.bf16.mxu0 0
    %3286 = vmatpush1.bf16.msra.mxu0 %v2939
    %3287 = vmatprep.subr.bf16.mxu0 0
    %3288 = vmatpush1.bf16.msra.mxu0 0
    %3289 = vmatprep.subr.bf16.mxu0 0
    %3290 = vmatpush1.bf16.msra.mxu0 0
    %3291 = vmatprep.subr.bf16.mxu0 0
    %3292 = vmatpush1.bf16.msra.mxu0 0
    %3293 = vmatprep.subr.bf16.mxu0 0
    %3294 = vmatpush1.bf16.msra.mxu0 0
    %3295 = vmatprep.subr.bf16.mxu0 0
    %3296 = vmatpush1.bf16.msra.mxu0 0
    %3297 = vmatprep.subr.bf16.mxu0 0
    %3298 = vmatpush1.bf16.msra.mxu0 0
    %3299 = vmatprep.subr.bf16.mxu0 0
    %3300 = vmatpush1.bf16.msra.mxu0 0
    %3301 = vmatprep.subr.bf16.mxu0 0
    %3302 = vmatpush1.bf16.msra.mxu0 0
    %3303 = vmatprep.mubr.bf16.mxu0 0
    %3304 = vmatmul.mubr.bf16.gmra.mrb[0].mxu0 %v2259
    %v3305 = vpop.f32.mrb[0].mxu0
    %v3306 = vadd.f32 %v3265, %v3305
    %v3307 = vpop.f32.mrb[0].mxu0
    %v3308 = vpop.f32.mrb[0].mxu0
    %v3309 = vadd.f32 %v3268, %v3308
    %v3310 = vpop.f32.mrb[0].mxu0
    %3311 = vdwg.mxu0
    %v3312 = vpack.c.bf16 %v3185, %v3181
    %v3313 = vpack.c.bf16 %v3187, %v3183
    %v3314 = vpack.c.bf16 %v3309, %v3306
    %v3315 = vld [vmem:[%s4] sm:$0x7]
    %v3318 = vunpack.c.l.s4 1966171168
    %v3319 = vunpack.c.0.s8 %v3318
    %v3320 = vlaneseq
    %v3321 = vshrl.u32 %v3320, 7
    %v3322 = vsub.s32 %v3319, %v3321
    %v3323 = vrot.slane %v3315, %v3322
    %v3324 = vcombine.high %v3323, %v3323
    %v3326 = vunpack.c.l.s4 1966171168
    %v3327 = vunpack.c.0.s8 %v3326
    %v3328 = vlaneseq
    %v3329 = vshrl.u32 %v3328, 7
    %v3330 = vsub.s32 %v3327, %v3329
    %v3331 = vrot.slane %v3323, %v3330
    %v3333 = vunpack.c.l.s4 1966171168
    %v3334 = vunpack.c.0.s8 %v3333
    %v3335 = vlaneseq
    %v3336 = vshrl.u32 %v3335, 7
    %v3337 = vsub.s32 %v3334, %v3336
    %v3338 = vrot.slane %v3324, %v3337
    %v3339 = vcombine.high %v3331, %v3331
    %v3341 = vpack.i.b16 %v3331, %v3331
    %v3343 = vlaneseq
    %v3344 = vshrl.u32 %v3343, 7
    %v3345 = vsub.s32 0, %v3344
    %v3346 = vrot.slane %v3341, %v3345
    %v3348 = vpack.i.b16 %v3338, %v3338
    %v3350 = vlaneseq
    %v3351 = vshrl.u32 %v3350, 7
    %v3352 = vsub.s32 0, %v3351
    %v3353 = vrot.slane %v3348, %v3352
    %v3355 = vpack.i.b16 %v3339, %v3339
    %v3357 = vlaneseq
    %v3358 = vshrl.u32 %v3357, 7
    %v3359 = vsub.s32 0, %v3358
    %v3360 = vrot.slane %v3355, %v3359
    %v3361 = vadd.bf16 %v3312, %v3346
    %v3362 = vadd.bf16 %v3313, %v3353
    %v3363 = vadd.bf16 %v3314, %v3360
    %v3364 = vmax.bf16 %v3361, 0
    %v3365 = vmax.bf16 %v3362, 0
    %v3366 = vmax.bf16 %v3363, 0
    %v3367 = vld [vmem:[%s5] sm:$0xff]
    %v3368 = vld [vmem:[%s5 + $0x8] sm:$0xff]
    %v3369 = vld [vmem:[%s5 + $0x10] sm:$0xff]
    %v3370 = vld [vmem:[%s5 + $0x18] sm:$0xff]
    %v3371 = vld [vmem:[%s5 + $0x20] sm:$0xff]
    %v3372 = vld [vmem:[%s5 + $0x28] sm:$0xff]
    %v3373 = vld [vmem:[%s5 + $0x30] sm:$0xff]
    %v3374 = vld [vmem:[%s5 + $0x38] sm:$0xff]
    %v3375 = vld [vmem:[%s5 + $0x40] sm:$0xff]
    %v3376 = vld [vmem:[%s5 + $0x48] sm:$0xff]
    %v3377 = vld [vmem:[%s5 + $0x50] sm:$0xff]
    %v3378 = vld [vmem:[%s5 + $0x58] sm:$0xff]
    %v3379 = vld [vmem:[%s5 + $0x60] sm:$0xff]
    %v3380 = vld [vmem:[%s5 + $0x68] sm:$0xff]
    %v3381 = vld [vmem:[%s5 + $0x70] sm:$0xff]
    %v3382 = vld [vmem:[%s5 + $0x78] sm:$0xff]
    %v3383 = vld [vmem:[%s5 + $0x80] sm:$0xff]
    %v3384 = vld [vmem:[%s5 + $0x88] sm:$0xff]
    %v3385 = vld [vmem:[%s5 + $0x90] sm:$0xff]
    %v3386 = vld [vmem:[%s5 + $0x98] sm:$0xff]
    %v3387 = vld [vmem:[%s5 + $0xa0] sm:$0xff]
    %v3388 = vld [vmem:[%s5 + $0xa8] sm:$0xff]
    %v3389 = vld [vmem:[%s5 + $0xb0] sm:$0xff]
    %v3390 = vld [vmem:[%s5 + $0xb8] sm:$0xff]
    %v3391 = vld [vmem:[%s5 + $0xc0] sm:$0xff]
    %v3392 = vld [vmem:[%s5 + $0xc8] sm:$0xff]
    %v3393 = vld [vmem:[%s5 + $0xd0] sm:$0xff]
    %v3394 = vld [vmem:[%s5 + $0xd8] sm:$0xff]
    %v3395 = vld [vmem:[%s5 + $0xe0] sm:$0xff]
    %v3396 = vld [vmem:[%s5 + $0xe8] sm:$0xff]
    %v3397 = vld [vmem:[%s5 + $0xf0] sm:$0xff]
    %v3398 = vld [vmem:[%s5 + $0xf8] sm:$0xff]
    %v3399 = vld [vmem:[%s5 + $0x100] sm:$0xff]
    %v3400 = vld [vmem:[%s5 + $0x108] sm:$0xff]
    %v3401 = vld [vmem:[%s5 + $0x110] sm:$0xff]
    %v3402 = vld [vmem:[%s5 + $0x118] sm:$0xff]
    %v3403 = vld [vmem:[%s5 + $0x120] sm:$0xff]
    %v3404 = vld [vmem:[%s5 + $0x128] sm:$0xff]
    %v3405 = vld [vmem:[%s5 + $0x130] sm:$0xff]
    %v3406 = vld [vmem:[%s5 + $0x138] sm:$0xff]
    %v3407 = vld [vmem:[%s5 + $0x140] sm:$0xff]
    %v3408 = vld [vmem:[%s5 + $0x148] sm:$0xff]
    %v3409 = vld [vmem:[%s5 + $0x150] sm:$0xff]
    %v3410 = vld [vmem:[%s5 + $0x158] sm:$0xff]
    %v3411 = vld [vmem:[%s5 + $0x160] sm:$0xff]
    %v3412 = vld [vmem:[%s5 + $0x168] sm:$0xff]
    %v3413 = vld [vmem:[%s5 + $0x170] sm:$0xff]
    %v3414 = vld [vmem:[%s5 + $0x178] sm:$0xff]
    %v3463 = vunpack.c.l.b16 %v3367
    %v3464 = vunpack.c.h.b16 %v3367
    %v3465 = vunpack.c.l.b16 %v3368
    %v3466 = vunpack.c.h.b16 %v3368
    %v3467 = vunpack.c.l.b16 %v3369
    %v3468 = vunpack.c.h.b16 %v3369
    %v3469 = vunpack.c.l.b16 %v3370
    %v3470 = vunpack.c.h.b16 %v3370
    %v3471 = vunpack.c.l.b16 %v3371
    %v3472 = vunpack.c.h.b16 %v3371
    %v3473 = vunpack.c.l.b16 %v3372
    %v3474 = vunpack.c.h.b16 %v3372
    %v3475 = vunpack.c.l.b16 %v3373
    %v3476 = vunpack.c.h.b16 %v3373
    %v3477 = vunpack.c.l.b16 %v3374
    %v3478 = vunpack.c.h.b16 %v3374
    %v3479 = vunpack.c.l.b16 %v3375
    %v3480 = vunpack.c.h.b16 %v3375
    %v3481 = vunpack.c.l.b16 %v3376
    %v3482 = vunpack.c.h.b16 %v3376
    %v3483 = vunpack.c.l.b16 %v3377
    %v3484 = vunpack.c.h.b16 %v3377
    %v3485 = vunpack.c.l.b16 %v3378
    %v3486 = vunpack.c.h.b16 %v3378
    %v3487 = vunpack.c.l.b16 %v3379
    %v3488 = vunpack.c.h.b16 %v3379
    %v3489 = vunpack.c.l.b16 %v3380
    %v3490 = vunpack.c.h.b16 %v3380
    %v3491 = vunpack.c.l.b16 %v3381
    %v3492 = vunpack.c.h.b16 %v3381
    %v3493 = vunpack.c.l.b16 %v3382
    %v3494 = vunpack.c.h.b16 %v3382
    %v3495 = vunpack.c.l.b16 %v3383
    %v3496 = vunpack.c.h.b16 %v3383
    %v3497 = vunpack.c.l.b16 %v3384
    %v3498 = vunpack.c.h.b16 %v3384
    %v3499 = vunpack.c.l.b16 %v3385
    %v3500 = vunpack.c.h.b16 %v3385
    %v3501 = vunpack.c.l.b16 %v3386
    %v3502 = vunpack.c.h.b16 %v3386
    %v3503 = vunpack.c.l.b16 %v3387
    %v3504 = vunpack.c.h.b16 %v3387
    %v3505 = vunpack.c.l.b16 %v3388
    %v3506 = vunpack.c.h.b16 %v3388
    %v3507 = vunpack.c.l.b16 %v3389
    %v3508 = vunpack.c.h.b16 %v3389
    %v3509 = vunpack.c.l.b16 %v3390
    %v3510 = vunpack.c.h.b16 %v3390
    %v3511 = vunpack.c.l.b16 %v3391
    %v3512 = vunpack.c.h.b16 %v3391
    %v3513 = vunpack.c.l.b16 %v3392
    %v3514 = vunpack.c.h.b16 %v3392
    %v3515 = vunpack.c.l.b16 %v3393
    %v3516 = vunpack.c.h.b16 %v3393
    %v3517 = vunpack.c.l.b16 %v3394
    %v3518 = vunpack.c.h.b16 %v3394
    %v3519 = vunpack.c.l.b16 %v3395
    %v3520 = vunpack.c.h.b16 %v3395
    %v3521 = vunpack.c.l.b16 %v3396
    %v3522 = vunpack.c.h.b16 %v3396
    %v3523 = vunpack.c.l.b16 %v3397
    %v3524 = vunpack.c.h.b16 %v3397
    %v3525 = vunpack.c.l.b16 %v3398
    %v3526 = vunpack.c.h.b16 %v3398
    %v3527 = vunpack.c.l.b16 %v3399
    %v3528 = vunpack.c.h.b16 %v3399
    %v3529 = vunpack.c.l.b16 %v3400
    %v3530 = vunpack.c.h.b16 %v3400
    %v3531 = vunpack.c.l.b16 %v3401
    %v3532 = vunpack.c.h.b16 %v3401
    %v3533 = vunpack.c.l.b16 %v3402
    %v3534 = vunpack.c.h.b16 %v3402
    %v3535 = vunpack.c.l.b16 %v3403
    %v3536 = vunpack.c.h.b16 %v3403
    %v3537 = vunpack.c.l.b16 %v3404
    %v3538 = vunpack.c.h.b16 %v3404
    %v3539 = vunpack.c.l.b16 %v3405
    %v3540 = vunpack.c.h.b16 %v3405
    %v3541 = vunpack.c.l.b16 %v3406
    %v3542 = vunpack.c.h.b16 %v3406
    %v3543 = vunpack.c.l.b16 %v3407
    %v3544 = vunpack.c.h.b16 %v3407
    %v3545 = vunpack.c.l.b16 %v3408
    %v3546 = vunpack.c.h.b16 %v3408
    %v3547 = vunpack.c.l.b16 %v3409
    %v3548 = vunpack.c.h.b16 %v3409
    %v3549 = vunpack.c.l.b16 %v3410
    %v3550 = vunpack.c.h.b16 %v3410
    %v3551 = vunpack.c.l.b16 %v3411
    %v3552 = vunpack.c.h.b16 %v3411
    %v3553 = vunpack.c.l.b16 %v3412
    %v3554 = vunpack.c.h.b16 %v3412
    %v3555 = vunpack.c.l.b16 %v3413
    %v3556 = vunpack.c.h.b16 %v3413
    %v3557 = vunpack.c.l.b16 %v3414
    %v3558 = vunpack.c.h.b16 %v3414
    %v3559 = vpack.c.b16 %v3465, %v3463
    %v3560 = vpack.c.b16 %v3466, %v3464
    %v3561 = vpack.c.b16 %v3469, %v3467
    %v3562 = vpack.c.b16 %v3470, %v3468
    %v3563 = vpack.c.b16 %v3473, %v3471
    %v3564 = vpack.c.b16 %v3474, %v3472
    %v3565 = vpack.c.b16 %v3477, %v3475
    %v3566 = vpack.c.b16 %v3478, %v3476
    %v3567 = vpack.c.b16 %v3481, %v3479
    %v3568 = vpack.c.b16 %v3482, %v3480
    %v3569 = vpack.c.b16 %v3485, %v3483
    %v3570 = vpack.c.b16 %v3486, %v3484
    %v3571 = vpack.c.b16 %v3489, %v3487
    %v3572 = vpack.c.b16 %v3490, %v3488
    %v3573 = vpack.c.b16 %v3493, %v3491
    %v3574 = vpack.c.b16 %v3494, %v3492
    %v3575 = vpack.c.b16 %v3497, %v3495
    %v3576 = vpack.c.b16 %v3498, %v3496
    %v3577 = vpack.c.b16 %v3501, %v3499
    %v3578 = vpack.c.b16 %v3502, %v3500
    %v3579 = vpack.c.b16 %v3505, %v3503
    %v3580 = vpack.c.b16 %v3506, %v3504
    %v3581 = vpack.c.b16 %v3509, %v3507
    %v3582 = vpack.c.b16 %v3510, %v3508
    %v3583 = vpack.c.b16 %v3513, %v3511
    %v3584 = vpack.c.b16 %v3514, %v3512
    %v3585 = vpack.c.b16 %v3517, %v3515
    %v3586 = vpack.c.b16 %v3518, %v3516
    %v3587 = vpack.c.b16 %v3521, %v3519
    %v3588 = vpack.c.b16 %v3522, %v3520
    %v3589 = vpack.c.b16 %v3525, %v3523
    %v3590 = vpack.c.b16 %v3526, %v3524
    %v3591 = vpack.c.b16 %v3529, %v3527
    %v3592 = vpack.c.b16 %v3530, %v3528
    %v3593 = vpack.c.b16 %v3533, %v3531
    %v3594 = vpack.c.b16 %v3534, %v3532
    %v3595 = vpack.c.b16 %v3537, %v3535
    %v3596 = vpack.c.b16 %v3538, %v3536
    %v3597 = vpack.c.b16 %v3541, %v3539
    %v3598 = vpack.c.b16 %v3542, %v3540
    %v3599 = vpack.c.b16 %v3545, %v3543
    %v3600 = vpack.c.b16 %v3546, %v3544
    %v3601 = vpack.c.b16 %v3549, %v3547
    %v3602 = vpack.c.b16 %v3550, %v3548
    %v3603 = vpack.c.b16 %v3553, %v3551
    %v3604 = vpack.c.b16 %v3554, %v3552
    %v3605 = vpack.c.b16 %v3557, %v3555
    %v3606 = vpack.c.b16 %v3558, %v3556
    %3655 = vmatprep.subr.bf16.mxu0 %v3560
    %3656 = vmatpush1.bf16.msra.mxu0 %v3559
    %3657 = vmatprep.subr.bf16.mxu0 %v3562
    %3658 = vmatpush1.bf16.msra.mxu0 %v3561
    %3659 = vmatprep.subr.bf16.mxu0 %v3564
    %3660 = vmatpush1.bf16.msra.mxu0 %v3563
    %3661 = vmatprep.subr.bf16.mxu0 %v3566
    %3662 = vmatpush1.bf16.msra.mxu0 %v3565
    %3663 = vmatprep.subr.bf16.mxu0 %v3568
    %3664 = vmatpush1.bf16.msra.mxu0 %v3567
    %3665 = vmatprep.subr.bf16.mxu0 %v3570
    %3666 = vmatpush1.bf16.msra.mxu0 %v3569
    %3667 = vmatprep.subr.bf16.mxu0 %v3572
    %3668 = vmatpush1.bf16.msra.mxu0 %v3571
    %3669 = vmatprep.subr.bf16.mxu0 %v3574
    %3670 = vmatpush1.bf16.msra.mxu0 %v3573
    %3671 = vmatprep.subr.bf16.mxu0 %v3576
    %3672 = vmatpush1.bf16.msra.mxu0 %v3575
    %3673 = vmatprep.subr.bf16.mxu0 %v3578
    %3674 = vmatpush1.bf16.msra.mxu0 %v3577
    %3675 = vmatprep.subr.bf16.mxu0 %v3580
    %3676 = vmatpush1.bf16.msra.mxu0 %v3579
    %3677 = vmatprep.subr.bf16.mxu0 %v3582
    %3678 = vmatpush1.bf16.msra.mxu0 %v3581
    %3679 = vmatprep.subr.bf16.mxu0 %v3584
    %3680 = vmatpush1.bf16.msra.mxu0 %v3583
    %3681 = vmatprep.subr.bf16.mxu0 %v3586
    %3682 = vmatpush1.bf16.msra.mxu0 %v3585
    %3683 = vmatprep.subr.bf16.mxu0 %v3588
    %3684 = vmatpush1.bf16.msra.mxu0 %v3587
    %3685 = vmatprep.subr.bf16.mxu0 %v3590
    %3686 = vmatpush1.bf16.msra.mxu0 %v3589
    %3687 = vmatprep.mubr.bf16.mxu0 %v3365
    %3688 = vmatmul.mubr.bf16.gmra.mrb[0].mxu0 %v3364
    %v3689 = vpop.f32.mrb[0].mxu0
    %v3690 = vadd.f32 0.0, %v3689
    %v3691 = vpop.f32.mrb[0].mxu0
    %v3692 = vadd.f32 0.0, %v3691
    %v3693 = vpop.f32.mrb[0].mxu0
    %v3694 = vadd.f32 0.0, %v3693
    %v3695 = vpop.f32.mrb[0].mxu0
    %v3696 = vadd.f32 0.0, %v3695
    %3697 = vdwg.mxu0
    %3698 = vmatprep.subr.bf16.mxu0 %v3592
    %3699 = vmatpush1.bf16.msra.mxu0 %v3591
    %3700 = vmatprep.subr.bf16.mxu0 %v3594
    %3701 = vmatpush1.bf16.msra.mxu0 %v3593
    %3702 = vmatprep.subr.bf16.mxu0 %v3596
    %3703 = vmatpush1.bf16.msra.mxu0 %v3595
    %3704 = vmatprep.subr.bf16.mxu0 %v3598
    %3705 = vmatpush1.bf16.msra.mxu0 %v3597
    %3706 = vmatprep.subr.bf16.mxu0 %v3600
    %3707 = vmatpush1.bf16.msra.mxu0 %v3599
    %3708 = vmatprep.subr.bf16.mxu0 %v3602
    %3709 = vmatpush1.bf16.msra.mxu0 %v3601
    %3710 = vmatprep.subr.bf16.mxu0 %v3604
    %3711 = vmatpush1.bf16.msra.mxu0 %v3603
    %3712 = vmatprep.subr.bf16.mxu0 %v3606
    %3713 = vmatpush1.bf16.msra.mxu0 %v3605
    %3714 = vmatprep.subr.bf16.mxu0 0
    %3715 = vmatpush1.bf16.msra.mxu0 0
    %3716 = vmatprep.subr.bf16.mxu0 0
    %3717 = vmatpush1.bf16.msra.mxu0 0
    %3718 = vmatprep.subr.bf16.mxu0 0
    %3719 = vmatpush1.bf16.msra.mxu0 0
    %3720 = vmatprep.subr.bf16.mxu0 0
    %3721 = vmatpush1.bf16.msra.mxu0 0
    %3722 = vmatprep.subr.bf16.mxu0 0
    %3723 = vmatpush1.bf16.msra.mxu0 0
    %3724 = vmatprep.subr.bf16.mxu0 0
    %3725 = vmatpush1.bf16.msra.mxu0 0
    %3726 = vmatprep.subr.bf16.mxu0 0
    %3727 = vmatpush1.bf16.msra.mxu0 0
    %3728 = vmatprep.subr.bf16.mxu0 0
    %3729 = vmatpush1.bf16.msra.mxu0 0
    %3730 = vmatprep.mubr.bf16.mxu0 0
    %3731 = vmatmul.mubr.bf16.gmra.mrb[0].mxu0 %v3366
    %v3732 = vpop.f32.mrb[0].mxu0
    %v3733 = vadd.f32 %v3690, %v3732
    %v3734 = vpop.f32.mrb[0].mxu0
    %v3735 = vadd.f32 %v3692, %v3734
    %v3736 = vpop.f32.mrb[0].mxu0
    %v3737 = vadd.f32 %v3694, %v3736
    %v3738 = vpop.f32.mrb[0].mxu0
    %v3739 = vadd.f32 %v3696, %v3738
    %3740 = vdwg.mxu0
    %v3741 = vpack.c.bf16 %v3737, %v3733
    %v3742 = vpack.c.bf16 %v3739, %v3735
    %v3743 = vld [vmem:[%s6] sm:$0x3]
    %v3746 = vunpack.c.l.s4 1966171168
    %v3747 = vunpack.c.0.s8 %v3746
    %v3748 = vlaneseq
    %v3749 = vshrl.u32 %v3748, 7
    %v3750 = vsub.s32 %v3747, %v3749
    %v3751 = vrot.slane %v3743, %v3750
    %v3752 = vcombine.high %v3751, %v3751
    %v3754 = vunpack.c.l.s4 1966171168
    %v3755 = vunpack.c.0.s8 %v3754
    %v3756 = vlaneseq
    %v3757 = vshrl.u32 %v3756, 7
    %v3758 = vsub.s32 %v3755, %v3757
    %v3759 = vrot.slane %v3751, %v3758
    %v3761 = vunpack.c.l.s4 1966171168
    %v3762 = vunpack.c.0.s8 %v3761
    %v3763 = vlaneseq
    %v3764 = vshrl.u32 %v3763, 7
    %v3765 = vsub.s32 %v3762, %v3764
    %v3766 = vrot.slane %v3752, %v3765
    %v3768 = vpack.i.b16 %v3759, %v3759
    %v3770 = vlaneseq
    %v3771 = vshrl.u32 %v3770, 7
    %v3772 = vsub.s32 0, %v3771
    %v3773 = vrot.slane %v3768, %v3772
    %v3775 = vpack.i.b16 %v3766, %v3766
    %v3777 = vlaneseq
    %v3778 = vshrl.u32 %v3777, 7
    %v3779 = vsub.s32 0, %v3778
    %v3780 = vrot.slane %v3775, %v3779
    %v3781 = vadd.bf16 %v3741, %v3773
    %v3782 = vadd.bf16 %v3742, %v3780
    %v3783 = vmax.bf16 %v3781, 0
    %v3784 = vmax.bf16 %v3782, 0
    %v3785 = vld [vmem:[%s7] sm:$0xf]
    %v3786 = vld [vmem:[%s7 + $0x4] sm:$0xf]
    %v3787 = vld [vmem:[%s7 + $0x8] sm:$0xf]
    %v3788 = vld [vmem:[%s7 + $0xc] sm:$0xf]
    %v3789 = vld [vmem:[%s7 + $0x10] sm:$0xf]
    %v3790 = vld [vmem:[%s7 + $0x14] sm:$0xf]
    %v3791 = vld [vmem:[%s7 + $0x18] sm:$0xf]
    %v3792 = vld [vmem:[%s7 + $0x1c] sm:$0xf]
    %v3793 = vld [vmem:[%s7 + $0x20] sm:$0xf]
    %v3794 = vld [vmem:[%s7 + $0x24] sm:$0xf]
    %v3795 = vld [vmem:[%s7 + $0x28] sm:$0xf]
    %v3796 = vld [vmem:[%s7 + $0x2c] sm:$0xf]
    %v3797 = vld [vmem:[%s7 + $0x30] sm:$0xf]
    %v3798 = vld [vmem:[%s7 + $0x34] sm:$0xf]
    %v3799 = vld [vmem:[%s7 + $0x38] sm:$0xf]
    %v3800 = vld [vmem:[%s7 + $0x3c] sm:$0xf]
    %v3801 = vld [vmem:[%s7 + $0x40] sm:$0xf]
    %v3802 = vld [vmem:[%s7 + $0x44] sm:$0xf]
    %v3803 = vld [vmem:[%s7 + $0x48] sm:$0xf]
    %v3804 = vld [vmem:[%s7 + $0x4c] sm:$0xf]
    %v3805 = vld [vmem:[%s7 + $0x50] sm:$0xf]
    %v3806 = vld [vmem:[%s7 + $0x54] sm:$0xf]
    %v3807 = vld [vmem:[%s7 + $0x58] sm:$0xf]
    %v3808 = vld [vmem:[%s7 + $0x5c] sm:$0xf]
    %v3809 = vld [vmem:[%s7 + $0x60] sm:$0xf]
    %v3810 = vld [vmem:[%s7 + $0x64] sm:$0xf]
    %v3811 = vld [vmem:[%s7 + $0x68] sm:$0xf]
    %v3812 = vld [vmem:[%s7 + $0x6c] sm:$0xf]
    %v3813 = vld [vmem:[%s7 + $0x70] sm:$0xf]
    %v3814 = vld [vmem:[%s7 + $0x74] sm:$0xf]
    %v3815 = vld [vmem:[%s7 + $0x78] sm:$0xf]
    %v3816 = vld [vmem:[%s7 + $0x7c] sm:$0xf]
    %v3849 = vunpack.c.l.b16 %v3785
    %v3850 = vunpack.c.l.b16 %v3786
    %v3851 = vunpack.c.l.b16 %v3787
    %v3852 = vunpack.c.l.b16 %v3788
    %v3853 = vunpack.c.l.b16 %v3789
    %v3854 = vunpack.c.l.b16 %v3790
    %v3855 = vunpack.c.l.b16 %v3791
    %v3856 = vunpack.c.l.b16 %v3792
    %v3857 = vunpack.c.l.b16 %v3793
    %v3858 = vunpack.c.l.b16 %v3794
    %v3859 = vunpack.c.l.b16 %v3795
    %v3860 = vunpack.c.l.b16 %v3796
    %v3861 = vunpack.c.l.b16 %v3797
    %v3862 = vunpack.c.l.b16 %v3798
    %v3863 = vunpack.c.l.b16 %v3799
    %v3864 = vunpack.c.l.b16 %v3800
    %v3865 = vunpack.c.l.b16 %v3801
    %v3866 = vunpack.c.l.b16 %v3802
    %v3867 = vunpack.c.l.b16 %v3803
    %v3868 = vunpack.c.l.b16 %v3804
    %v3869 = vunpack.c.l.b16 %v3805
    %v3870 = vunpack.c.l.b16 %v3806
    %v3871 = vunpack.c.l.b16 %v3807
    %v3872 = vunpack.c.l.b16 %v3808
    %v3873 = vunpack.c.l.b16 %v3809
    %v3874 = vunpack.c.l.b16 %v3810
    %v3875 = vunpack.c.l.b16 %v3811
    %v3876 = vunpack.c.l.b16 %v3812
    %v3877 = vunpack.c.l.b16 %v3813
    %v3878 = vunpack.c.l.b16 %v3814
    %v3879 = vunpack.c.l.b16 %v3815
    %v3880 = vunpack.c.l.b16 %v3816
    %v3881 = vpack.c.b16 %v3850, %v3849
    %v3882 = vpack.c.b16 %v3852, %v3851
    %v3883 = vpack.c.b16 %v3854, %v3853
    %v3884 = vpack.c.b16 %v3856, %v3855
    %v3885 = vpack.c.b16 %v3858, %v3857
    %v3886 = vpack.c.b16 %v3860, %v3859
    %v3887 = vpack.c.b16 %v3862, %v3861
    %v3888 = vpack.c.b16 %v3864, %v3863
    %v3889 = vpack.c.b16 %v3866, %v3865
    %v3890 = vpack.c.b16 %v3868, %v3867
    %v3891 = vpack.c.b16 %v3870, %v3869
    %v3892 = vpack.c.b16 %v3872, %v3871
    %v3893 = vpack.c.b16 %v3874, %v3873
    %v3894 = vpack.c.b16 %v3876, %v3875
    %v3895 = vpack.c.b16 %v3878, %v3877
    %v3896 = vpack.c.b16 %v3880, %v3879
    %3913 = vmatprep.subr.bf16.mxu0 0
    %3914 = vmatpush1.bf16.msra.mxu0 %v3881
    %3915 = vmatprep.subr.bf16.mxu0 0
    %3916 = vmatpush1.bf16.msra.mxu0 %v3882
    %3917 = vmatprep.subr.bf16.mxu0 0
    %3918 = vmatpush1.bf16.msra.mxu0 %v3883
    %3919 = vmatprep.subr.bf16.mxu0 0
    %3920 = vmatpush1.bf16.msra.mxu0 %v3884
    %3921 = vmatprep.subr.bf16.mxu0 0
    %3922 = vmatpush1.bf16.msra.mxu0 %v3885
    %3923 = vmatprep.subr.bf16.mxu0 0
    %3924 = vmatpush1.bf16.msra.mxu0 %v3886
    %3925 = vmatprep.subr.bf16.mxu0 0
    %3926 = vmatpush1.bf16.msra.mxu0 %v3887
    %3927 = vmatprep.subr.bf16.mxu0 0
    %3928 = vmatpush1.bf16.msra.mxu0 %v3888
    %3929 = vmatprep.subr.bf16.mxu0 0
    %3930 = vmatpush1.bf16.msra.mxu0 %v3889
    %3931 = vmatprep.subr.bf16.mxu0 0
    %3932 = vmatpush1.bf16.msra.mxu0 %v3890
    %3933 = vmatprep.subr.bf16.mxu0 0
    %3934 = vmatpush1.bf16.msra.mxu0 %v3891
    %3935 = vmatprep.subr.bf16.mxu0 0
    %3936 = vmatpush1.bf16.msra.mxu0 %v3892
    %3937 = vmatprep.subr.bf16.mxu0 0
    %3938 = vmatpush1.bf16.msra.mxu0 %v3893
    %3939 = vmatprep.subr.bf16.mxu0 0
    %3940 = vmatpush1.bf16.msra.mxu0 %v3894
    %3941 = vmatprep.subr.bf16.mxu0 0
    %3942 = vmatpush1.bf16.msra.mxu0 %v3895
    %3943 = vmatprep.subr.bf16.mxu0 0
    %3944 = vmatpush1.bf16.msra.mxu0 %v3896
    %3945 = vmatprep.mubr.bf16.mxu0 %v3784
    %3946 = vmatmul.mubr.bf16.gmra.mrb[0].mxu0 %v3783
    %v3947 = vpop.f32.mrb[0].mxu0
    %v3948 = vadd.f32 0.0, %v3947
    %v3949 = vpop.f32.mrb[0].mxu0
    %v3950 = vpop.f32.mrb[0].mxu0
    %v3951 = vadd.f32 0.0, %v3950
    %v3952 = vpop.f32.mrb[0].mxu0
    %3953 = vdwg.mxu0
    %v3954 = vpack.c.bf16 %v3951, %v3948
    %v3955 = vld [vmem:[%s8] sm:$0x1]
    %v3957 = vpack.i.b16 %v3955, %v3955
    %v3959 = vlaneseq
    %v3960 = vshrl.u32 %v3959, 7
    %v3961 = vsub.s32 0, %v3960
    %v3962 = vrot.slane %v3957, %v3961
    %v3963 = vadd.bf16 %v3954, %v3962
    %v3964 = vmax.bf16 %v3963, 0
    %v3965 = vld [vmem:[%s9] sm:$0xf]
    %v3966 = vld [vmem:[%s9 + $0x4] sm:$0xf]
    %v3967 = vld [vmem:[%s9 + $0x8] sm:$0xf]
    %v3968 = vld [vmem:[%s9 + $0xc] sm:$0xf]
    %v3969 = vld [vmem:[%s9 + $0x10] sm:$0xf]
    %v3970 = vld [vmem:[%s9 + $0x14] sm:$0xf]
    %v3971 = vld [vmem:[%s9 + $0x18] sm:$0xf]
    %v3972 = vld [vmem:[%s9 + $0x1c] sm:$0xf]
    %v3973 = vld [vmem:[%s9 + $0x20] sm:$0xf]
    %v3974 = vld [vmem:[%s9 + $0x24] sm:$0xf]
    %v3975 = vld [vmem:[%s9 + $0x28] sm:$0xf]
    %v3976 = vld [vmem:[%s9 + $0x2c] sm:$0xf]
    %v3977 = vld [vmem:[%s9 + $0x30] sm:$0xf]
    %v3978 = vld [vmem:[%s9 + $0x34] sm:$0xf]
    %v3979 = vld [vmem:[%s9 + $0x38] sm:$0xf]
    %v3980 = vld [vmem:[%s9 + $0x3c] sm:$0xf]
    %v3981 = vld [vmem:[%s10] sm:$0x1]
    %v3983 = vlaneseq
    %v3984 = vshrl.u32 %v3983, 7
    %v3985 = vsub.s32 0, %v3984
    %v3986 = vrot.slane %v3981, %v3985
    %v4004 = vunpack.c.l.b16 %v3965
    %v4005 = vunpack.c.l.b16 %v3966
    %v4006 = vunpack.c.l.b16 %v3967
    %v4007 = vunpack.c.l.b16 %v3968
    %v4008 = vunpack.c.l.b16 %v3969
    %v4009 = vunpack.c.l.b16 %v3970
    %v4010 = vunpack.c.l.b16 %v3971
    %v4011 = vunpack.c.l.b16 %v3972
    %v4012 = vunpack.c.l.b16 %v3973
    %v4013 = vunpack.c.l.b16 %v3974
    %v4014 = vunpack.c.l.b16 %v3975
    %v4015 = vunpack.c.l.b16 %v3976
    %v4016 = vunpack.c.l.b16 %v3977
    %v4017 = vunpack.c.l.b16 %v3978
    %v4018 = vunpack.c.l.b16 %v3979
    %v4019 = vunpack.c.l.b16 %v3980
    %v4020 = vpack.c.b16 %v4005, %v4004
    %v4021 = vpack.c.b16 %v4007, %v4006
    %v4022 = vpack.c.b16 %v4009, %v4008
    %v4023 = vpack.c.b16 %v4011, %v4010
    %v4024 = vpack.c.b16 %v4013, %v4012
    %v4025 = vpack.c.b16 %v4015, %v4014
    %v4026 = vpack.c.b16 %v4017, %v4016
    %v4027 = vpack.c.b16 %v4019, %v4018
    %4036 = vmatprep.subr.bf16.mxu0 0
    %4037 = vmatpush1.bf16.msra.mxu0 %v4020
    %4038 = vmatprep.subr.bf16.mxu0 0
    %4039 = vmatpush1.bf16.msra.mxu0 %v4021
    %4040 = vmatprep.subr.bf16.mxu0 0
    %4041 = vmatpush1.bf16.msra.mxu0 %v4022
    %4042 = vmatprep.subr.bf16.mxu0 0
    %4043 = vmatpush1.bf16.msra.mxu0 %v4023
    %4044 = vmatprep.subr.bf16.mxu0 0
    %4045 = vmatpush1.bf16.msra.mxu0 %v4024
    %4046 = vmatprep.subr.bf16.mxu0 0
    %4047 = vmatpush1.bf16.msra.mxu0 %v4025
    %4048 = vmatprep.subr.bf16.mxu0 0
    %4049 = vmatpush1.bf16.msra.mxu0 %v4026
    %4050 = vmatprep.subr.bf16.mxu0 0
    %4051 = vmatpush1.bf16.msra.mxu0 %v4027
    %4052 = vmatprep.subr.bf16.mxu0 0
    %4053 = vmatpush1.bf16.msra.mxu0 0
    %4054 = vmatprep.subr.bf16.mxu0 0
    %4055 = vmatpush1.bf16.msra.mxu0 0
    %4056 = vmatprep.subr.bf16.mxu0 0
    %4057 = vmatpush1.bf16.msra.mxu0 0
    %4058 = vmatprep.subr.bf16.mxu0 0
    %4059 = vmatpush1.bf16.msra.mxu0 0
    %4060 = vmatprep.subr.bf16.mxu0 0
    %4061 = vmatpush1.bf16.msra.mxu0 0
    %4062 = vmatprep.subr.bf16.mxu0 0
    %4063 = vmatpush1.bf16.msra.mxu0 0
    %4064 = vmatprep.subr.bf16.mxu0 0
    %4065 = vmatpush1.bf16.msra.mxu0 0
    %4066 = vmatprep.subr.bf16.mxu0 0
    %4067 = vmatpush1.bf16.msra.mxu0 0
    %4068 = vmatprep.mubr.bf16.mxu0 0
    %4069 = vmatmul.mubr.bf16.gmra.mrb[0].mxu0 %v3964
    %v4070 = vpop.f32.mrb[0].mxu0
    %v4071 = vadd.f32 %v3986, %v4070
    %v4072 = vpop.f32.mrb[0].mxu0
    %v4073 = vpop.f32.mrb[0].mxu0
    %v4074 = vadd.f32 %v3986, %v4073
    %v4075 = vpop.f32.mrb[0].mxu0
    %4076 = vdwg.mxu0
    %4077 = vst [vmem:[#allocation7] sm:$0xff] %v4071
    %4078 = vst [vmem:[#allocation7 + $0x8] sm:$0xff] %v4074
    // Predicated region
    $region54: #{net_forward.1} parent=1 // pred_check
      _
    $region55: #{net_forward.1} parent=1 // pred_check_branch
      %4080 = sbr.rel (0) target = $region57
    $region56: #{net_forward.1} parent=1 // pred_region
      %s4082 = ssub.s32 256, 128
      %4083 = vsyncadd [#allocation4], %s4082
      %s4084 = sshll.u32 [#allocation7], 4
      %s4085 = int_to_ptr.vmem [resolvable:$true] %s4084
      %4090 = dma.vmem_to_hbm [thread:$0]  %s4085, 128, %s11, [#allocation4], 128, 128, 8
    $region57: #{net_forward.1} parent=1 // pred_fallthru
      _
    // Predicated region
    $region58: #{net_forward.1} parent=1 // pred_check
      _
    $region59: #{net_forward.1} parent=1 // pred_check_branch
      %4092 = sbr.rel (0) target = $region61
    $region60: #{net_forward.1} parent=1 // pred_region
      %4093 = dma.done [#allocation4], 256
    $region61: #{net_forward.1} parent=1 // pred_fallthru
      _
    %4094 = vsyncpa [#allocation3], 1
    %4095 = vsyncpa [#allocation6], 1
    %4096 = vsyncpa [#allocation4], 1

</llo_original>
